<compile_context>
chip_gen: v7x
topology: tpu7x:2x2x1
jax: 0.10.0
libtpu: 0.0.40
codegen_flags: <defaults>
</compile_context>

<pallas_src>
import functools

import jax
import jax.numpy as jnp
from jax import lax
from jax.experimental import pallas as pl
from jax.experimental.pallas import tpu as pltpu


# ---------------------------------------------------------------------------
# Fused encoder kernel: all layers, both directions, full time loop in-kernel.
# ---------------------------------------------------------------------------
def _make_encoder_kernel(T: int, B: int, H: int, num_directions: int,
                         num_layers: int):
    ND = num_directions
    NDH = ND * H          # fused state width (lanes)
    G = 4 * NDH           # fused gate width (lanes)

    def kernel(*refs):
        x_ref = refs[0]                                    # (T*B, D0)
        w_refs = refs[1:1 + 3 * num_layers]                # per layer: Wih, Whh, b
        out_ref = refs[1 + 3 * num_layers]                 # (T*B, ND*H)
        hN_ref = refs[2 + 3 * num_layers]                  # (L, B, ND*H)
        cN_ref = refs[3 + 3 * num_layers]                  # (L, B, ND*H)
        gx_scr = refs[4 + 3 * num_layers]                  # (T*B, G) VMEM scratch
        act_scr = refs[5 + 3 * num_layers]                 # (T*B, ND*H) VMEM scratch

        # Hoisted constant lane masks (JAX does not CSE broadcasts inside loops).
        lane = lax.broadcasted_iota(jnp.int32, (B, G), 1)
        is_g_gate = (lane >= 2 * NDH) & (lane < 3 * NDH)   # tanh block
        if ND == 2:
            is_fwd_lane = (lane % NDH) < H                 # fwd-direction lanes

        for l in range(num_layers):
            wih = w_refs[3 * l][...]        # (D_l, 4*ND*H), gate-major/dir-minor cols
            whh = w_refs[3 * l + 1][...]    # (ND*H, 4*ND*H), block-diag over directions
            b = w_refs[3 * l + 2][...]      # (1, 4*ND*H), b_ih + b_hh

            x2 = x_ref[...] if l == 0 else act_scr[...]    # (T*B, D_l)

            # ---- Input projection for ALL timesteps & both directions: one GEMM.
            gx_scr[...] = (jnp.dot(x2, wih, preferred_element_type=jnp.float32)
                           + b)

            # Last layer writes directly into the kernel output.
            tgt = out_ref if l == num_layers - 1 else act_scr

            # ---- Recurrence: fully unrolled; h/c carried as values (vregs).
            h = jnp.zeros((B, NDH), jnp.float32)
            c = jnp.zeros((B, NDH), jnp.float32)
            for t in range(T):
                if ND == 2:
                    # fwd direction consumes time t, reverse consumes time T-1-t.
                    gx_f = gx_scr[pl.ds(t * B, B), :]
                    gx_r = gx_scr[pl.ds((T - 1 - t) * B, B), :]
                    gx_t = jnp.where(is_fwd_lane, gx_f, gx_r)
                else:
                    gx_t = gx_scr[pl.ds(t * B, B), :]

                # Single MXU push per step: (B, ND*H) @ (ND*H, 4*ND*H).
                gates = gx_t + jnp.dot(h, whh,
                                       preferred_element_type=jnp.float32)

                # Full-width activation, lane-mask select (no tiny gate slices
                # before the EUP work).
                act = jnp.where(is_g_gate, jnp.tanh(gates),
                                jax.nn.sigmoid(gates))
                i_g = act[:, 0:NDH]
                f_g = act[:, NDH:2 * NDH]
                g_g = act[:, 2 * NDH:3 * NDH]
                o_g = act[:, 3 * NDH:4 * NDH]

                c = f_g * c + i_g * g_g
                h = o_g * jnp.tanh(c)

                # Scatter to final time-correct rows (off the recurrence's
                # critical dependency chain; LLO overlaps these stores).
                if ND == 2:
                    tgt[pl.ds(t * B, B), pl.ds(0, H)] = h[:, 0:H]
                    tgt[pl.ds((T - 1 - t) * B, B), pl.ds(H, H)] = h[:, H:NDH]
                else:
                    tgt[pl.ds(t * B, B), :] = h

            hN_ref[l] = h
            cN_ref[l] = c

    return kernel


# ---------------------------------------------------------------------------
# Host-side weight packing (done once per call, outside the kernel).
# Column layout: col(gate, dir, unit) = gate*ND*H + dir*H + unit  (gates i,f,g,o).
# W_hh_comb is block-diagonal over directions along its rows so a single
# (B, ND*H) @ (ND*H, 4*ND*H) matmul evaluates both directions' recurrences.
# ---------------------------------------------------------------------------
def _pack_layer_params(layer_params, H):
    ND = len(layer_params)
    wih_cols, whh_cols, b_cols = [], [], []
    for g in range(4):
        for d in range(ND):
            w_ih, w_hh, b_ih, b_hh = layer_params[d]
            wih_cols.append(w_ih[g * H:(g + 1) * H, :].T.astype(jnp.float32))
            blk = jnp.zeros((ND * H, H), jnp.float32)
            blk = blk.at[d * H:(d + 1) * H, :].set(
                w_hh[g * H:(g + 1) * H, :].T.astype(jnp.float32))
            whh_cols.append(blk)
            b_cols.append((b_ih[g * H:(g + 1) * H]
                           + b_hh[g * H:(g + 1) * H]).astype(jnp.float32))
    wih_comb = jnp.concatenate(wih_cols, axis=1)          # (D, 4*ND*H)
    whh_comb = jnp.concatenate(whh_cols, axis=1)          # (ND*H, 4*ND*H)
    b_comb = jnp.concatenate(b_cols, axis=0)[None, :]     # (1, 4*ND*H)
    return wih_comb, whh_comb, b_comb


# ---------------------------------------------------------------------------
# LSTMEncoder forward (matches nn.LSTM with batch_first=True, dropout=0.0).
# ---------------------------------------------------------------------------
def lstm_encoder_forward(params, batch, num_layers, bidirectional):
    """batch: (B, T, input_size). Returns (output, (h_n, c_n)) like the module."""
    ND = 2 if bidirectional else 1
    B, T, D0 = batch.shape
    H = params[(0, 0)][1].shape[1]        # w_hh: (4H, H)
    NDH = ND * H
    G = 4 * NDH

    # Time-major, flattened to (T*B, D): row index = t*B + b.
    x2 = jnp.transpose(batch, (1, 0, 2)).reshape(T * B, D0).astype(jnp.float32)

    inputs = [x2]
    for l in range(num_layers):
        layer_params = [params[(l, d)] for d in range(ND)]
        inputs.extend(_pack_layer_params(layer_params, H))

    kernel = _make_encoder_kernel(T, B, H, ND, num_layers)
    vmem = pl.BlockSpec(memory_space=pltpu.MemorySpace.VMEM)
    out2, hN, cN = pl.pallas_call(
        kernel,
        out_shape=(
            jax.ShapeDtypeStruct((T * B, NDH), jnp.float32),
            jax.ShapeDtypeStruct((num_layers, B, NDH), jnp.float32),
            jax.ShapeDtypeStruct((num_layers, B, NDH), jnp.float32),
        ),
        in_specs=[vmem] * len(inputs),
        out_specs=(vmem, vmem, vmem),
        scratch_shapes=[
            pltpu.VMEM((T * B, G), jnp.float32),     # precomputed input-gate GEMM
            pltpu.VMEM((T * B, NDH), jnp.float32),   # inter-layer activations
        ],
    )(*inputs)

    # TODO(synk): inter-layer dropout is a no-op (module used with dropout=0.0 / eval),
    #             and initial states are zeros (forward with hidden_state=None).
    output = out2.reshape(T, B, NDH).transpose(1, 0, 2)          # (B, T, ND*H)
    h_n = hN.reshape(num_layers, B, ND, H).transpose(0, 2, 1, 3) \
            .reshape(num_layers * ND, B, H)
    c_n = cN.reshape(num_layers, B, ND, H).transpose(0, 2, 1, 3) \
            .reshape(num_layers * ND, B, H)
    return output, (h_n, c_n)


# ---------------------------------------------------------------------------
# Pure-JAX reference (lax.scan) for correctness checking.
# ---------------------------------------------------------------------------
def _lstm_layer_ref(x_tm, w_ih, w_hh, b_ih, b_hh, reverse):
    T, B, D = x_tm.shape
    H = w_hh.shape[1]
    xs = x_tm[::-1] if reverse else x_tm

    def step(carry, x_t):
        h, c = carry
        g = x_t @ w_ih.T + b_ih + h @ w_hh.T + b_hh
        i_g = jax.nn.sigmoid(g[:, :H])
        f_g = jax.nn.sigmoid(g[:, H:2 * H])
        g_g = jnp.tanh(g[:, 2 * H:3 * H])
        o_g = jax.nn.sigmoid(g[:, 3 * H:])
        c = f_g * c + i_g * g_g
        h = o_g * jnp.tanh(c)
        return (h, c), h

    h0 = jnp.zeros((B, H), jnp.float32)
    c0 = jnp.zeros((B, H), jnp.float32)
    (h_n, c_n), out = lax.scan(step, (h0, c0), xs)
    out = out[::-1] if reverse else out
    return out, h_n, c_n


def lstm_encoder_forward_ref(params, batch, num_layers, bidirectional):
    num_directions = 2 if bidirectional else 1
    x_tm = jnp.transpose(batch, (1, 0, 2))
    h_list, c_list = [], []
    layer_in = x_tm
    for layer in range(num_layers):
        dir_outputs = []
        for direction in range(num_directions):
            w_ih, w_hh, b_ih, b_hh = params[(layer, direction)]
            out, h_n, c_n = _lstm_layer_ref(
                layer_in, w_ih, w_hh, b_ih, b_hh, reverse=(direction == 1))
            dir_outputs.append(out)
            h_list.append(h_n)
            c_list.append(c_n)
        layer_in = jnp.concatenate(dir_outputs, axis=-1)
    output = jnp.transpose(layer_in, (1, 0, 2))
    return output, (jnp.stack(h_list, 0), jnp.stack(c_list, 0))


# ---------------------------------------------------------------------------
# Deterministic parameter init (same shapes as nn.LSTM's flat weights).
# ---------------------------------------------------------------------------
def init_lstm_params(key, input_size, hidden_dim, num_layers, bidirectional):
    num_directions = 2 if bidirectional else 1
    bound = 1.0 / jnp.sqrt(hidden_dim)
    params = {}
    for layer in range(num_layers):
        layer_input = input_size if layer == 0 else hidden_dim * num_directions
        for direction in range(num_directions):
            key, k1, k2, k3, k4 = jax.random.split(key, 5)
            w_ih = jax.random.uniform(k1, (4 * hidden_dim, layer_input),
                                      jnp.float32, -bound, bound)
            w_hh = jax.random.uniform(k2, (4 * hidden_dim, hidden_dim),
                                      jnp.float32, -bound, bound)
            b_ih = jax.random.uniform(k3, (4 * hidden_dim,),
                                      jnp.float32, -bound, bound)
            b_hh = jax.random.uniform(k4, (4 * hidden_dim,),
                                      jnp.float32, -bound, bound)
            params[(layer, direction)] = (w_ih, w_hh, b_ih, b_hh)
    return params


if __name__ == "__main__":
    # Module config: LSTMEncoder(input_size=16, hidden_dim=32, num_layers=2,
    #                            batch_first=True, dropout=0.0, bidirectional=True)
    INPUT_SIZE = 16
    HIDDEN_DIM = 32
    NUM_LAYERS = 2
    BIDIRECTIONAL = True
    B, T = 2, 8

    key = jax.random.PRNGKey(0)
    key, pkey, xkey = jax.random.split(key, 3)
    params = init_lstm_params(pkey, INPUT_SIZE, HIDDEN_DIM, NUM_LAYERS, BIDIRECTIONAL)
    batch = jax.random.normal(xkey, (B, T, INPUT_SIZE), jnp.float32)

    fwd = functools.partial(lstm_encoder_forward,
                            num_layers=NUM_LAYERS, bidirectional=BIDIRECTIONAL)
    output, (h_n, c_n) = fwd(params, batch)
    jax.block_until_ready((output, h_n, c_n))

    # Shape checks (nn.LSTM semantics, batch_first=True).
    num_dir = 2 if BIDIRECTIONAL else 1
    assert output.shape == (B, T, num_dir * HIDDEN_DIM)
    assert h_n.shape == (NUM_LAYERS * num_dir, B, HIDDEN_DIM)
    assert c_n.shape == (NUM_LAYERS * num_dir, B, HIDDEN_DIM)

    # Numerical check against pure-JAX reference.
    ref_out, (ref_h, ref_c) = lstm_encoder_forward_ref(
        params, batch, NUM_LAYERS, BIDIRECTIONAL)
    assert jnp.allclose(output, ref_out, atol=1e-5, rtol=1e-5)
    assert jnp.allclose(h_n, ref_h, atol=1e-5, rtol=1e-5)
    assert jnp.allclose(c_n, ref_c, atol=1e-5, rtol=1e-5)

    print("KERNEL_OK")
</pallas_src>

<mosaic_0001>
module attributes {stable_mosaic.version = 11 : i64} {
  func.func @kernel(%arg0: memref<16x16xf32, #tpu.memory_space<vmem>>, %arg1: memref<16x256xf32, #tpu.memory_space<vmem>>, %arg2: memref<64x256xf32, #tpu.memory_space<vmem>>, %arg3: memref<1x256xf32, #tpu.memory_space<vmem>>, %arg4: memref<64x256xf32, #tpu.memory_space<vmem>>, %arg5: memref<64x256xf32, #tpu.memory_space<vmem>>, %arg6: memref<1x256xf32, #tpu.memory_space<vmem>>, %arg7: memref<16x64xf32, #tpu.memory_space<vmem>>, %arg8: memref<2x2x64xf32, #tpu.memory_space<vmem>>, %arg9: memref<2x2x64xf32, #tpu.memory_space<vmem>>, %arg10: memref<16x256xf32, #tpu.memory_space<vmem>>, %arg11: memref<16x64xf32, #tpu.memory_space<vmem>>) attributes {dimension_semantics = [], scalar_prefetch = 0 : i64, scratch_operands = 2 : i64, tpu.core_type = #tpu.core_type<tc>} {
    %0 = tpu.iota {dimensions = array<i32: 1>} : vector<2x256xi32>
    %c128_i32 = arith.constant 128 : i32
    %1 = vector.broadcast %c128_i32 : i32 to vector<2x256xi32>
    %2 = arith.cmpi sge, %0, %1 : vector<2x256xi32>
    %c192_i32 = arith.constant 192 : i32
    %3 = vector.broadcast %c192_i32 : i32 to vector<2x256xi32>
    %4 = arith.cmpi slt, %0, %3 : vector<2x256xi32>
    %5 = arith.andi %2, %4 : vector<2x256xi1>
    %c64_i32 = arith.constant 64 : i32
    %c0_i32 = arith.constant 0 : i32
    %6 = arith.cmpi eq, %c64_i32, %c0_i32 : i32
    %c1_i32 = arith.constant 1 : i32
    %7 = arith.select %6, %c1_i32, %c64_i32 : i32
    %8 = vector.broadcast %7 : i32 to vector<2x256xi32>
    %9 = arith.remsi %0, %8 : vector<2x256xi32>
    %c0_i32_0 = arith.constant 0 : i32
    %10 = vector.broadcast %c0_i32_0 : i32 to vector<2x256xi32>
    %11 = arith.cmpi ne, %9, %10 : vector<2x256xi32>
    %c0_i32_1 = arith.constant 0 : i32
    %12 = vector.broadcast %c0_i32_1 : i32 to vector<2x256xi32>
    %13 = arith.cmpi slt, %9, %12 : vector<2x256xi32>
    %c0_i32_2 = arith.constant 0 : i32
    %14 = arith.cmpi slt, %7, %c0_i32_2 : i32
    %15 = vector.broadcast %14 : i1 to vector<2x256xi1>
    %16 = vector.broadcast %15 : vector<2x256xi1> to vector<2x256xi1>
    %17 = arith.xori %13, %16 : vector<2x256xi1>
    %18 = arith.andi %17, %11 : vector<2x256xi1>
    %19 = vector.broadcast %7 : i32 to vector<2x256xi32>
    %20 = arith.addi %9, %19 : vector<2x256xi32>
    %21 = arith.select %18, %20, %9 : vector<2x256xi1>, vector<2x256xi32>
    %c32_i32 = arith.constant 32 : i32
    %22 = vector.broadcast %c32_i32 : i32 to vector<2x256xi32>
    %23 = arith.cmpi slt, %21, %22 : vector<2x256xi32>
    %c0 = arith.constant 0 : index
    %c0_3 = arith.constant 0 : index
    %24 = vector.load %arg1[%c0, %c0_3] : memref<16x256xf32, #tpu.memory_space<vmem>>, vector<16x256xf32>
    %c0_4 = arith.constant 0 : index
    %c0_5 = arith.constant 0 : index
    %25 = vector.load %arg2[%c0_4, %c0_5] : memref<64x256xf32, #tpu.memory_space<vmem>>, vector<64x256xf32>
    %c0_6 = arith.constant 0 : index
    %c0_7 = arith.constant 0 : index
    %26 = vector.load %arg3[%c0_6, %c0_7] : memref<1x256xf32, #tpu.memory_space<vmem>>, vector<1x256xf32>
    %c0_8 = arith.constant 0 : index
    %c0_9 = arith.constant 0 : index
    %27 = vector.load %arg0[%c0_8, %c0_9] : memref<16x16xf32, #tpu.memory_space<vmem>>, vector<16x16xf32>
    %cst = arith.constant dense<0.000000e+00> : vector<16x256xf32>
    %28 = tpu.matmul %27, %24, %cst {dimension_numbers = #tpu.dot_dimension_numbers<[1], [0], [0], [1], [0, 0, 1, 1], [], []>} : vector<16x16xf32>, vector<16x256xf32>, vector<16x256xf32> -> vector<16x256xf32>
    %29 = vector.broadcast %26 : vector<1x256xf32> to vector<16x256xf32>
    %30 = arith.addf %28, %29 : vector<16x256xf32>
    %c0_10 = arith.constant 0 : index
    %c0_11 = arith.constant 0 : index
    %31 = vector.load %arg10[%c0_10, %c0_11] : memref<16x256xf32, #tpu.memory_space<vmem>>, vector<16x256xf32>
    tpu.vector_store %arg10[%c0_10, %c0_11], %30 {strides = array<i32>} : memref<16x256xf32, #tpu.memory_space<vmem>>, vector<16x256xf32>,
    %cst_12 = arith.constant 0.000000e+00 : f32
    %32 = vector.broadcast %cst_12 : f32 to vector<2x64xf32>
    %cst_13 = arith.constant 0.000000e+00 : f32
    %33 = vector.broadcast %cst_13 : f32 to vector<2x64xf32>
    %c0_14 = arith.constant 0 : index
    %c0_15 = arith.constant 0 : index
    %34 = vector.load %arg10[%c0_14, %c0_15] : memref<16x256xf32, #tpu.memory_space<vmem>>, vector<2x256xf32>
    %c14 = arith.constant 14 : index
    %c0_16 = arith.constant 0 : index
    %35 = vector.load %arg10[%c14, %c0_16] : memref<16x256xf32, #tpu.memory_space<vmem>>, vector<2x256xf32>
    %36 = arith.select %23, %34, %35 : vector<2x256xi1>, vector<2x256xf32>
    %cst_17 = arith.constant dense<0.000000e+00> : vector<2x256xf32>
    %37 = tpu.matmul %32, %25, %cst_17 {dimension_numbers = #tpu.dot_dimension_numbers<[1], [0], [0], [1], [0, 0, 1, 1], [], []>} : vector<2x64xf32>, vector<64x256xf32>, vector<2x256xf32> -> vector<2x256xf32>
    %38 = arith.addf %36, %37 : vector<2x256xf32>
    %39 = math.tanh %38 : vector<2x256xf32>
    %40 = arith.negf %38 : vector<2x256xf32>
    %41 = math.exp %40 : vector<2x256xf32>
    %cst_18 = arith.constant 1.000000e+00 : f32
    %42 = vector.broadcast %cst_18 : f32 to vector<2x256xf32>
    %43 = arith.addf %42, %41 : vector<2x256xf32>
    %44 = arith.divf %42, %43 : vector<2x256xf32>
    %45 = arith.select %5, %39, %44 : vector<2x256xi1>, vector<2x256xf32>
    %46 = vector.extract_strided_slice %45 {offsets = [0, 0], sizes = [2, 64], strides = [1, 1]} : vector<2x256xf32> to vector<2x64xf32>
    %47 = vector.extract_strided_slice %45 {offsets = [0, 64], sizes = [2, 64], strides = [1, 1]} : vector<2x256xf32> to vector<2x64xf32>
    %48 = vector.extract_strided_slice %45 {offsets = [0, 128], sizes = [2, 64], strides = [1, 1]} : vector<2x256xf32> to vector<2x64xf32>
    %49 = vector.extract_strided_slice %45 {offsets = [0, 192], sizes = [2, 64], strides = [1, 1]} : vector<2x256xf32> to vector<2x64xf32>
    %50 = arith.mulf %47, %33 : vector<2x64xf32>
    %51 = arith.mulf %46, %48 : vector<2x64xf32>
    %52 = arith.addf %50, %51 : vector<2x64xf32>
    %53 = math.tanh %52 : vector<2x64xf32>
    %54 = arith.mulf %49, %53 : vector<2x64xf32>
    %55 = vector.extract_strided_slice %54 {offsets = [0, 0], sizes = [2, 32], strides = [1, 1]} : vector<2x64xf32> to vector<2x32xf32>
    %c0_19 = arith.constant 0 : index
    %c0_20 = arith.constant 0 : index
    %56 = vector.load %arg11[%c0_19, %c0_20] : memref<16x64xf32, #tpu.memory_space<vmem>>, vector<2x32xf32>
    tpu.vector_store %arg11[%c0_19, %c0_20], %55 {strides = array<i32>} : memref<16x64xf32, #tpu.memory_space<vmem>>, vector<2x32xf32>,
    %57 = vector.extract_strided_slice %54 {offsets = [0, 32], sizes = [2, 32], strides = [1, 1]} : vector<2x64xf32> to vector<2x32xf32>
    %c14_21 = arith.constant 14 : index
    %c32 = arith.constant 32 : index
    %58 = vector.load %arg11[%c14_21, %c32] : memref<16x64xf32, #tpu.memory_space<vmem>>, vector<2x32xf32>
    tpu.vector_store %arg11[%c14_21, %c32], %57 {strides = array<i32>} : memref<16x64xf32, #tpu.memory_space<vmem>>, vector<2x32xf32>,
    %c2 = arith.constant 2 : index
    %c0_22 = arith.constant 0 : index
    %59 = vector.load %arg10[%c2, %c0_22] : memref<16x256xf32, #tpu.memory_space<vmem>>, vector<2x256xf32>
    %c12 = arith.constant 12 : index
    %c0_23 = arith.constant 0 : index
    %60 = vector.load %arg10[%c12, %c0_23] : memref<16x256xf32, #tpu.memory_space<vmem>>, vector<2x256xf32>
    %61 = arith.select %23, %59, %60 : vector<2x256xi1>, vector<2x256xf32>
    %cst_24 = arith.constant dense<0.000000e+00> : vector<2x256xf32>
    %62 = tpu.matmul %54, %25, %cst_24 {dimension_numbers = #tpu.dot_dimension_numbers<[1], [0], [0], [1], [0, 0, 1, 1], [], []>} : vector<2x64xf32>, vector<64x256xf32>, vector<2x256xf32> -> vector<2x256xf32>
    %63 = arith.addf %61, %62 : vector<2x256xf32>
    %64 = math.tanh %63 : vector<2x256xf32>
    %65 = arith.negf %63 : vector<2x256xf32>
    %66 = math.exp %65 : vector<2x256xf32>
    %cst_25 = arith.constant 1.000000e+00 : f32
    %67 = vector.broadcast %cst_25 : f32 to vector<2x256xf32>
    %68 = arith.addf %67, %66 : vector<2x256xf32>
    %69 = arith.divf %67, %68 : vector<2x256xf32>
    %70 = arith.select %5, %64, %69 : vector<2x256xi1>, vector<2x256xf32>
    %71 = vector.extract_strided_slice %70 {offsets = [0, 0], sizes = [2, 64], strides = [1, 1]} : vector<2x256xf32> to vector<2x64xf32>
    %72 = vector.extract_strided_slice %70 {offsets = [0, 64], sizes = [2, 64], strides = [1, 1]} : vector<2x256xf32> to vector<2x64xf32>
    %73 = vector.extract_strided_slice %70 {offsets = [0, 128], sizes = [2, 64], strides = [1, 1]} : vector<2x256xf32> to vector<2x64xf32>
    %74 = vector.extract_strided_slice %70 {offsets = [0, 192], sizes = [2, 64], strides = [1, 1]} : vector<2x256xf32> to vector<2x64xf32>
    %75 = arith.mulf %72, %52 : vector<2x64xf32>
    %76 = arith.mulf %71, %73 : vector<2x64xf32>
    %77 = arith.addf %75, %76 : vector<2x64xf32>
    %78 = math.tanh %77 : vector<2x64xf32>
    %79 = arith.mulf %74, %78 : vector<2x64xf32>
    %80 = vector.extract_strided_slice %79 {offsets = [0, 0], sizes = [2, 32], strides = [1, 1]} : vector<2x64xf32> to vector<2x32xf32>
    %c2_26 = arith.constant 2 : index
    %c0_27 = arith.constant 0 : index
    %81 = vector.load %arg11[%c2_26, %c0_27] : memref<16x64xf32, #tpu.memory_space<vmem>>, vector<2x32xf32>
    tpu.vector_store %arg11[%c2_26, %c0_27], %80 {strides = array<i32>} : memref<16x64xf32, #tpu.memory_space<vmem>>, vector<2x32xf32>,
    %82 = vector.extract_strided_slice %79 {offsets = [0, 32], sizes = [2, 32], strides = [1, 1]} : vector<2x64xf32> to vector<2x32xf32>
    %c12_28 = arith.constant 12 : index
    %c32_29 = arith.constant 32 : index
    %83 = vector.load %arg11[%c12_28, %c32_29] : memref<16x64xf32, #tpu.memory_space<vmem>>, vector<2x32xf32>
    tpu.vector_store %arg11[%c12_28, %c32_29], %82 {strides = array<i32>} : memref<16x64xf32, #tpu.memory_space<vmem>>, vector<2x32xf32>,
    %c4 = arith.constant 4 : index
    %c0_30 = arith.constant 0 : index
    %84 = vector.load %arg10[%c4, %c0_30] : memref<16x256xf32, #tpu.memory_space<vmem>>, vector<2x256xf32>
    %c10 = arith.constant 10 : index
    %c0_31 = arith.constant 0 : index
    %85 = vector.load %arg10[%c10, %c0_31] : memref<16x256xf32, #tpu.memory_space<vmem>>, vector<2x256xf32>
    %86 = arith.select %23, %84, %85 : vector<2x256xi1>, vector<2x256xf32>
    %cst_32 = arith.constant dense<0.000000e+00> : vector<2x256xf32>
    %87 = tpu.matmul %79, %25, %cst_32 {dimension_numbers = #tpu.dot_dimension_numbers<[1], [0], [0], [1], [0, 0, 1, 1], [], []>} : vector<2x64xf32>, vector<64x256xf32>, vector<2x256xf32> -> vector<2x256xf32>
    %88 = arith.addf %86, %87 : vector<2x256xf32>
    %89 = math.tanh %88 : vector<2x256xf32>
    %90 = arith.negf %88 : vector<2x256xf32>
    %91 = math.exp %90 : vector<2x256xf32>
    %cst_33 = arith.constant 1.000000e+00 : f32
    %92 = vector.broadcast %cst_33 : f32 to vector<2x256xf32>
    %93 = arith.addf %92, %91 : vector<2x256xf32>
    %94 = arith.divf %92, %93 : vector<2x256xf32>
    %95 = arith.select %5, %89, %94 : vector<2x256xi1>, vector<2x256xf32>
    %96 = vector.extract_strided_slice %95 {offsets = [0, 0], sizes = [2, 64], strides = [1, 1]} : vector<2x256xf32> to vector<2x64xf32>
    %97 = vector.extract_strided_slice %95 {offsets = [0, 64], sizes = [2, 64], strides = [1, 1]} : vector<2x256xf32> to vector<2x64xf32>
    %98 = vector.extract_strided_slice %95 {offsets = [0, 128], sizes = [2, 64], strides = [1, 1]} : vector<2x256xf32> to vector<2x64xf32>
    %99 = vector.extract_strided_slice %95 {offsets = [0, 192], sizes = [2, 64], strides = [1, 1]} : vector<2x256xf32> to vector<2x64xf32>
    %100 = arith.mulf %97, %77 : vector<2x64xf32>
    %101 = arith.mulf %96, %98 : vector<2x64xf32>
    %102 = arith.addf %100, %101 : vector<2x64xf32>
    %103 = math.tanh %102 : vector<2x64xf32>
    %104 = arith.mulf %99, %103 : vector<2x64xf32>
    %105 = vector.extract_strided_slice %104 {offsets = [0, 0], sizes = [2, 32], strides = [1, 1]} : vector<2x64xf32> to vector<2x32xf32>
    %c4_34 = arith.constant 4 : index
    %c0_35 = arith.constant 0 : index
    %106 = vector.load %arg11[%c4_34, %c0_35] : memref<16x64xf32, #tpu.memory_space<vmem>>, vector<2x32xf32>
    tpu.vector_store %arg11[%c4_34, %c0_35], %105 {strides = array<i32>} : memref<16x64xf32, #tpu.memory_space<vmem>>, vector<2x32xf32>,
    %107 = vector.extract_strided_slice %104 {offsets = [0, 32], sizes = [2, 32], strides = [1, 1]} : vector<2x64xf32> to vector<2x32xf32>
    %c10_36 = arith.constant 10 : index
    %c32_37 = arith.constant 32 : index
    %108 = vector.load %arg11[%c10_36, %c32_37] : memref<16x64xf32, #tpu.memory_space<vmem>>, vector<2x32xf32>
    tpu.vector_store %arg11[%c10_36, %c32_37], %107 {strides = array<i32>} : memref<16x64xf32, #tpu.memory_space<vmem>>, vector<2x32xf32>,
    %c6 = arith.constant 6 : index
    %c0_38 = arith.constant 0 : index
    %109 = vector.load %arg10[%c6, %c0_38] : memref<16x256xf32, #tpu.memory_space<vmem>>, vector<2x256xf32>
    %c8 = arith.constant 8 : index
    %c0_39 = arith.constant 0 : index
    %110 = vector.load %arg10[%c8, %c0_39] : memref<16x256xf32, #tpu.memory_space<vmem>>, vector<2x256xf32>
    %111 = arith.select %23, %109, %110 : vector<2x256xi1>, vector<2x256xf32>
    %cst_40 = arith.constant dense<0.000000e+00> : vector<2x256xf32>
    %112 = tpu.matmul %104, %25, %cst_40 {dimension_numbers = #tpu.dot_dimension_numbers<[1], [0], [0], [1], [0, 0, 1, 1], [], []>} : vector<2x64xf32>, vector<64x256xf32>, vector<2x256xf32> -> vector<2x256xf32>
    %113 = arith.addf %111, %112 : vector<2x256xf32>
    %114 = math.tanh %113 : vector<2x256xf32>
    %115 = arith.negf %113 : vector<2x256xf32>
    %116 = math.exp %115 : vector<2x256xf32>
    %cst_41 = arith.constant 1.000000e+00 : f32
    %117 = vector.broadcast %cst_41 : f32 to vector<2x256xf32>
    %118 = arith.addf %117, %116 : vector<2x256xf32>
    %119 = arith.divf %117, %118 : vector<2x256xf32>
    %120 = arith.select %5, %114, %119 : vector<2x256xi1>, vector<2x256xf32>
    %121 = vector.extract_strided_slice %120 {offsets = [0, 0], sizes = [2, 64], strides = [1, 1]} : vector<2x256xf32> to vector<2x64xf32>
    %122 = vector.extract_strided_slice %120 {offsets = [0, 64], sizes = [2, 64], strides = [1, 1]} : vector<2x256xf32> to vector<2x64xf32>
    %123 = vector.extract_strided_slice %120 {offsets = [0, 128], sizes = [2, 64], strides = [1, 1]} : vector<2x256xf32> to vector<2x64xf32>
    %124 = vector.extract_strided_slice %120 {offsets = [0, 192], sizes = [2, 64], strides = [1, 1]} : vector<2x256xf32> to vector<2x64xf32>
    %125 = arith.mulf %122, %102 : vector<2x64xf32>
    %126 = arith.mulf %121, %123 : vector<2x64xf32>
    %127 = arith.addf %125, %126 : vector<2x64xf32>
    %128 = math.tanh %127 : vector<2x64xf32>
    %129 = arith.mulf %124, %128 : vector<2x64xf32>
    %130 = vector.extract_strided_slice %129 {offsets = [0, 0], sizes = [2, 32], strides = [1, 1]} : vector<2x64xf32> to vector<2x32xf32>
    %c6_42 = arith.constant 6 : index
    %c0_43 = arith.constant 0 : index
    %131 = vector.load %arg11[%c6_42, %c0_43] : memref<16x64xf32, #tpu.memory_space<vmem>>, vector<2x32xf32>
    tpu.vector_store %arg11[%c6_42, %c0_43], %130 {strides = array<i32>} : memref<16x64xf32, #tpu.memory_space<vmem>>, vector<2x32xf32>,
    %132 = vector.extract_strided_slice %129 {offsets = [0, 32], sizes = [2, 32], strides = [1, 1]} : vector<2x64xf32> to vector<2x32xf32>
    %c8_44 = arith.constant 8 : index
    %c32_45 = arith.constant 32 : index
    %133 = vector.load %arg11[%c8_44, %c32_45] : memref<16x64xf32, #tpu.memory_space<vmem>>, vector<2x32xf32>
    tpu.vector_store %arg11[%c8_44, %c32_45], %132 {strides = array<i32>} : memref<16x64xf32, #tpu.memory_space<vmem>>, vector<2x32xf32>,
    %c8_46 = arith.constant 8 : index
    %c0_47 = arith.constant 0 : index
    %134 = vector.load %arg10[%c8_46, %c0_47] : memref<16x256xf32, #tpu.memory_space<vmem>>, vector<2x256xf32>
    %c6_48 = arith.constant 6 : index
    %c0_49 = arith.constant 0 : index
    %135 = vector.load %arg10[%c6_48, %c0_49] : memref<16x256xf32, #tpu.memory_space<vmem>>, vector<2x256xf32>
    %136 = arith.select %23, %134, %135 : vector<2x256xi1>, vector<2x256xf32>
    %cst_50 = arith.constant dense<0.000000e+00> : vector<2x256xf32>
    %137 = tpu.matmul %129, %25, %cst_50 {dimension_numbers = #tpu.dot_dimension_numbers<[1], [0], [0], [1], [0, 0, 1, 1], [], []>} : vector<2x64xf32>, vector<64x256xf32>, vector<2x256xf32> -> vector<2x256xf32>
    %138 = arith.addf %136, %137 : vector<2x256xf32>
    %139 = math.tanh %138 : vector<2x256xf32>
    %140 = arith.negf %138 : vector<2x256xf32>
    %141 = math.exp %140 : vector<2x256xf32>
    %cst_51 = arith.constant 1.000000e+00 : f32
    %142 = vector.broadcast %cst_51 : f32 to vector<2x256xf32>
    %143 = arith.addf %142, %141 : vector<2x256xf32>
    %144 = arith.divf %142, %143 : vector<2x256xf32>
    %145 = arith.select %5, %139, %144 : vector<2x256xi1>, vector<2x256xf32>
    %146 = vector.extract_strided_slice %145 {offsets = [0, 0], sizes = [2, 64], strides = [1, 1]} : vector<2x256xf32> to vector<2x64xf32>
    %147 = vector.extract_strided_slice %145 {offsets = [0, 64], sizes = [2, 64], strides = [1, 1]} : vector<2x256xf32> to vector<2x64xf32>
    %148 = vector.extract_strided_slice %145 {offsets = [0, 128], sizes = [2, 64], strides = [1, 1]} : vector<2x256xf32> to vector<2x64xf32>
    %149 = vector.extract_strided_slice %145 {offsets = [0, 192], sizes = [2, 64], strides = [1, 1]} : vector<2x256xf32> to vector<2x64xf32>
    %150 = arith.mulf %147, %127 : vector<2x64xf32>
    %151 = arith.mulf %146, %148 : vector<2x64xf32>
    %152 = arith.addf %150, %151 : vector<2x64xf32>
    %153 = math.tanh %152 : vector<2x64xf32>
    %154 = arith.mulf %149, %153 : vector<2x64xf32>
    %155 = vector.extract_strided_slice %154 {offsets = [0, 0], sizes = [2, 32], strides = [1, 1]} : vector<2x64xf32> to vector<2x32xf32>
    %c8_52 = arith.constant 8 : index
    %c0_53 = arith.constant 0 : index
    %156 = vector.load %arg11[%c8_52, %c0_53] : memref<16x64xf32, #tpu.memory_space<vmem>>, vector<2x32xf32>
    tpu.vector_store %arg11[%c8_52, %c0_53], %155 {strides = array<i32>} : memref<16x64xf32, #tpu.memory_space<vmem>>, vector<2x32xf32>,
    %157 = vector.extract_strided_slice %154 {offsets = [0, 32], sizes = [2, 32], strides = [1, 1]} : vector<2x64xf32> to vector<2x32xf32>
    %c6_54 = arith.constant 6 : index
    %c32_55 = arith.constant 32 : index
    %158 = vector.load %arg11[%c6_54, %c32_55] : memref<16x64xf32, #tpu.memory_space<vmem>>, vector<2x32xf32>
    tpu.vector_store %arg11[%c6_54, %c32_55], %157 {strides = array<i32>} : memref<16x64xf32, #tpu.memory_space<vmem>>, vector<2x32xf32>,
    %c10_56 = arith.constant 10 : index
    %c0_57 = arith.constant 0 : index
    %159 = vector.load %arg10[%c10_56, %c0_57] : memref<16x256xf32, #tpu.memory_space<vmem>>, vector<2x256xf32>
    %c4_58 = arith.constant 4 : index
    %c0_59 = arith.constant 0 : index
    %160 = vector.load %arg10[%c4_58, %c0_59] : memref<16x256xf32, #tpu.memory_space<vmem>>, vector<2x256xf32>
    %161 = arith.select %23, %159, %160 : vector<2x256xi1>, vector<2x256xf32>
    %cst_60 = arith.constant dense<0.000000e+00> : vector<2x256xf32>
    %162 = tpu.matmul %154, %25, %cst_60 {dimension_numbers = #tpu.dot_dimension_numbers<[1], [0], [0], [1], [0, 0, 1, 1], [], []>} : vector<2x64xf32>, vector<64x256xf32>, vector<2x256xf32> -> vector<2x256xf32>
    %163 = arith.addf %161, %162 : vector<2x256xf32>
    %164 = math.tanh %163 : vector<2x256xf32>
    %165 = arith.negf %163 : vector<2x256xf32>
    %166 = math.exp %165 : vector<2x256xf32>
    %cst_61 = arith.constant 1.000000e+00 : f32
    %167 = vector.broadcast %cst_61 : f32 to vector<2x256xf32>
    %168 = arith.addf %167, %166 : vector<2x256xf32>
    %169 = arith.divf %167, %168 : vector<2x256xf32>
    %170 = arith.select %5, %164, %169 : vector<2x256xi1>, vector<2x256xf32>
    %171 = vector.extract_strided_slice %170 {offsets = [0, 0], sizes = [2, 64], strides = [1, 1]} : vector<2x256xf32> to vector<2x64xf32>
    %172 = vector.extract_strided_slice %170 {offsets = [0, 64], sizes = [2, 64], strides = [1, 1]} : vector<2x256xf32> to vector<2x64xf32>
    %173 = vector.extract_strided_slice %170 {offsets = [0, 128], sizes = [2, 64], strides = [1, 1]} : vector<2x256xf32> to vector<2x64xf32>
    %174 = vector.extract_strided_slice %170 {offsets = [0, 192], sizes = [2, 64], strides = [1, 1]} : vector<2x256xf32> to vector<2x64xf32>
    %175 = arith.mulf %172, %152 : vector<2x64xf32>
    %176 = arith.mulf %171, %173 : vector<2x64xf32>
    %177 = arith.addf %175, %176 : vector<2x64xf32>
    %178 = math.tanh %177 : vector<2x64xf32>
    %179 = arith.mulf %174, %178 : vector<2x64xf32>
    %180 = vector.extract_strided_slice %179 {offsets = [0, 0], sizes = [2, 32], strides = [1, 1]} : vector<2x64xf32> to vector<2x32xf32>
    %c10_62 = arith.constant 10 : index
    %c0_63 = arith.constant 0 : index
    %181 = vector.load %arg11[%c10_62, %c0_63] : memref<16x64xf32, #tpu.memory_space<vmem>>, vector<2x32xf32>
    tpu.vector_store %arg11[%c10_62, %c0_63], %180 {strides = array<i32>} : memref<16x64xf32, #tpu.memory_space<vmem>>, vector<2x32xf32>,
    %182 = vector.extract_strided_slice %179 {offsets = [0, 32], sizes = [2, 32], strides = [1, 1]} : vector<2x64xf32> to vector<2x32xf32>
    %c4_64 = arith.constant 4 : index
    %c32_65 = arith.constant 32 : index
    %183 = vector.load %arg11[%c4_64, %c32_65] : memref<16x64xf32, #tpu.memory_space<vmem>>, vector<2x32xf32>
    tpu.vector_store %arg11[%c4_64, %c32_65], %182 {strides = array<i32>} : memref<16x64xf32, #tpu.memory_space<vmem>>, vector<2x32xf32>,
    %c12_66 = arith.constant 12 : index
    %c0_67 = arith.constant 0 : index
    %184 = vector.load %arg10[%c12_66, %c0_67] : memref<16x256xf32, #tpu.memory_space<vmem>>, vector<2x256xf32>
    %c2_68 = arith.constant 2 : index
    %c0_69 = arith.constant 0 : index
    %185 = vector.load %arg10[%c2_68, %c0_69] : memref<16x256xf32, #tpu.memory_space<vmem>>, vector<2x256xf32>
    %186 = arith.select %23, %184, %185 : vector<2x256xi1>, vector<2x256xf32>
    %cst_70 = arith.constant dense<0.000000e+00> : vector<2x256xf32>
    %187 = tpu.matmul %179, %25, %cst_70 {dimension_numbers = #tpu.dot_dimension_numbers<[1], [0], [0], [1], [0, 0, 1, 1], [], []>} : vector<2x64xf32>, vector<64x256xf32>, vector<2x256xf32> -> vector<2x256xf32>
    %188 = arith.addf %186, %187 : vector<2x256xf32>
    %189 = math.tanh %188 : vector<2x256xf32>
    %190 = arith.negf %188 : vector<2x256xf32>
    %191 = math.exp %190 : vector<2x256xf32>
    %cst_71 = arith.constant 1.000000e+00 : f32
    %192 = vector.broadcast %cst_71 : f32 to vector<2x256xf32>
    %193 = arith.addf %192, %191 : vector<2x256xf32>
    %194 = arith.divf %192, %193 : vector<2x256xf32>
    %195 = arith.select %5, %189, %194 : vector<2x256xi1>, vector<2x256xf32>
    %196 = vector.extract_strided_slice %195 {offsets = [0, 0], sizes = [2, 64], strides = [1, 1]} : vector<2x256xf32> to vector<2x64xf32>
    %197 = vector.extract_strided_slice %195 {offsets = [0, 64], sizes = [2, 64], strides = [1, 1]} : vector<2x256xf32> to vector<2x64xf32>
    %198 = vector.extract_strided_slice %195 {offsets = [0, 128], sizes = [2, 64], strides = [1, 1]} : vector<2x256xf32> to vector<2x64xf32>
    %199 = vector.extract_strided_slice %195 {offsets = [0, 192], sizes = [2, 64], strides = [1, 1]} : vector<2x256xf32> to vector<2x64xf32>
    %200 = arith.mulf %197, %177 : vector<2x64xf32>
    %201 = arith.mulf %196, %198 : vector<2x64xf32>
    %202 = arith.addf %200, %201 : vector<2x64xf32>
    %203 = math.tanh %202 : vector<2x64xf32>
    %204 = arith.mulf %199, %203 : vector<2x64xf32>
    %205 = vector.extract_strided_slice %204 {offsets = [0, 0], sizes = [2, 32], strides = [1, 1]} : vector<2x64xf32> to vector<2x32xf32>
    %c12_72 = arith.constant 12 : index
    %c0_73 = arith.constant 0 : index
    %206 = vector.load %arg11[%c12_72, %c0_73] : memref<16x64xf32, #tpu.memory_space<vmem>>, vector<2x32xf32>
    tpu.vector_store %arg11[%c12_72, %c0_73], %205 {strides = array<i32>} : memref<16x64xf32, #tpu.memory_space<vmem>>, vector<2x32xf32>,
    %207 = vector.extract_strided_slice %204 {offsets = [0, 32], sizes = [2, 32], strides = [1, 1]} : vector<2x64xf32> to vector<2x32xf32>
    %c2_74 = arith.constant 2 : index
    %c32_75 = arith.constant 32 : index
    %208 = vector.load %arg11[%c2_74, %c32_75] : memref<16x64xf32, #tpu.memory_space<vmem>>, vector<2x32xf32>
    tpu.vector_store %arg11[%c2_74, %c32_75], %207 {strides = array<i32>} : memref<16x64xf32, #tpu.memory_space<vmem>>, vector<2x32xf32>,
    %c14_76 = arith.constant 14 : index
    %c0_77 = arith.constant 0 : index
    %209 = vector.load %arg10[%c14_76, %c0_77] : memref<16x256xf32, #tpu.memory_space<vmem>>, vector<2x256xf32>
    %c0_78 = arith.constant 0 : index
    %c0_79 = arith.constant 0 : index
    %210 = vector.load %arg10[%c0_78, %c0_79] : memref<16x256xf32, #tpu.memory_space<vmem>>, vector<2x256xf32>
    %211 = arith.select %23, %209, %210 : vector<2x256xi1>, vector<2x256xf32>
    %cst_80 = arith.constant dense<0.000000e+00> : vector<2x256xf32>
    %212 = tpu.matmul %204, %25, %cst_80 {dimension_numbers = #tpu.dot_dimension_numbers<[1], [0], [0], [1], [0, 0, 1, 1], [], []>} : vector<2x64xf32>, vector<64x256xf32>, vector<2x256xf32> -> vector<2x256xf32>
    %213 = arith.addf %211, %212 : vector<2x256xf32>
    %214 = math.tanh %213 : vector<2x256xf32>
    %215 = arith.negf %213 : vector<2x256xf32>
    %216 = math.exp %215 : vector<2x256xf32>
    %cst_81 = arith.constant 1.000000e+00 : f32
    %217 = vector.broadcast %cst_81 : f32 to vector<2x256xf32>
    %218 = arith.addf %217, %216 : vector<2x256xf32>
    %219 = arith.divf %217, %218 : vector<2x256xf32>
    %220 = arith.select %5, %214, %219 : vector<2x256xi1>, vector<2x256xf32>
    %221 = vector.extract_strided_slice %220 {offsets = [0, 0], sizes = [2, 64], strides = [1, 1]} : vector<2x256xf32> to vector<2x64xf32>
    %222 = vector.extract_strided_slice %220 {offsets = [0, 64], sizes = [2, 64], strides = [1, 1]} : vector<2x256xf32> to vector<2x64xf32>
    %223 = vector.extract_strided_slice %220 {offsets = [0, 128], sizes = [2, 64], strides = [1, 1]} : vector<2x256xf32> to vector<2x64xf32>
    %224 = vector.extract_strided_slice %220 {offsets = [0, 192], sizes = [2, 64], strides = [1, 1]} : vector<2x256xf32> to vector<2x64xf32>
    %225 = arith.mulf %222, %202 : vector<2x64xf32>
    %226 = arith.mulf %221, %223 : vector<2x64xf32>
    %227 = arith.addf %225, %226 : vector<2x64xf32>
    %228 = math.tanh %227 : vector<2x64xf32>
    %229 = arith.mulf %224, %228 : vector<2x64xf32>
    %230 = vector.extract_strided_slice %229 {offsets = [0, 0], sizes = [2, 32], strides = [1, 1]} : vector<2x64xf32> to vector<2x32xf32>
    %c14_82 = arith.constant 14 : index
    %c0_83 = arith.constant 0 : index
    %231 = vector.load %arg11[%c14_82, %c0_83] : memref<16x64xf32, #tpu.memory_space<vmem>>, vector<2x32xf32>
    tpu.vector_store %arg11[%c14_82, %c0_83], %230 {strides = array<i32>} : memref<16x64xf32, #tpu.memory_space<vmem>>, vector<2x32xf32>,
    %232 = vector.extract_strided_slice %229 {offsets = [0, 32], sizes = [2, 32], strides = [1, 1]} : vector<2x64xf32> to vector<2x32xf32>
    %c0_84 = arith.constant 0 : index
    %c32_85 = arith.constant 32 : index
    %233 = vector.load %arg11[%c0_84, %c32_85] : memref<16x64xf32, #tpu.memory_space<vmem>>, vector<2x32xf32>
    tpu.vector_store %arg11[%c0_84, %c32_85], %232 {strides = array<i32>} : memref<16x64xf32, #tpu.memory_space<vmem>>, vector<2x32xf32>,
    %c0_86 = arith.constant 0 : index
    %c0_87 = arith.constant 0 : index
    %c0_88 = arith.constant 0 : index
    %234 = vector.load %arg8[%c0_86, %c0_87, %c0_88] : memref<2x2x64xf32, #tpu.memory_space<vmem>>, vector<1x2x64xf32>
    %235 = vector.shape_cast %234 : vector<1x2x64xf32> to vector<2x64xf32>
    %236 = vector.shape_cast %229 : vector<2x64xf32> to vector<1x2x64xf32>
    tpu.vector_store %arg8[%c0_86, %c0_87, %c0_88], %236 {strides = array<i32>} : memref<2x2x64xf32, #tpu.memory_space<vmem>>, vector<1x2x64xf32>,
    %c0_89 = arith.constant 0 : index
    %c0_90 = arith.constant 0 : index
    %c0_91 = arith.constant 0 : index
    %237 = vector.load %arg9[%c0_89, %c0_90, %c0_91] : memref<2x2x64xf32, #tpu.memory_space<vmem>>, vector<1x2x64xf32>
    %238 = vector.shape_cast %237 : vector<1x2x64xf32> to vector<2x64xf32>
    %239 = vector.shape_cast %227 : vector<2x64xf32> to vector<1x2x64xf32>
    tpu.vector_store %arg9[%c0_89, %c0_90, %c0_91], %239 {strides = array<i32>} : memref<2x2x64xf32, #tpu.memory_space<vmem>>, vector<1x2x64xf32>,
    %c0_92 = arith.constant 0 : index
    %c0_93 = arith.constant 0 : index
    %240 = vector.load %arg4[%c0_92, %c0_93] : memref<64x256xf32, #tpu.memory_space<vmem>>, vector<64x256xf32>
    %c0_94 = arith.constant 0 : index
    %c0_95 = arith.constant 0 : index
    %241 = vector.load %arg5[%c0_94, %c0_95] : memref<64x256xf32, #tpu.memory_space<vmem>>, vector<64x256xf32>
    %c0_96 = arith.constant 0 : index
    %c0_97 = arith.constant 0 : index
    %242 = vector.load %arg6[%c0_96, %c0_97] : memref<1x256xf32, #tpu.memory_space<vmem>>, vector<1x256xf32>
    %c0_98 = arith.constant 0 : index
    %c0_99 = arith.constant 0 : index
    %243 = vector.load %arg11[%c0_98, %c0_99] : memref<16x64xf32, #tpu.memory_space<vmem>>, vector<16x64xf32>
    %cst_100 = arith.constant dense<0.000000e+00> : vector<16x256xf32>
    %244 = tpu.matmul %243, %240, %cst_100 {dimension_numbers = #tpu.dot_dimension_numbers<[1], [0], [0], [1], [0, 0, 1, 1], [], []>} : vector<16x64xf32>, vector<64x256xf32>, vector<16x256xf32> -> vector<16x256xf32>
    %245 = vector.broadcast %242 : vector<1x256xf32> to vector<16x256xf32>
    %246 = arith.addf %244, %245 : vector<16x256xf32>
    %c0_101 = arith.constant 0 : index
    %c0_102 = arith.constant 0 : index
    %247 = vector.load %arg10[%c0_101, %c0_102] : memref<16x256xf32, #tpu.memory_space<vmem>>, vector<16x256xf32>
    tpu.vector_store %arg10[%c0_101, %c0_102], %246 {strides = array<i32>} : memref<16x256xf32, #tpu.memory_space<vmem>>, vector<16x256xf32>,
    %cst_103 = arith.constant 0.000000e+00 : f32
    %248 = vector.broadcast %cst_103 : f32 to vector<2x64xf32>
    %cst_104 = arith.constant 0.000000e+00 : f32
    %249 = vector.broadcast %cst_104 : f32 to vector<2x64xf32>
    %c0_105 = arith.constant 0 : index
    %c0_106 = arith.constant 0 : index
    %250 = vector.load %arg10[%c0_105, %c0_106] : memref<16x256xf32, #tpu.memory_space<vmem>>, vector<2x256xf32>
    %c14_107 = arith.constant 14 : index
    %c0_108 = arith.constant 0 : index
    %251 = vector.load %arg10[%c14_107, %c0_108] : memref<16x256xf32, #tpu.memory_space<vmem>>, vector<2x256xf32>
    %252 = arith.select %23, %250, %251 : vector<2x256xi1>, vector<2x256xf32>
    %cst_109 = arith.constant dense<0.000000e+00> : vector<2x256xf32>
    %253 = tpu.matmul %248, %241, %cst_109 {dimension_numbers = #tpu.dot_dimension_numbers<[1], [0], [0], [1], [0, 0, 1, 1], [], []>} : vector<2x64xf32>, vector<64x256xf32>, vector<2x256xf32> -> vector<2x256xf32>
    %254 = arith.addf %252, %253 : vector<2x256xf32>
    %255 = math.tanh %254 : vector<2x256xf32>
    %256 = arith.negf %254 : vector<2x256xf32>
    %257 = math.exp %256 : vector<2x256xf32>
    %cst_110 = arith.constant 1.000000e+00 : f32
    %258 = vector.broadcast %cst_110 : f32 to vector<2x256xf32>
    %259 = arith.addf %258, %257 : vector<2x256xf32>
    %260 = arith.divf %258, %259 : vector<2x256xf32>
    %261 = arith.select %5, %255, %260 : vector<2x256xi1>, vector<2x256xf32>
    %262 = vector.extract_strided_slice %261 {offsets = [0, 0], sizes = [2, 64], strides = [1, 1]} : vector<2x256xf32> to vector<2x64xf32>
    %263 = vector.extract_strided_slice %261 {offsets = [0, 64], sizes = [2, 64], strides = [1, 1]} : vector<2x256xf32> to vector<2x64xf32>
    %264 = vector.extract_strided_slice %261 {offsets = [0, 128], sizes = [2, 64], strides = [1, 1]} : vector<2x256xf32> to vector<2x64xf32>
    %265 = vector.extract_strided_slice %261 {offsets = [0, 192], sizes = [2, 64], strides = [1, 1]} : vector<2x256xf32> to vector<2x64xf32>
    %266 = arith.mulf %263, %249 : vector<2x64xf32>
    %267 = arith.mulf %262, %264 : vector<2x64xf32>
    %268 = arith.addf %266, %267 : vector<2x64xf32>
    %269 = math.tanh %268 : vector<2x64xf32>
    %270 = arith.mulf %265, %269 : vector<2x64xf32>
    %271 = vector.extract_strided_slice %270 {offsets = [0, 0], sizes = [2, 32], strides = [1, 1]} : vector<2x64xf32> to vector<2x32xf32>
    %c0_111 = arith.constant 0 : index
    %c0_112 = arith.constant 0 : index
    %272 = vector.load %arg7[%c0_111, %c0_112] : memref<16x64xf32, #tpu.memory_space<vmem>>, vector<2x32xf32>
    tpu.vector_store %arg7[%c0_111, %c0_112], %271 {strides = array<i32>} : memref<16x64xf32, #tpu.memory_space<vmem>>, vector<2x32xf32>,
    %273 = vector.extract_strided_slice %270 {offsets = [0, 32], sizes = [2, 32], strides = [1, 1]} : vector<2x64xf32> to vector<2x32xf32>
    %c14_113 = arith.constant 14 : index
    %c32_114 = arith.constant 32 : index
    %274 = vector.load %arg7[%c14_113, %c32_114] : memref<16x64xf32, #tpu.memory_space<vmem>>, vector<2x32xf32>
    tpu.vector_store %arg7[%c14_113, %c32_114], %273 {strides = array<i32>} : memref<16x64xf32, #tpu.memory_space<vmem>>, vector<2x32xf32>,
    %c2_115 = arith.constant 2 : index
    %c0_116 = arith.constant 0 : index
    %275 = vector.load %arg10[%c2_115, %c0_116] : memref<16x256xf32, #tpu.memory_space<vmem>>, vector<2x256xf32>
    %c12_117 = arith.constant 12 : index
    %c0_118 = arith.constant 0 : index
    %276 = vector.load %arg10[%c12_117, %c0_118] : memref<16x256xf32, #tpu.memory_space<vmem>>, vector<2x256xf32>
    %277 = arith.select %23, %275, %276 : vector<2x256xi1>, vector<2x256xf32>
    %cst_119 = arith.constant dense<0.000000e+00> : vector<2x256xf32>
    %278 = tpu.matmul %270, %241, %cst_119 {dimension_numbers = #tpu.dot_dimension_numbers<[1], [0], [0], [1], [0, 0, 1, 1], [], []>} : vector<2x64xf32>, vector<64x256xf32>, vector<2x256xf32> -> vector<2x256xf32>
    %279 = arith.addf %277, %278 : vector<2x256xf32>
    %280 = math.tanh %279 : vector<2x256xf32>
    %281 = arith.negf %279 : vector<2x256xf32>
    %282 = math.exp %281 : vector<2x256xf32>
    %cst_120 = arith.constant 1.000000e+00 : f32
    %283 = vector.broadcast %cst_120 : f32 to vector<2x256xf32>
    %284 = arith.addf %283, %282 : vector<2x256xf32>
    %285 = arith.divf %283, %284 : vector<2x256xf32>
    %286 = arith.select %5, %280, %285 : vector<2x256xi1>, vector<2x256xf32>
    %287 = vector.extract_strided_slice %286 {offsets = [0, 0], sizes = [2, 64], strides = [1, 1]} : vector<2x256xf32> to vector<2x64xf32>
    %288 = vector.extract_strided_slice %286 {offsets = [0, 64], sizes = [2, 64], strides = [1, 1]} : vector<2x256xf32> to vector<2x64xf32>
    %289 = vector.extract_strided_slice %286 {offsets = [0, 128], sizes = [2, 64], strides = [1, 1]} : vector<2x256xf32> to vector<2x64xf32>
    %290 = vector.extract_strided_slice %286 {offsets = [0, 192], sizes = [2, 64], strides = [1, 1]} : vector<2x256xf32> to vector<2x64xf32>
    %291 = arith.mulf %288, %268 : vector<2x64xf32>
    %292 = arith.mulf %287, %289 : vector<2x64xf32>
    %293 = arith.addf %291, %292 : vector<2x64xf32>
    %294 = math.tanh %293 : vector<2x64xf32>
    %295 = arith.mulf %290, %294 : vector<2x64xf32>
    %296 = vector.extract_strided_slice %295 {offsets = [0, 0], sizes = [2, 32], strides = [1, 1]} : vector<2x64xf32> to vector<2x32xf32>
    %c2_121 = arith.constant 2 : index
    %c0_122 = arith.constant 0 : index
    %297 = vector.load %arg7[%c2_121, %c0_122] : memref<16x64xf32, #tpu.memory_space<vmem>>, vector<2x32xf32>
    tpu.vector_store %arg7[%c2_121, %c0_122], %296 {strides = array<i32>} : memref<16x64xf32, #tpu.memory_space<vmem>>, vector<2x32xf32>,
    %298 = vector.extract_strided_slice %295 {offsets = [0, 32], sizes = [2, 32], strides = [1, 1]} : vector<2x64xf32> to vector<2x32xf32>
    %c12_123 = arith.constant 12 : index
    %c32_124 = arith.constant 32 : index
    %299 = vector.load %arg7[%c12_123, %c32_124] : memref<16x64xf32, #tpu.memory_space<vmem>>, vector<2x32xf32>
    tpu.vector_store %arg7[%c12_123, %c32_124], %298 {strides = array<i32>} : memref<16x64xf32, #tpu.memory_space<vmem>>, vector<2x32xf32>,
    %c4_125 = arith.constant 4 : index
    %c0_126 = arith.constant 0 : index
    %300 = vector.load %arg10[%c4_125, %c0_126] : memref<16x256xf32, #tpu.memory_space<vmem>>, vector<2x256xf32>
    %c10_127 = arith.constant 10 : index
    %c0_128 = arith.constant 0 : index
    %301 = vector.load %arg10[%c10_127, %c0_128] : memref<16x256xf32, #tpu.memory_space<vmem>>, vector<2x256xf32>
    %302 = arith.select %23, %300, %301 : vector<2x256xi1>, vector<2x256xf32>
    %cst_129 = arith.constant dense<0.000000e+00> : vector<2x256xf32>
    %303 = tpu.matmul %295, %241, %cst_129 {dimension_numbers = #tpu.dot_dimension_numbers<[1], [0], [0], [1], [0, 0, 1, 1], [], []>} : vector<2x64xf32>, vector<64x256xf32>, vector<2x256xf32> -> vector<2x256xf32>
    %304 = arith.addf %302, %303 : vector<2x256xf32>
    %305 = math.tanh %304 : vector<2x256xf32>
    %306 = arith.negf %304 : vector<2x256xf32>
    %307 = math.exp %306 : vector<2x256xf32>
    %cst_130 = arith.constant 1.000000e+00 : f32
    %308 = vector.broadcast %cst_130 : f32 to vector<2x256xf32>
    %309 = arith.addf %308, %307 : vector<2x256xf32>
    %310 = arith.divf %308, %309 : vector<2x256xf32>
    %311 = arith.select %5, %305, %310 : vector<2x256xi1>, vector<2x256xf32>
    %312 = vector.extract_strided_slice %311 {offsets = [0, 0], sizes = [2, 64], strides = [1, 1]} : vector<2x256xf32> to vector<2x64xf32>
    %313 = vector.extract_strided_slice %311 {offsets = [0, 64], sizes = [2, 64], strides = [1, 1]} : vector<2x256xf32> to vector<2x64xf32>
    %314 = vector.extract_strided_slice %311 {offsets = [0, 128], sizes = [2, 64], strides = [1, 1]} : vector<2x256xf32> to vector<2x64xf32>
    %315 = vector.extract_strided_slice %311 {offsets = [0, 192], sizes = [2, 64], strides = [1, 1]} : vector<2x256xf32> to vector<2x64xf32>
    %316 = arith.mulf %313, %293 : vector<2x64xf32>
    %317 = arith.mulf %312, %314 : vector<2x64xf32>
    %318 = arith.addf %316, %317 : vector<2x64xf32>
    %319 = math.tanh %318 : vector<2x64xf32>
    %320 = arith.mulf %315, %319 : vector<2x64xf32>
    %321 = vector.extract_strided_slice %320 {offsets = [0, 0], sizes = [2, 32], strides = [1, 1]} : vector<2x64xf32> to vector<2x32xf32>
    %c4_131 = arith.constant 4 : index
    %c0_132 = arith.constant 0 : index
    %322 = vector.load %arg7[%c4_131, %c0_132] : memref<16x64xf32, #tpu.memory_space<vmem>>, vector<2x32xf32>
    tpu.vector_store %arg7[%c4_131, %c0_132], %321 {strides = array<i32>} : memref<16x64xf32, #tpu.memory_space<vmem>>, vector<2x32xf32>,
    %323 = vector.extract_strided_slice %320 {offsets = [0, 32], sizes = [2, 32], strides = [1, 1]} : vector<2x64xf32> to vector<2x32xf32>
    %c10_133 = arith.constant 10 : index
    %c32_134 = arith.constant 32 : index
    %324 = vector.load %arg7[%c10_133, %c32_134] : memref<16x64xf32, #tpu.memory_space<vmem>>, vector<2x32xf32>
    tpu.vector_store %arg7[%c10_133, %c32_134], %323 {strides = array<i32>} : memref<16x64xf32, #tpu.memory_space<vmem>>, vector<2x32xf32>,
    %c6_135 = arith.constant 6 : index
    %c0_136 = arith.constant 0 : index
    %325 = vector.load %arg10[%c6_135, %c0_136] : memref<16x256xf32, #tpu.memory_space<vmem>>, vector<2x256xf32>
    %c8_137 = arith.constant 8 : index
    %c0_138 = arith.constant 0 : index
    %326 = vector.load %arg10[%c8_137, %c0_138] : memref<16x256xf32, #tpu.memory_space<vmem>>, vector<2x256xf32>
    %327 = arith.select %23, %325, %326 : vector<2x256xi1>, vector<2x256xf32>
    %cst_139 = arith.constant dense<0.000000e+00> : vector<2x256xf32>
    %328 = tpu.matmul %320, %241, %cst_139 {dimension_numbers = #tpu.dot_dimension_numbers<[1], [0], [0], [1], [0, 0, 1, 1], [], []>} : vector<2x64xf32>, vector<64x256xf32>, vector<2x256xf32> -> vector<2x256xf32>
    %329 = arith.addf %327, %328 : vector<2x256xf32>
    %330 = math.tanh %329 : vector<2x256xf32>
    %331 = arith.negf %329 : vector<2x256xf32>
    %332 = math.exp %331 : vector<2x256xf32>
    %cst_140 = arith.constant 1.000000e+00 : f32
    %333 = vector.broadcast %cst_140 : f32 to vector<2x256xf32>
    %334 = arith.addf %333, %332 : vector<2x256xf32>
    %335 = arith.divf %333, %334 : vector<2x256xf32>
    %336 = arith.select %5, %330, %335 : vector<2x256xi1>, vector<2x256xf32>
    %337 = vector.extract_strided_slice %336 {offsets = [0, 0], sizes = [2, 64], strides = [1, 1]} : vector<2x256xf32> to vector<2x64xf32>
    %338 = vector.extract_strided_slice %336 {offsets = [0, 64], sizes = [2, 64], strides = [1, 1]} : vector<2x256xf32> to vector<2x64xf32>
    %339 = vector.extract_strided_slice %336 {offsets = [0, 128], sizes = [2, 64], strides = [1, 1]} : vector<2x256xf32> to vector<2x64xf32>
    %340 = vector.extract_strided_slice %336 {offsets = [0, 192], sizes = [2, 64], strides = [1, 1]} : vector<2x256xf32> to vector<2x64xf32>
    %341 = arith.mulf %338, %318 : vector<2x64xf32>
    %342 = arith.mulf %337, %339 : vector<2x64xf32>
    %343 = arith.addf %341, %342 : vector<2x64xf32>
    %344 = math.tanh %343 : vector<2x64xf32>
    %345 = arith.mulf %340, %344 : vector<2x64xf32>
    %346 = vector.extract_strided_slice %345 {offsets = [0, 0], sizes = [2, 32], strides = [1, 1]} : vector<2x64xf32> to vector<2x32xf32>
    %c6_141 = arith.constant 6 : index
    %c0_142 = arith.constant 0 : index
    %347 = vector.load %arg7[%c6_141, %c0_142] : memref<16x64xf32, #tpu.memory_space<vmem>>, vector<2x32xf32>
    tpu.vector_store %arg7[%c6_141, %c0_142], %346 {strides = array<i32>} : memref<16x64xf32, #tpu.memory_space<vmem>>, vector<2x32xf32>,
    %348 = vector.extract_strided_slice %345 {offsets = [0, 32], sizes = [2, 32], strides = [1, 1]} : vector<2x64xf32> to vector<2x32xf32>
    %c8_143 = arith.constant 8 : index
    %c32_144 = arith.constant 32 : index
    %349 = vector.load %arg7[%c8_143, %c32_144] : memref<16x64xf32, #tpu.memory_space<vmem>>, vector<2x32xf32>
    tpu.vector_store %arg7[%c8_143, %c32_144], %348 {strides = array<i32>} : memref<16x64xf32, #tpu.memory_space<vmem>>, vector<2x32xf32>,
    %c8_145 = arith.constant 8 : index
    %c0_146 = arith.constant 0 : index
    %350 = vector.load %arg10[%c8_145, %c0_146] : memref<16x256xf32, #tpu.memory_space<vmem>>, vector<2x256xf32>
    %c6_147 = arith.constant 6 : index
    %c0_148 = arith.constant 0 : index
    %351 = vector.load %arg10[%c6_147, %c0_148] : memref<16x256xf32, #tpu.memory_space<vmem>>, vector<2x256xf32>
    %352 = arith.select %23, %350, %351 : vector<2x256xi1>, vector<2x256xf32>
    %cst_149 = arith.constant dense<0.000000e+00> : vector<2x256xf32>
    %353 = tpu.matmul %345, %241, %cst_149 {dimension_numbers = #tpu.dot_dimension_numbers<[1], [0], [0], [1], [0, 0, 1, 1], [], []>} : vector<2x64xf32>, vector<64x256xf32>, vector<2x256xf32> -> vector<2x256xf32>
    %354 = arith.addf %352, %353 : vector<2x256xf32>
    %355 = math.tanh %354 : vector<2x256xf32>
    %356 = arith.negf %354 : vector<2x256xf32>
    %357 = math.exp %356 : vector<2x256xf32>
    %cst_150 = arith.constant 1.000000e+00 : f32
    %358 = vector.broadcast %cst_150 : f32 to vector<2x256xf32>
    %359 = arith.addf %358, %357 : vector<2x256xf32>
    %360 = arith.divf %358, %359 : vector<2x256xf32>
    %361 = arith.select %5, %355, %360 : vector<2x256xi1>, vector<2x256xf32>
    %362 = vector.extract_strided_slice %361 {offsets = [0, 0], sizes = [2, 64], strides = [1, 1]} : vector<2x256xf32> to vector<2x64xf32>
    %363 = vector.extract_strided_slice %361 {offsets = [0, 64], sizes = [2, 64], strides = [1, 1]} : vector<2x256xf32> to vector<2x64xf32>
    %364 = vector.extract_strided_slice %361 {offsets = [0, 128], sizes = [2, 64], strides = [1, 1]} : vector<2x256xf32> to vector<2x64xf32>
    %365 = vector.extract_strided_slice %361 {offsets = [0, 192], sizes = [2, 64], strides = [1, 1]} : vector<2x256xf32> to vector<2x64xf32>
    %366 = arith.mulf %363, %343 : vector<2x64xf32>
    %367 = arith.mulf %362, %364 : vector<2x64xf32>
    %368 = arith.addf %366, %367 : vector<2x64xf32>
    %369 = math.tanh %368 : vector<2x64xf32>
    %370 = arith.mulf %365, %369 : vector<2x64xf32>
    %371 = vector.extract_strided_slice %370 {offsets = [0, 0], sizes = [2, 32], strides = [1, 1]} : vector<2x64xf32> to vector<2x32xf32>
    %c8_151 = arith.constant 8 : index
    %c0_152 = arith.constant 0 : index
    %372 = vector.load %arg7[%c8_151, %c0_152] : memref<16x64xf32, #tpu.memory_space<vmem>>, vector<2x32xf32>
    tpu.vector_store %arg7[%c8_151, %c0_152], %371 {strides = array<i32>} : memref<16x64xf32, #tpu.memory_space<vmem>>, vector<2x32xf32>,
    %373 = vector.extract_strided_slice %370 {offsets = [0, 32], sizes = [2, 32], strides = [1, 1]} : vector<2x64xf32> to vector<2x32xf32>
    %c6_153 = arith.constant 6 : index
    %c32_154 = arith.constant 32 : index
    %374 = vector.load %arg7[%c6_153, %c32_154] : memref<16x64xf32, #tpu.memory_space<vmem>>, vector<2x32xf32>
    tpu.vector_store %arg7[%c6_153, %c32_154], %373 {strides = array<i32>} : memref<16x64xf32, #tpu.memory_space<vmem>>, vector<2x32xf32>,
    %c10_155 = arith.constant 10 : index
    %c0_156 = arith.constant 0 : index
    %375 = vector.load %arg10[%c10_155, %c0_156] : memref<16x256xf32, #tpu.memory_space<vmem>>, vector<2x256xf32>
    %c4_157 = arith.constant 4 : index
    %c0_158 = arith.constant 0 : index
    %376 = vector.load %arg10[%c4_157, %c0_158] : memref<16x256xf32, #tpu.memory_space<vmem>>, vector<2x256xf32>
    %377 = arith.select %23, %375, %376 : vector<2x256xi1>, vector<2x256xf32>
    %cst_159 = arith.constant dense<0.000000e+00> : vector<2x256xf32>
    %378 = tpu.matmul %370, %241, %cst_159 {dimension_numbers = #tpu.dot_dimension_numbers<[1], [0], [0], [1], [0, 0, 1, 1], [], []>} : vector<2x64xf32>, vector<64x256xf32>, vector<2x256xf32> -> vector<2x256xf32>
    %379 = arith.addf %377, %378 : vector<2x256xf32>
    %380 = math.tanh %379 : vector<2x256xf32>
    %381 = arith.negf %379 : vector<2x256xf32>
    %382 = math.exp %381 : vector<2x256xf32>
    %cst_160 = arith.constant 1.000000e+00 : f32
    %383 = vector.broadcast %cst_160 : f32 to vector<2x256xf32>
    %384 = arith.addf %383, %382 : vector<2x256xf32>
    %385 = arith.divf %383, %384 : vector<2x256xf32>
    %386 = arith.select %5, %380, %385 : vector<2x256xi1>, vector<2x256xf32>
    %387 = vector.extract_strided_slice %386 {offsets = [0, 0], sizes = [2, 64], strides = [1, 1]} : vector<2x256xf32> to vector<2x64xf32>
    %388 = vector.extract_strided_slice %386 {offsets = [0, 64], sizes = [2, 64], strides = [1, 1]} : vector<2x256xf32> to vector<2x64xf32>
    %389 = vector.extract_strided_slice %386 {offsets = [0, 128], sizes = [2, 64], strides = [1, 1]} : vector<2x256xf32> to vector<2x64xf32>
    %390 = vector.extract_strided_slice %386 {offsets = [0, 192], sizes = [2, 64], strides = [1, 1]} : vector<2x256xf32> to vector<2x64xf32>
    %391 = arith.mulf %388, %368 : vector<2x64xf32>
    %392 = arith.mulf %387, %389 : vector<2x64xf32>
    %393 = arith.addf %391, %392 : vector<2x64xf32>
    %394 = math.tanh %393 : vector<2x64xf32>
    %395 = arith.mulf %390, %394 : vector<2x64xf32>
    %396 = vector.extract_strided_slice %395 {offsets = [0, 0], sizes = [2, 32], strides = [1, 1]} : vector<2x64xf32> to vector<2x32xf32>
    %c10_161 = arith.constant 10 : index
    %c0_162 = arith.constant 0 : index
    %397 = vector.load %arg7[%c10_161, %c0_162] : memref<16x64xf32, #tpu.memory_space<vmem>>, vector<2x32xf32>
    tpu.vector_store %arg7[%c10_161, %c0_162], %396 {strides = array<i32>} : memref<16x64xf32, #tpu.memory_space<vmem>>, vector<2x32xf32>,
    %398 = vector.extract_strided_slice %395 {offsets = [0, 32], sizes = [2, 32], strides = [1, 1]} : vector<2x64xf32> to vector<2x32xf32>
    %c4_163 = arith.constant 4 : index
    %c32_164 = arith.constant 32 : index
    %399 = vector.load %arg7[%c4_163, %c32_164] : memref<16x64xf32, #tpu.memory_space<vmem>>, vector<2x32xf32>
    tpu.vector_store %arg7[%c4_163, %c32_164], %398 {strides = array<i32>} : memref<16x64xf32, #tpu.memory_space<vmem>>, vector<2x32xf32>,
    %c12_165 = arith.constant 12 : index
    %c0_166 = arith.constant 0 : index
    %400 = vector.load %arg10[%c12_165, %c0_166] : memref<16x256xf32, #tpu.memory_space<vmem>>, vector<2x256xf32>
    %c2_167 = arith.constant 2 : index
    %c0_168 = arith.constant 0 : index
    %401 = vector.load %arg10[%c2_167, %c0_168] : memref<16x256xf32, #tpu.memory_space<vmem>>, vector<2x256xf32>
    %402 = arith.select %23, %400, %401 : vector<2x256xi1>, vector<2x256xf32>
    %cst_169 = arith.constant dense<0.000000e+00> : vector<2x256xf32>
    %403 = tpu.matmul %395, %241, %cst_169 {dimension_numbers = #tpu.dot_dimension_numbers<[1], [0], [0], [1], [0, 0, 1, 1], [], []>} : vector<2x64xf32>, vector<64x256xf32>, vector<2x256xf32> -> vector<2x256xf32>
    %404 = arith.addf %402, %403 : vector<2x256xf32>
    %405 = math.tanh %404 : vector<2x256xf32>
    %406 = arith.negf %404 : vector<2x256xf32>
    %407 = math.exp %406 : vector<2x256xf32>
    %cst_170 = arith.constant 1.000000e+00 : f32
    %408 = vector.broadcast %cst_170 : f32 to vector<2x256xf32>
    %409 = arith.addf %408, %407 : vector<2x256xf32>
    %410 = arith.divf %408, %409 : vector<2x256xf32>
    %411 = arith.select %5, %405, %410 : vector<2x256xi1>, vector<2x256xf32>
    %412 = vector.extract_strided_slice %411 {offsets = [0, 0], sizes = [2, 64], strides = [1, 1]} : vector<2x256xf32> to vector<2x64xf32>
    %413 = vector.extract_strided_slice %411 {offsets = [0, 64], sizes = [2, 64], strides = [1, 1]} : vector<2x256xf32> to vector<2x64xf32>
    %414 = vector.extract_strided_slice %411 {offsets = [0, 128], sizes = [2, 64], strides = [1, 1]} : vector<2x256xf32> to vector<2x64xf32>
    %415 = vector.extract_strided_slice %411 {offsets = [0, 192], sizes = [2, 64], strides = [1, 1]} : vector<2x256xf32> to vector<2x64xf32>
    %416 = arith.mulf %413, %393 : vector<2x64xf32>
    %417 = arith.mulf %412, %414 : vector<2x64xf32>
    %418 = arith.addf %416, %417 : vector<2x64xf32>
    %419 = math.tanh %418 : vector<2x64xf32>
    %420 = arith.mulf %415, %419 : vector<2x64xf32>
    %421 = vector.extract_strided_slice %420 {offsets = [0, 0], sizes = [2, 32], strides = [1, 1]} : vector<2x64xf32> to vector<2x32xf32>
    %c12_171 = arith.constant 12 : index
    %c0_172 = arith.constant 0 : index
    %422 = vector.load %arg7[%c12_171, %c0_172] : memref<16x64xf32, #tpu.memory_space<vmem>>, vector<2x32xf32>
    tpu.vector_store %arg7[%c12_171, %c0_172], %421 {strides = array<i32>} : memref<16x64xf32, #tpu.memory_space<vmem>>, vector<2x32xf32>,
    %423 = vector.extract_strided_slice %420 {offsets = [0, 32], sizes = [2, 32], strides = [1, 1]} : vector<2x64xf32> to vector<2x32xf32>
    %c2_173 = arith.constant 2 : index
    %c32_174 = arith.constant 32 : index
    %424 = vector.load %arg7[%c2_173, %c32_174] : memref<16x64xf32, #tpu.memory_space<vmem>>, vector<2x32xf32>
    tpu.vector_store %arg7[%c2_173, %c32_174], %423 {strides = array<i32>} : memref<16x64xf32, #tpu.memory_space<vmem>>, vector<2x32xf32>,
    %c14_175 = arith.constant 14 : index
    %c0_176 = arith.constant 0 : index
    %425 = vector.load %arg10[%c14_175, %c0_176] : memref<16x256xf32, #tpu.memory_space<vmem>>, vector<2x256xf32>
    %c0_177 = arith.constant 0 : index
    %c0_178 = arith.constant 0 : index
    %426 = vector.load %arg10[%c0_177, %c0_178] : memref<16x256xf32, #tpu.memory_space<vmem>>, vector<2x256xf32>
    %427 = arith.select %23, %425, %426 : vector<2x256xi1>, vector<2x256xf32>
    %cst_179 = arith.constant dense<0.000000e+00> : vector<2x256xf32>
    %428 = tpu.matmul %420, %241, %cst_179 {dimension_numbers = #tpu.dot_dimension_numbers<[1], [0], [0], [1], [0, 0, 1, 1], [], []>} : vector<2x64xf32>, vector<64x256xf32>, vector<2x256xf32> -> vector<2x256xf32>
    %429 = arith.addf %427, %428 : vector<2x256xf32>
    %430 = math.tanh %429 : vector<2x256xf32>
    %431 = arith.negf %429 : vector<2x256xf32>
    %432 = math.exp %431 : vector<2x256xf32>
    %cst_180 = arith.constant 1.000000e+00 : f32
    %433 = vector.broadcast %cst_180 : f32 to vector<2x256xf32>
    %434 = arith.addf %433, %432 : vector<2x256xf32>
    %435 = arith.divf %433, %434 : vector<2x256xf32>
    %436 = arith.select %5, %430, %435 : vector<2x256xi1>, vector<2x256xf32>
    %437 = vector.extract_strided_slice %436 {offsets = [0, 0], sizes = [2, 64], strides = [1, 1]} : vector<2x256xf32> to vector<2x64xf32>
    %438 = vector.extract_strided_slice %436 {offsets = [0, 64], sizes = [2, 64], strides = [1, 1]} : vector<2x256xf32> to vector<2x64xf32>
    %439 = vector.extract_strided_slice %436 {offsets = [0, 128], sizes = [2, 64], strides = [1, 1]} : vector<2x256xf32> to vector<2x64xf32>
    %440 = vector.extract_strided_slice %436 {offsets = [0, 192], sizes = [2, 64], strides = [1, 1]} : vector<2x256xf32> to vector<2x64xf32>
    %441 = arith.mulf %438, %418 : vector<2x64xf32>
    %442 = arith.mulf %437, %439 : vector<2x64xf32>
    %443 = arith.addf %441, %442 : vector<2x64xf32>
    %444 = math.tanh %443 : vector<2x64xf32>
    %445 = arith.mulf %440, %444 : vector<2x64xf32>
    %446 = vector.extract_strided_slice %445 {offsets = [0, 0], sizes = [2, 32], strides = [1, 1]} : vector<2x64xf32> to vector<2x32xf32>
    %c14_181 = arith.constant 14 : index
    %c0_182 = arith.constant 0 : index
    %447 = vector.load %arg7[%c14_181, %c0_182] : memref<16x64xf32, #tpu.memory_space<vmem>>, vector<2x32xf32>
    tpu.vector_store %arg7[%c14_181, %c0_182], %446 {strides = array<i32>} : memref<16x64xf32, #tpu.memory_space<vmem>>, vector<2x32xf32>,
    %448 = vector.extract_strided_slice %445 {offsets = [0, 32], sizes = [2, 32], strides = [1, 1]} : vector<2x64xf32> to vector<2x32xf32>
    %c0_183 = arith.constant 0 : index
    %c32_184 = arith.constant 32 : index
    %449 = vector.load %arg7[%c0_183, %c32_184] : memref<16x64xf32, #tpu.memory_space<vmem>>, vector<2x32xf32>
    tpu.vector_store %arg7[%c0_183, %c32_184], %448 {strides = array<i32>} : memref<16x64xf32, #tpu.memory_space<vmem>>, vector<2x32xf32>,
    %c1 = arith.constant 1 : index
    %c0_185 = arith.constant 0 : index
    %c0_186 = arith.constant 0 : index
    %450 = vector.load %arg8[%c1, %c0_185, %c0_186] : memref<2x2x64xf32, #tpu.memory_space<vmem>>, vector<1x2x64xf32>
    %451 = vector.shape_cast %450 : vector<1x2x64xf32> to vector<2x64xf32>
    %452 = vector.shape_cast %445 : vector<2x64xf32> to vector<1x2x64xf32>
    tpu.vector_store %arg8[%c1, %c0_185, %c0_186], %452 {strides = array<i32>} : memref<2x2x64xf32, #tpu.memory_space<vmem>>, vector<1x2x64xf32>,
    %c1_187 = arith.constant 1 : index
    %c0_188 = arith.constant 0 : index
    %c0_189 = arith.constant 0 : index
    %453 = vector.load %arg9[%c1_187, %c0_188, %c0_189] : memref<2x2x64xf32, #tpu.memory_space<vmem>>, vector<1x2x64xf32>
    %454 = vector.shape_cast %453 : vector<1x2x64xf32> to vector<2x64xf32>
    %455 = vector.shape_cast %443 : vector<2x64xf32> to vector<1x2x64xf32>
    tpu.vector_store %arg9[%c1_187, %c0_188, %c0_189], %455 {strides = array<i32>} : memref<2x2x64xf32, #tpu.memory_space<vmem>>, vector<1x2x64xf32>,
    return
  }
}

</mosaic_0001>

<llo_original>
// kernel: tpu_custom_call.1
$region0: #{tpu_custom_call.1}
  #allocation0 [shape = 'u32[]', space=smem, size = 0x4, offset = 0x4, fixed_abs, tag = 'smem constant byte address 0x4 - core index']
  #allocation1 [shape = 'u32[144,128]{1,0:T(1,128)}', space=vmem, size = 0x12000, scoped, tag = 'internal scratch']
  #allocation2 [shape = 'f32[16,256]{1,0:T(8,128)}', space=vmem, size = 0x4000, scoped, tag = 'scratch operand']
  #allocation3 [shape = 'f32[16,64]{1,0:T(8,128)}', space=vmem, size = 0x2000, scoped, tag = 'scratch operand']
  %s0 = inlined_call_operand.hbm [shape: f32[16,16], index: 0, kind: input, shape index: {}]
  %s1 = inlined_call_operand.hbm [shape: f32[16,256], index: 1, kind: input, shape index: {}]
  %s2 = inlined_call_operand.hbm [shape: f32[64,256], index: 2, kind: input, shape index: {}]
  %s3 = inlined_call_operand.vmem [shape: f32[1,256], index: 3, kind: input, shape index: {}]
  %s4 = inlined_call_operand.hbm [shape: f32[64,256], index: 4, kind: input, shape index: {}]
  %s5 = inlined_call_operand.hbm [shape: f32[64,256], index: 5, kind: input, shape index: {}]
  %s6 = inlined_call_operand.vmem [shape: f32[1,256], index: 6, kind: input, shape index: {}]
  %s7 = inlined_call_operand.hbm [shape: f32[16,64], index: 7, kind: output, shape index: {0}]
  %s8 = inlined_call_operand.hbm [shape: f32[2,2,64], index: 8, kind: output, shape index: {1}]
  %s9 = inlined_call_operand.hbm [shape: f32[2,2,64], index: 9, kind: output, shape index: {2}]
  %10 = xla_tuple %s7, %s8, %s9
  %s11 = sld [smem:[#allocation0]]
  $region74: #{tpu_custom_call.1} parent=0
    _
  %s13 = ssub.s32 1, %s11
  %s14 = scalar_select 0, %s13, %s11
  $region1: #{tpu_custom_call.1} parent=0
    #allocation4 [shape = 'u8[8192]{0}', space=vmem, size = 0x2000, scoped, tag = 'input window, operand 0, single buffered']
    #allocation5 [shape = 's32[1]{0}', space=sflag, size = 0x4, scoped, tag = 'scoped memory for tpu_custom_call.1']
    #allocation6 [shape = 's32[1]{0}', space=sflag, size = 0x4, scoped, tag = 'scoped memory for tpu_custom_call.1']
    #allocation7 [shape = 'u8[16384]{0}', space=vmem, size = 0x4000, scoped, tag = 'input window, operand 1, single buffered']
    #allocation8 [shape = 's32[1]{0}', space=sflag, size = 0x4, scoped, tag = 'scoped memory for tpu_custom_call.1']
    #allocation9 [shape = 'u8[65536]{0}', space=vmem, size = 0x10000, scoped, tag = 'input window, operand 2, single buffered']
    #allocation10 [shape = 'u8[65536]{0}', space=vmem, size = 0x10000, scoped, tag = 'input window, operand 4, single buffered']
    #allocation11 [shape = 's32[1]{0}', space=sflag, size = 0x4, scoped, tag = 'scoped memory for tpu_custom_call.1']
    #allocation12 [shape = 'u8[65536]{0}', space=vmem, size = 0x10000, scoped, tag = 'input window, operand 5, single buffered']
    #allocation13 [shape = 'u8[8192]{0}', space=vmem, size = 0x2000, scoped, tag = 'output window, operand 0, single buffered']
    #allocation14 [shape = 'u8[2048]{0}', space=vmem, size = 0x800, scoped, tag = 'output window, operand 1, single buffered']
    #allocation15 [shape = 's32[1]{0}', space=sflag, size = 0x4, scoped, tag = 'scoped memory for tpu_custom_call.1']
    #allocation16 [shape = 'u8[2048]{0}', space=vmem, size = 0x800, scoped, tag = 'output window, operand 2, single buffered']
    %15 = vsyncpa [#allocation5], 0
    %16 = vsyncpa [#allocation8], 0
    %17 = vsyncpa [#allocation11], 0
    %18 = vsyncpa [#allocation6], 0
    %19 = vsyncpa [#allocation15], 0
    // Predicated region
    $region2: #{tpu_custom_call.1} parent=1 // pred_check
      _
    $region3: #{tpu_custom_call.1} parent=1 // pred_check_branch
      %21 = sbr.rel (0) target = $region5
    $region4: #{tpu_custom_call.1} parent=1 // pred_region
      %s23 = ssub.s32 256, 256
      %24 = vsyncadd [#allocation5], %s23
      %s25 = sshll.u32 [#allocation4], 4
      %s26 = int_to_ptr.vmem [resolvable:$true] %s25
      %31 = dma.hbm_to_vmem [thread:$0]  %s0, 256, %s26, [#allocation5], 128, 128, 8
    $region5: #{tpu_custom_call.1} parent=1 // pred_fallthru
      _
    // Predicated region
    $region6: #{tpu_custom_call.1} parent=1 // pred_check
      _
    $region7: #{tpu_custom_call.1} parent=1 // pred_check_branch
      %33 = sbr.rel (0) target = $region9
    $region8: #{tpu_custom_call.1} parent=1 // pred_region
      %s35 = ssub.s32 512, 512
      %36 = vsyncadd [#allocation8], %s35
      %s37 = sshll.u32 [#allocation7], 4
      %s38 = int_to_ptr.vmem [resolvable:$true] %s37
      %43 = dma.hbm_to_vmem [thread:$0]  %s1, 512, %s38, [#allocation8], 256, 256, 16
    $region9: #{tpu_custom_call.1} parent=1 // pred_fallthru
      _
    // Predicated region
    $region10: #{tpu_custom_call.1} parent=1 // pred_check
      _
    $region11: #{tpu_custom_call.1} parent=1 // pred_check_branch
      %45 = sbr.rel (0) target = $region13
    $region12: #{tpu_custom_call.1} parent=1 // pred_region
      %s47 = ssub.s32 2048, 2048
      %48 = vsyncadd [#allocation8], %s47
      %s49 = sshll.u32 [#allocation9], 4
      %s50 = int_to_ptr.vmem [resolvable:$true] %s49
      %55 = dma.hbm_to_vmem [thread:$0]  %s2, 2048, %s50, [#allocation8], 256, 256, 16
    $region13: #{tpu_custom_call.1} parent=1 // pred_fallthru
      _
    // Predicated region
    $region14: #{tpu_custom_call.1} parent=1 // pred_check
      _
    $region15: #{tpu_custom_call.1} parent=1 // pred_check_branch
      %57 = sbr.rel (0) target = $region17
    $region16: #{tpu_custom_call.1} parent=1 // pred_region
      _
    $region17: #{tpu_custom_call.1} parent=1 // pred_fallthru
      _
    // Predicated region
    $region18: #{tpu_custom_call.1} parent=1 // pred_check
      _
    $region19: #{tpu_custom_call.1} parent=1 // pred_check_branch
      %59 = sbr.rel (0) target = $region21
    $region20: #{tpu_custom_call.1} parent=1 // pred_region
      %s61 = ssub.s32 2048, 2048
      %62 = vsyncadd [#allocation11], %s61
      %s63 = sshll.u32 [#allocation10], 4
      %s64 = int_to_ptr.vmem [resolvable:$true] %s63
      %69 = dma.hbm_to_vmem [thread:$0]  %s4, 2048, %s64, [#allocation11], 256, 256, 16
    $region21: #{tpu_custom_call.1} parent=1 // pred_fallthru
      _
    // Predicated region
    $region22: #{tpu_custom_call.1} parent=1 // pred_check
      _
    $region23: #{tpu_custom_call.1} parent=1 // pred_check_branch
      %71 = sbr.rel (0) target = $region25
    $region24: #{tpu_custom_call.1} parent=1 // pred_region
      %s73 = ssub.s32 2048, 2048
      %74 = vsyncadd [#allocation11], %s73
      %s75 = sshll.u32 [#allocation12], 4
      %s76 = int_to_ptr.vmem [resolvable:$true] %s75
      %81 = dma.hbm_to_vmem [thread:$0]  %s5, 2048, %s76, [#allocation11], 256, 256, 16
    $region25: #{tpu_custom_call.1} parent=1 // pred_fallthru
      _
    // Predicated region
    $region26: #{tpu_custom_call.1} parent=1 // pred_check
      _
    $region27: #{tpu_custom_call.1} parent=1 // pred_check_branch
      %83 = sbr.rel (0) target = $region29
    $region28: #{tpu_custom_call.1} parent=1 // pred_region
      _
    $region29: #{tpu_custom_call.1} parent=1 // pred_fallthru
      _
    // Predicated region
    $region30: #{tpu_custom_call.1} parent=1 // pred_check
      _
    $region31: #{tpu_custom_call.1} parent=1 // pred_check_branch
      %85 = sbr.rel (0) target = $region33
    $region32: #{tpu_custom_call.1} parent=1 // pred_region
      %86 = dma.done [#allocation5], 256
    $region33: #{tpu_custom_call.1} parent=1 // pred_fallthru
      _
    // Predicated region
    $region34: #{tpu_custom_call.1} parent=1 // pred_check
      _
    $region35: #{tpu_custom_call.1} parent=1 // pred_check_branch
      %88 = sbr.rel (0) target = $region37
    $region36: #{tpu_custom_call.1} parent=1 // pred_region
      %89 = dma.done [#allocation8], 512
    $region37: #{tpu_custom_call.1} parent=1 // pred_fallthru
      _
    // Predicated region
    $region38: #{tpu_custom_call.1} parent=1 // pred_check
      _
    $region39: #{tpu_custom_call.1} parent=1 // pred_check_branch
      %91 = sbr.rel (0) target = $region41
    $region40: #{tpu_custom_call.1} parent=1 // pred_region
      %92 = dma.done [#allocation8], 2048
    $region41: #{tpu_custom_call.1} parent=1 // pred_fallthru
      _
    // Predicated region
    $region42: #{tpu_custom_call.1} parent=1 // pred_check
      _
    $region43: #{tpu_custom_call.1} parent=1 // pred_check_branch
      %94 = sbr.rel (0) target = $region45
    $region44: #{tpu_custom_call.1} parent=1 // pred_region
      %95 = dma.done [#allocation11], 2048
    $region45: #{tpu_custom_call.1} parent=1 // pred_fallthru
      _
    // Predicated region
    $region46: #{tpu_custom_call.1} parent=1 // pred_check
      _
    $region47: #{tpu_custom_call.1} parent=1 // pred_check_branch
      %97 = sbr.rel (0) target = $region49
    $region48: #{tpu_custom_call.1} parent=1 // pred_region
      %98 = dma.done [#allocation11], 2048
    $region49: #{tpu_custom_call.1} parent=1 // pred_fallthru
      _
    %v99 = vlaneseq
    %v100 = vand.u32 %v99, 127
    %v101 = vadd.s32 %v100, 128
    %vm102 = vcmp.ge.s32.totalorder %v100, 128
    %vm103 = vcmp.ge.s32.totalorder %v101, 128
    %vm104 = vcmp.lt.s32.totalorder %v100, 192
    %vm105 = vcmp.lt.s32.totalorder %v101, 192
    %vm106 = vmand %vm102, %vm104
    %vm107 = vmand %vm103, %vm105
    %vm108 = vcmp.lt.s32.totalorder %v100, 0
    %v109 = vsub.s32 0, %v100
    %v110 = vsel %vm108, %v109, %v100
    %v111 = vshrl.u32 %v110, 6
    %v112 = vand.u32 %v110, 63
    %v113 = vsub.s32 0, %v112
    %v114 = vsel %vm108, %v113, %v112
    %vm115 = vcmp.lt.s32.totalorder %v101, 0
    %v116 = vsub.s32 0, %v101
    %v117 = vsel %vm115, %v116, %v101
    %v118 = vshrl.u32 %v117, 6
    %v119 = vand.u32 %v117, 63
    %v120 = vsub.s32 0, %v119
    %v121 = vsel %vm115, %v120, %v119
    %vm122 = vcmp.ne.s32.totalorder %v114, 0
    %vm123 = vcmp.ne.s32.totalorder %v121, 0
    %vm124 = vcmp.lt.s32.totalorder %v114, 0
    %vm125 = vcmp.lt.s32.totalorder %v121, 0
    %vm126 = vmand %vm124, %vm122
    %vm127 = vmand %vm125, %vm123
    %v128 = vadd.s32 %v114, 64
    %v129 = vadd.s32 %v121, 64
    %v130 = vsel %vm126, %v128, %v114
    %v131 = vsel %vm127, %v129, %v121
    %vm132 = vcmp.lt.s32.totalorder %v130, 32
    %vm133 = vcmp.lt.s32.totalorder %v131, 32
    %v134 = vld [vmem:[#allocation7] sm:$0xff]
    %v135 = vld [vmem:[#allocation7 + $0x8] sm:$0xff]
    %v136 = vld [vmem:[#allocation7 + $0x10] sm:$0xff]
    %v137 = vld [vmem:[#allocation7 + $0x18] sm:$0xff]
    %v138 = vld [vmem:[#allocation9] sm:$0xff]
    %v139 = vld [vmem:[#allocation9 + $0x8] sm:$0xff]
    %v140 = vld [vmem:[#allocation9 + $0x10] sm:$0xff]
    %v141 = vld [vmem:[#allocation9 + $0x18] sm:$0xff]
    %v142 = vld [vmem:[#allocation9 + $0x20] sm:$0xff]
    %v143 = vld [vmem:[#allocation9 + $0x28] sm:$0xff]
    %v144 = vld [vmem:[#allocation9 + $0x30] sm:$0xff]
    %v145 = vld [vmem:[#allocation9 + $0x38] sm:$0xff]
    %v146 = vld [vmem:[#allocation9 + $0x40] sm:$0xff]
    %v147 = vld [vmem:[#allocation9 + $0x48] sm:$0xff]
    %v148 = vld [vmem:[#allocation9 + $0x50] sm:$0xff]
    %v149 = vld [vmem:[#allocation9 + $0x58] sm:$0xff]
    %v150 = vld [vmem:[#allocation9 + $0x60] sm:$0xff]
    %v151 = vld [vmem:[#allocation9 + $0x68] sm:$0xff]
    %v152 = vld [vmem:[#allocation9 + $0x70] sm:$0xff]
    %v153 = vld [vmem:[#allocation9 + $0x78] sm:$0xff]
    %v154 = vld [vmem:[%s3] sm:$0x3]
    %v155 = vld [vmem:[#allocation4] sm:$0xff]
    %v156 = vld [vmem:[#allocation4 + $0x8] sm:$0xff]
    %v158 = vlaneseq
    %v159 = vshrl.u32 %v158, 7
    %v160 = vsub.s32 0, %v159
    %v161 = vrot.slane %v154, %v160
    %v162 = vlaneseq
    %v163 = vshrl.u32 %v162, 7
    %v164 = vsub.s32 1, %v163
    %v165 = vrot.slane %v154, %v164
    %vm168 = vcmask 130048
    %v170 = vsel %vm168, %v155, 0
    %v173 = vsel %vm168, %v156, 0
    %175 = vmatprep.subr.mxu0 %v135
    %176 = vmatpush1.msra.mxu0 %v134
    %177 = vmatprep.subr.mxu0 %v137
    %178 = vmatpush1.msra.mxu0 %v136
    %179 = vmatprep.subr.mxu0 0.0
    %180 = vmatpush1.msra.mxu0 0.0
    %181 = vmatprep.subr.mxu0 0.0
    %182 = vmatpush1.msra.mxu0 0.0
    %183 = vmatprep.subr.mxu0 0.0
    %184 = vmatpush1.msra.mxu0 0.0
    %185 = vmatprep.subr.mxu0 0.0
    %186 = vmatpush1.msra.mxu0 0.0
    %187 = vmatprep.subr.mxu0 0.0
    %188 = vmatpush1.msra.mxu0 0.0
    %189 = vmatprep.subr.mxu0 0.0
    %190 = vmatpush1.msra.mxu0 0.0
    %191 = vmatprep.subr.mxu0 0.0
    %192 = vmatpush1.msra.mxu0 0.0
    %193 = vmatprep.subr.mxu0 0.0
    %194 = vmatpush1.msra.mxu0 0.0
    %195 = vmatprep.subr.mxu0 0.0
    %196 = vmatpush1.msra.mxu0 0.0
    %197 = vmatprep.subr.mxu0 0.0
    %198 = vmatpush1.msra.mxu0 0.0
    %199 = vmatprep.subr.mxu0 0.0
    %200 = vmatpush1.msra.mxu0 0.0
    %201 = vmatprep.subr.mxu0 0.0
    %202 = vmatpush1.msra.mxu0 0.0
    %203 = vmatprep.subr.mxu0 0.0
    %204 = vmatpush1.msra.mxu0 0.0
    %205 = vmatprep.subr.mxu0 0.0
    %206 = vmatpush1.msra.mxu0 0.0
    %207 = vmatprep.subr.mxu0 0.0
    %208 = vmatpush1.msra.mxu0 0.0
    %209 = vmatprep.subr.mxu0 0.0
    %210 = vmatpush1.msra.mxu0 0.0
    %211 = vmatprep.subr.mxu0 0.0
    %212 = vmatpush1.msra.mxu0 0.0
    %213 = vmatprep.subr.mxu0 0.0
    %214 = vmatpush1.msra.mxu0 0.0
    %215 = vmatprep.subr.mxu0 0.0
    %216 = vmatpush1.msra.mxu0 0.0
    %217 = vmatprep.subr.mxu0 0.0
    %218 = vmatpush1.msra.mxu0 0.0
    %219 = vmatprep.subr.mxu0 0.0
    %220 = vmatpush1.msra.mxu0 0.0
    %221 = vmatprep.subr.mxu0 0.0
    %222 = vmatpush1.msra.mxu0 0.0
    %223 = vmatprep.subr.mxu0 0.0
    %224 = vmatpush1.msra.mxu0 0.0
    %225 = vmatprep.subr.mxu0 0.0
    %226 = vmatpush1.msra.mxu0 0.0
    %227 = vmatprep.subr.mxu0 0.0
    %228 = vmatpush1.msra.mxu0 0.0
    %229 = vmatprep.subr.mxu0 0.0
    %230 = vmatpush1.msra.mxu0 0.0
    %231 = vmatprep.subr.mxu0 0.0
    %232 = vmatpush1.msra.mxu0 0.0
    %233 = vmatprep.subr.mxu0 0.0
    %234 = vmatpush1.msra.mxu0 0.0
    %235 = vmatprep.subr.mxu0 0.0
    %236 = vmatpush1.msra.mxu0 0.0
    %237 = vmatprep.subr.mxu0 0.0
    %238 = vmatpush1.msra.mxu0 0.0
    %239 = vmatprep.mubr.f32.mxu0 0.0
    %240 = vmatmul.mubr.f32.gmra.mrb[0].mxu0 %v170
    %v241 = vpop.f32.mrb[0].mxu0
    %v242 = vadd.f32 %v161, %v241
    %v243 = vpop.f32.mrb[0].mxu0
    %v244 = vadd.f32 %v165, %v243
    %245 = vmatprep.mubr.f32.mxu0 0.0
    %246 = vmatmul.mubr.f32.gmra.mrb[0].mxu0 %v173
    %v247 = vpop.f32.mrb[0].mxu0
    %v248 = vadd.f32 %v161, %v247
    %v249 = vpop.f32.mrb[0].mxu0
    %v250 = vadd.f32 %v165, %v249
    %251 = vdwg.mxu0
    %252 = vst [vmem:[#allocation2] sm:$0xff] %v242
    %253 = vst [vmem:[#allocation2 + $0x8] sm:$0xff] %v244
    %254 = vst [vmem:[#allocation2 + $0x10] sm:$0xff] %v248
    %255 = vst [vmem:[#allocation2 + $0x18] sm:$0xff] %v250
    %v256 = vld [vmem:[#allocation2] sm:$0x3]
    %v257 = vld [vmem:[#allocation2 + $0x8] sm:$0x3]
    %v258 = vld [vmem:[#allocation2 + $0x10] sm:$0xc0]
    %v259 = vld [vmem:[#allocation2 + $0x18] sm:$0xc0]
    %v262 = vrot.slane %v258, 6
    %v263 = vrot.slane %v259, 6
    %v266 = vsel %vm132, %v256, %v262
    %v267 = vsel %vm133, %v257, %v263
    %vm268 = vcmask 523264
    %v270 = vsel %vm268, 0.0, 0
    %272 = vmatprep.subr.mxu0 %v139
    %273 = vmatpush1.msra.mxu0 %v138
    %274 = vmatprep.subr.mxu0 %v141
    %275 = vmatpush1.msra.mxu0 %v140
    %276 = vmatprep.subr.mxu0 %v143
    %277 = vmatpush1.msra.mxu0 %v142
    %278 = vmatprep.subr.mxu0 %v145
    %279 = vmatpush1.msra.mxu0 %v144
    %280 = vmatprep.subr.mxu0 %v147
    %281 = vmatpush1.msra.mxu0 %v146
    %282 = vmatprep.subr.mxu0 %v149
    %283 = vmatpush1.msra.mxu0 %v148
    %284 = vmatprep.subr.mxu0 %v151
    %285 = vmatpush1.msra.mxu0 %v150
    %286 = vmatprep.subr.mxu0 %v153
    %287 = vmatpush1.msra.mxu0 %v152
    %288 = vmatprep.subr.mxu0 0.0
    %289 = vmatpush1.msra.mxu0 0.0
    %290 = vmatprep.subr.mxu0 0.0
    %291 = vmatpush1.msra.mxu0 0.0
    %292 = vmatprep.subr.mxu0 0.0
    %293 = vmatpush1.msra.mxu0 0.0
    %294 = vmatprep.subr.mxu0 0.0
    %295 = vmatpush1.msra.mxu0 0.0
    %296 = vmatprep.subr.mxu0 0.0
    %297 = vmatpush1.msra.mxu0 0.0
    %298 = vmatprep.subr.mxu0 0.0
    %299 = vmatpush1.msra.mxu0 0.0
    %300 = vmatprep.subr.mxu0 0.0
    %301 = vmatpush1.msra.mxu0 0.0
    %302 = vmatprep.subr.mxu0 0.0
    %303 = vmatpush1.msra.mxu0 0.0
    %304 = vmatprep.subr.mxu0 0.0
    %305 = vmatpush1.msra.mxu0 0.0
    %306 = vmatprep.subr.mxu0 0.0
    %307 = vmatpush1.msra.mxu0 0.0
    %308 = vmatprep.subr.mxu0 0.0
    %309 = vmatpush1.msra.mxu0 0.0
    %310 = vmatprep.subr.mxu0 0.0
    %311 = vmatpush1.msra.mxu0 0.0
    %312 = vmatprep.subr.mxu0 0.0
    %313 = vmatpush1.msra.mxu0 0.0
    %314 = vmatprep.subr.mxu0 0.0
    %315 = vmatpush1.msra.mxu0 0.0
    %316 = vmatprep.subr.mxu0 0.0
    %317 = vmatpush1.msra.mxu0 0.0
    %318 = vmatprep.subr.mxu0 0.0
    %319 = vmatpush1.msra.mxu0 0.0
    %320 = vmatprep.subr.mxu0 0.0
    %321 = vmatpush1.msra.mxu0 0.0
    %322 = vmatprep.subr.mxu0 0.0
    %323 = vmatpush1.msra.mxu0 0.0
    %324 = vmatprep.subr.mxu0 0.0
    %325 = vmatpush1.msra.mxu0 0.0
    %326 = vmatprep.subr.mxu0 0.0
    %327 = vmatpush1.msra.mxu0 0.0
    %328 = vmatprep.subr.mxu0 0.0
    %329 = vmatpush1.msra.mxu0 0.0
    %330 = vmatprep.subr.mxu0 0.0
    %331 = vmatpush1.msra.mxu0 0.0
    %332 = vmatprep.subr.mxu0 0.0
    %333 = vmatpush1.msra.mxu0 0.0
    %334 = vmatprep.subr.mxu0 0.0
    %335 = vmatpush1.msra.mxu0 0.0
    %336 = vmatprep.mubr.f32.mxu0 0.0
    %337 = vmatmul.mubr.f32.gmra.mrb[0].mxu0 %v270
    %v338 = vpop.f32.mrb[0].mxu0
    %v339 = vadd.f32 0.0, %v338
    %v340 = vpop.f32.mrb[0].mxu0
    %v341 = vadd.f32 0.0, %v340
    %342 = vdwg.mxu0
    %v343 = vadd.f32 %v266, %v339
    %v344 = vadd.f32 %v267, %v341
    %v345 = vtanh.pop %v343
    %v346 = vtanh.pop %v344
    %v347 = vxor.u32 %v343, 2147483648
    %v348 = vxor.u32 %v344, 2147483648
    %v349 = vmul.f32 %v347, 1.442695
    %v350 = vpow.pop %v349
    %v351 = vmul.f32 %v348, 1.442695
    %v352 = vpow.pop %v351
    %v353 = vadd.f32 %v350, 1.0
    %v354 = vadd.f32 %v352, 1.0
    %v355 = vrcp.pop %v353
    %v356 = vmul.f32 1.0, %v355
    %v357 = vrcp.pop %v354
    %v358 = vmul.f32 1.0, %v357
    %v359 = vsel %vm106, %v345, %v356
    %v360 = vsel %vm107, %v346, %v358
    %v361 = vmul.f32 %v359, 0.0
    %v362 = vmul.f32 %v359, %v360
    %364 = vrot.lane.b32.xlu0 %v362, 64
    %v365 = vpop.permute.xlu0 %364
    %v367 = vadd.f32 %v361, %v365
    %v368 = vtanh.pop %v367
    %v369 = vmul.f32 %v360, %v368
    %371 = vrot.lane.b32.xlu0 %v369, 64
    %v372 = vpop.permute.xlu0 %371
    %vm374 = vcmask 254976
    %375 = vst.msk [vmem:[#allocation3] sm:$0x3] %vm374, %v372
    %vm376 = vcmask 517376
    %377 = vst.msk [vmem:[#allocation3 + $0xe] sm:$0x3] %vm376, %v372
    %v378 = vld [vmem:[#allocation2] sm:$0xc]
    %v379 = vld [vmem:[#allocation2 + $0x8] sm:$0xc]
    %v380 = vld [vmem:[#allocation2 + $0x10] sm:$0x30]
    %v381 = vld [vmem:[#allocation2 + $0x18] sm:$0x30]
    %v384 = vrot.slane %v380, 2
    %v385 = vrot.slane %v381, 2
    %v388 = vsel %vm132, %v378, %v384
    %v389 = vsel %vm133, %v379, %v385
    %v390 = vsel %vm268, %v372, 0
    %392 = vmatprep.subr.mxu0 %v139
    %393 = vmatpush1.msra.mxu0 %v138
    %394 = vmatprep.subr.mxu0 %v141
    %395 = vmatpush1.msra.mxu0 %v140
    %396 = vmatprep.subr.mxu0 %v143
    %397 = vmatpush1.msra.mxu0 %v142
    %398 = vmatprep.subr.mxu0 %v145
    %399 = vmatpush1.msra.mxu0 %v144
    %400 = vmatprep.subr.mxu0 %v147
    %401 = vmatpush1.msra.mxu0 %v146
    %402 = vmatprep.subr.mxu0 %v149
    %403 = vmatpush1.msra.mxu0 %v148
    %404 = vmatprep.subr.mxu0 %v151
    %405 = vmatpush1.msra.mxu0 %v150
    %406 = vmatprep.subr.mxu0 %v153
    %407 = vmatpush1.msra.mxu0 %v152
    %408 = vmatprep.subr.mxu0 0.0
    %409 = vmatpush1.msra.mxu0 0.0
    %410 = vmatprep.subr.mxu0 0.0
    %411 = vmatpush1.msra.mxu0 0.0
    %412 = vmatprep.subr.mxu0 0.0
    %413 = vmatpush1.msra.mxu0 0.0
    %414 = vmatprep.subr.mxu0 0.0
    %415 = vmatpush1.msra.mxu0 0.0
    %416 = vmatprep.subr.mxu0 0.0
    %417 = vmatpush1.msra.mxu0 0.0
    %418 = vmatprep.subr.mxu0 0.0
    %419 = vmatpush1.msra.mxu0 0.0
    %420 = vmatprep.subr.mxu0 0.0
    %421 = vmatpush1.msra.mxu0 0.0
    %422 = vmatprep.subr.mxu0 0.0
    %423 = vmatpush1.msra.mxu0 0.0
    %424 = vmatprep.subr.mxu0 0.0
    %425 = vmatpush1.msra.mxu0 0.0
    %426 = vmatprep.subr.mxu0 0.0
    %427 = vmatpush1.msra.mxu0 0.0
    %428 = vmatprep.subr.mxu0 0.0
    %429 = vmatpush1.msra.mxu0 0.0
    %430 = vmatprep.subr.mxu0 0.0
    %431 = vmatpush1.msra.mxu0 0.0
    %432 = vmatprep.subr.mxu0 0.0
    %433 = vmatpush1.msra.mxu0 0.0
    %434 = vmatprep.subr.mxu0 0.0
    %435 = vmatpush1.msra.mxu0 0.0
    %436 = vmatprep.subr.mxu0 0.0
    %437 = vmatpush1.msra.mxu0 0.0
    %438 = vmatprep.subr.mxu0 0.0
    %439 = vmatpush1.msra.mxu0 0.0
    %440 = vmatprep.subr.mxu0 0.0
    %441 = vmatpush1.msra.mxu0 0.0
    %442 = vmatprep.subr.mxu0 0.0
    %443 = vmatpush1.msra.mxu0 0.0
    %444 = vmatprep.subr.mxu0 0.0
    %445 = vmatpush1.msra.mxu0 0.0
    %446 = vmatprep.subr.mxu0 0.0
    %447 = vmatpush1.msra.mxu0 0.0
    %448 = vmatprep.subr.mxu0 0.0
    %449 = vmatpush1.msra.mxu0 0.0
    %450 = vmatprep.subr.mxu0 0.0
    %451 = vmatpush1.msra.mxu0 0.0
    %452 = vmatprep.subr.mxu0 0.0
    %453 = vmatpush1.msra.mxu0 0.0
    %454 = vmatprep.subr.mxu0 0.0
    %455 = vmatpush1.msra.mxu0 0.0
    %456 = vmatprep.mubr.f32.mxu0 0.0
    %457 = vmatmul.mubr.f32.gmra.mrb[0].mxu0 %v390
    %v458 = vpop.f32.mrb[0].mxu0
    %v459 = vadd.f32 0.0, %v458
    %v460 = vpop.f32.mrb[0].mxu0
    %v461 = vadd.f32 0.0, %v460
    %462 = vdwg.mxu0
    %v465 = vrot.slane %v459, 6
    %v466 = vrot.slane %v461, 6
    %v469 = vadd.f32 %v388, %v465
    %v470 = vadd.f32 %v389, %v466
    %v471 = vtanh.pop %v469
    %v472 = vtanh.pop %v470
    %v473 = vxor.u32 %v469, 2147483648
    %v474 = vxor.u32 %v470, 2147483648
    %v475 = vmul.f32 %v473, 1.442695
    %v476 = vpow.pop %v475
    %v477 = vmul.f32 %v474, 1.442695
    %v478 = vpow.pop %v477
    %v479 = vadd.f32 %v476, 1.0
    %v480 = vadd.f32 %v478, 1.0
    %v481 = vrcp.pop %v479
    %v482 = vmul.f32 1.0, %v481
    %v483 = vrcp.pop %v480
    %v484 = vmul.f32 1.0, %v483
    %v485 = vsel %vm106, %v471, %v482
    %v486 = vsel %vm107, %v472, %v484
    %v488 = vrot.slane %v367, 6
    %v490 = vmul.f32 %v485, %v488
    %v491 = vmul.f32 %v485, %v486
    %493 = vrot.lane.b32.xlu0 %v491, 64
    %v494 = vpop.permute.xlu0 %493
    %v496 = vadd.f32 %v490, %v494
    %v497 = vtanh.pop %v496
    %v498 = vmul.f32 %v486, %v497
    %500 = vrot.lane.b32.xlu0 %v498, 64
    %v501 = vpop.permute.xlu0 %500
    %vm503 = vcmask 257026
    %504 = vst.msk [vmem:[#allocation3] sm:$0xc] %vm503, %v501
    %vm505 = vcmask 519426
    %506 = vst.msk [vmem:[#allocation3 + $0xa] sm:$0xc] %vm505, %v501
    %v507 = vld [vmem:[#allocation2] sm:$0x30]
    %v508 = vld [vmem:[#allocation2 + $0x8] sm:$0x30]
    %v509 = vld [vmem:[#allocation2 + $0x10] sm:$0xc]
    %v510 = vld [vmem:[#allocation2 + $0x18] sm:$0xc]
    %v513 = vrot.slane %v509, 6
    %v514 = vrot.slane %v510, 6
    %v517 = vsel %vm132, %v507, %v513
    %v518 = vsel %vm133, %v508, %v514
    %v519 = vrot.slane %v498, 2
    %520 = vrot.lane.b32.xlu0 %v519, 64
    %v521 = vpop.permute.xlu0 %520
    %v522 = vsel %vm268, %v521, 0
    %524 = vmatprep.subr.mxu0 %v139
    %525 = vmatpush1.msra.mxu0 %v138
    %526 = vmatprep.subr.mxu0 %v141
    %527 = vmatpush1.msra.mxu0 %v140
    %528 = vmatprep.subr.mxu0 %v143
    %529 = vmatpush1.msra.mxu0 %v142
    %530 = vmatprep.subr.mxu0 %v145
    %531 = vmatpush1.msra.mxu0 %v144
    %532 = vmatprep.subr.mxu0 %v147
    %533 = vmatpush1.msra.mxu0 %v146
    %534 = vmatprep.subr.mxu0 %v149
    %535 = vmatpush1.msra.mxu0 %v148
    %536 = vmatprep.subr.mxu0 %v151
    %537 = vmatpush1.msra.mxu0 %v150
    %538 = vmatprep.subr.mxu0 %v153
    %539 = vmatpush1.msra.mxu0 %v152
    %540 = vmatprep.subr.mxu0 0.0
    %541 = vmatpush1.msra.mxu0 0.0
    %542 = vmatprep.subr.mxu0 0.0
    %543 = vmatpush1.msra.mxu0 0.0
    %544 = vmatprep.subr.mxu0 0.0
    %545 = vmatpush1.msra.mxu0 0.0
    %546 = vmatprep.subr.mxu0 0.0
    %547 = vmatpush1.msra.mxu0 0.0
    %548 = vmatprep.subr.mxu0 0.0
    %549 = vmatpush1.msra.mxu0 0.0
    %550 = vmatprep.subr.mxu0 0.0
    %551 = vmatpush1.msra.mxu0 0.0
    %552 = vmatprep.subr.mxu0 0.0
    %553 = vmatpush1.msra.mxu0 0.0
    %554 = vmatprep.subr.mxu0 0.0
    %555 = vmatpush1.msra.mxu0 0.0
    %556 = vmatprep.subr.mxu0 0.0
    %557 = vmatpush1.msra.mxu0 0.0
    %558 = vmatprep.subr.mxu0 0.0
    %559 = vmatpush1.msra.mxu0 0.0
    %560 = vmatprep.subr.mxu0 0.0
    %561 = vmatpush1.msra.mxu0 0.0
    %562 = vmatprep.subr.mxu0 0.0
    %563 = vmatpush1.msra.mxu0 0.0
    %564 = vmatprep.subr.mxu0 0.0
    %565 = vmatpush1.msra.mxu0 0.0
    %566 = vmatprep.subr.mxu0 0.0
    %567 = vmatpush1.msra.mxu0 0.0
    %568 = vmatprep.subr.mxu0 0.0
    %569 = vmatpush1.msra.mxu0 0.0
    %570 = vmatprep.subr.mxu0 0.0
    %571 = vmatpush1.msra.mxu0 0.0
    %572 = vmatprep.subr.mxu0 0.0
    %573 = vmatpush1.msra.mxu0 0.0
    %574 = vmatprep.subr.mxu0 0.0
    %575 = vmatpush1.msra.mxu0 0.0
    %576 = vmatprep.subr.mxu0 0.0
    %577 = vmatpush1.msra.mxu0 0.0
    %578 = vmatprep.subr.mxu0 0.0
    %579 = vmatpush1.msra.mxu0 0.0
    %580 = vmatprep.subr.mxu0 0.0
    %581 = vmatpush1.msra.mxu0 0.0
    %582 = vmatprep.subr.mxu0 0.0
    %583 = vmatpush1.msra.mxu0 0.0
    %584 = vmatprep.subr.mxu0 0.0
    %585 = vmatpush1.msra.mxu0 0.0
    %586 = vmatprep.subr.mxu0 0.0
    %587 = vmatpush1.msra.mxu0 0.0
    %588 = vmatprep.mubr.f32.mxu0 0.0
    %589 = vmatmul.mubr.f32.gmra.mrb[0].mxu0 %v522
    %v590 = vpop.f32.mrb[0].mxu0
    %v591 = vadd.f32 0.0, %v590
    %v592 = vpop.f32.mrb[0].mxu0
    %v593 = vadd.f32 0.0, %v592
    %594 = vdwg.mxu0
    %v597 = vrot.slane %v591, 4
    %v598 = vrot.slane %v593, 4
    %v601 = vadd.f32 %v517, %v597
    %v602 = vadd.f32 %v518, %v598
    %v603 = vtanh.pop %v601
    %v604 = vtanh.pop %v602
    %v605 = vxor.u32 %v601, 2147483648
    %v606 = vxor.u32 %v602, 2147483648
    %v607 = vmul.f32 %v605, 1.442695
    %v608 = vpow.pop %v607
    %v609 = vmul.f32 %v606, 1.442695
    %v610 = vpow.pop %v609
    %v611 = vadd.f32 %v608, 1.0
    %v612 = vadd.f32 %v610, 1.0
    %v613 = vrcp.pop %v611
    %v614 = vmul.f32 1.0, %v613
    %v615 = vrcp.pop %v612
    %v616 = vmul.f32 1.0, %v615
    %v617 = vsel %vm106, %v603, %v614
    %v618 = vsel %vm107, %v604, %v616
    %v620 = vrot.slane %v496, 6
    %v622 = vmul.f32 %v617, %v620
    %v623 = vmul.f32 %v617, %v618
    %625 = vrot.lane.b32.xlu0 %v623, 64
    %v626 = vpop.permute.xlu0 %625
    %v628 = vadd.f32 %v622, %v626
    %v629 = vtanh.pop %v628
    %v630 = vmul.f32 %v618, %v629
    %632 = vrot.lane.b32.xlu0 %v630, 64
    %v633 = vpop.permute.xlu0 %632
    %vm635 = vcmask 259076
    %636 = vst.msk [vmem:[#allocation3] sm:$0x30] %vm635, %v633
    %vm637 = vcmask 521476
    %638 = vst.msk [vmem:[#allocation3 + $0x6] sm:$0x30] %vm637, %v633
    %v639 = vld [vmem:[#allocation2] sm:$0xc0]
    %v640 = vld [vmem:[#allocation2 + $0x8] sm:$0xc0]
    %v641 = vld [vmem:[#allocation2 + $0x10] sm:$0x3]
    %v642 = vld [vmem:[#allocation2 + $0x18] sm:$0x3]
    %v645 = vrot.slane %v641, 2
    %v646 = vrot.slane %v642, 2
    %v649 = vsel %vm132, %v639, %v645
    %v650 = vsel %vm133, %v640, %v646
    %v651 = vrot.slane %v630, 4
    %652 = vrot.lane.b32.xlu0 %v651, 64
    %v653 = vpop.permute.xlu0 %652
    %v654 = vsel %vm268, %v653, 0
    %656 = vmatprep.subr.mxu0 %v139
    %657 = vmatpush1.msra.mxu0 %v138
    %658 = vmatprep.subr.mxu0 %v141
    %659 = vmatpush1.msra.mxu0 %v140
    %660 = vmatprep.subr.mxu0 %v143
    %661 = vmatpush1.msra.mxu0 %v142
    %662 = vmatprep.subr.mxu0 %v145
    %663 = vmatpush1.msra.mxu0 %v144
    %664 = vmatprep.subr.mxu0 %v147
    %665 = vmatpush1.msra.mxu0 %v146
    %666 = vmatprep.subr.mxu0 %v149
    %667 = vmatpush1.msra.mxu0 %v148
    %668 = vmatprep.subr.mxu0 %v151
    %669 = vmatpush1.msra.mxu0 %v150
    %670 = vmatprep.subr.mxu0 %v153
    %671 = vmatpush1.msra.mxu0 %v152
    %672 = vmatprep.subr.mxu0 0.0
    %673 = vmatpush1.msra.mxu0 0.0
    %674 = vmatprep.subr.mxu0 0.0
    %675 = vmatpush1.msra.mxu0 0.0
    %676 = vmatprep.subr.mxu0 0.0
    %677 = vmatpush1.msra.mxu0 0.0
    %678 = vmatprep.subr.mxu0 0.0
    %679 = vmatpush1.msra.mxu0 0.0
    %680 = vmatprep.subr.mxu0 0.0
    %681 = vmatpush1.msra.mxu0 0.0
    %682 = vmatprep.subr.mxu0 0.0
    %683 = vmatpush1.msra.mxu0 0.0
    %684 = vmatprep.subr.mxu0 0.0
    %685 = vmatpush1.msra.mxu0 0.0
    %686 = vmatprep.subr.mxu0 0.0
    %687 = vmatpush1.msra.mxu0 0.0
    %688 = vmatprep.subr.mxu0 0.0
    %689 = vmatpush1.msra.mxu0 0.0
    %690 = vmatprep.subr.mxu0 0.0
    %691 = vmatpush1.msra.mxu0 0.0
    %692 = vmatprep.subr.mxu0 0.0
    %693 = vmatpush1.msra.mxu0 0.0
    %694 = vmatprep.subr.mxu0 0.0
    %695 = vmatpush1.msra.mxu0 0.0
    %696 = vmatprep.subr.mxu0 0.0
    %697 = vmatpush1.msra.mxu0 0.0
    %698 = vmatprep.subr.mxu0 0.0
    %699 = vmatpush1.msra.mxu0 0.0
    %700 = vmatprep.subr.mxu0 0.0
    %701 = vmatpush1.msra.mxu0 0.0
    %702 = vmatprep.subr.mxu0 0.0
    %703 = vmatpush1.msra.mxu0 0.0
    %704 = vmatprep.subr.mxu0 0.0
    %705 = vmatpush1.msra.mxu0 0.0
    %706 = vmatprep.subr.mxu0 0.0
    %707 = vmatpush1.msra.mxu0 0.0
    %708 = vmatprep.subr.mxu0 0.0
    %709 = vmatpush1.msra.mxu0 0.0
    %710 = vmatprep.subr.mxu0 0.0
    %711 = vmatpush1.msra.mxu0 0.0
    %712 = vmatprep.subr.mxu0 0.0
    %713 = vmatpush1.msra.mxu0 0.0
    %714 = vmatprep.subr.mxu0 0.0
    %715 = vmatpush1.msra.mxu0 0.0
    %716 = vmatprep.subr.mxu0 0.0
    %717 = vmatpush1.msra.mxu0 0.0
    %718 = vmatprep.subr.mxu0 0.0
    %719 = vmatpush1.msra.mxu0 0.0
    %720 = vmatprep.mubr.f32.mxu0 0.0
    %721 = vmatmul.mubr.f32.gmra.mrb[0].mxu0 %v654
    %v722 = vpop.f32.mrb[0].mxu0
    %v723 = vadd.f32 0.0, %v722
    %v724 = vpop.f32.mrb[0].mxu0
    %v725 = vadd.f32 0.0, %v724
    %726 = vdwg.mxu0
    %v729 = vrot.slane %v723, 2
    %v730 = vrot.slane %v725, 2
    %v733 = vadd.f32 %v649, %v729
    %v734 = vadd.f32 %v650, %v730
    %v735 = vtanh.pop %v733
    %v736 = vtanh.pop %v734
    %v737 = vxor.u32 %v733, 2147483648
    %v738 = vxor.u32 %v734, 2147483648
    %v739 = vmul.f32 %v737, 1.442695
    %v740 = vpow.pop %v739
    %v741 = vmul.f32 %v738, 1.442695
    %v742 = vpow.pop %v741
    %v743 = vadd.f32 %v740, 1.0
    %v744 = vadd.f32 %v742, 1.0
    %v745 = vrcp.pop %v743
    %v746 = vmul.f32 1.0, %v745
    %v747 = vrcp.pop %v744
    %v748 = vmul.f32 1.0, %v747
    %v749 = vsel %vm106, %v735, %v746
    %v750 = vsel %vm107, %v736, %v748
    %v752 = vrot.slane %v628, 6
    %v754 = vmul.f32 %v749, %v752
    %v755 = vmul.f32 %v749, %v750
    %757 = vrot.lane.b32.xlu0 %v755, 64
    %v758 = vpop.permute.xlu0 %757
    %v760 = vadd.f32 %v754, %v758
    %v761 = vtanh.pop %v760
    %v762 = vmul.f32 %v750, %v761
    %764 = vrot.lane.b32.xlu0 %v762, 64
    %v765 = vpop.permute.xlu0 %764
    %vm767 = vcmask 261126
    %768 = vst.msk [vmem:[#allocation3] sm:$0xc0] %vm767, %v765
    %vm769 = vcmask 523526
    %770 = vst.msk [vmem:[#allocation3 + $0x2] sm:$0xc0] %vm769, %v765
    %v771 = vld [vmem:[#allocation2 + $0x10] sm:$0x3]
    %v772 = vld [vmem:[#allocation2 + $0x18] sm:$0x3]
    %v773 = vld [vmem:[#allocation2] sm:$0xc0]
    %v774 = vld [vmem:[#allocation2 + $0x8] sm:$0xc0]
    %v777 = vrot.slane %v773, 6
    %v778 = vrot.slane %v774, 6
    %v781 = vsel %vm132, %v771, %v777
    %v782 = vsel %vm133, %v772, %v778
    %v783 = vrot.slane %v762, 6
    %784 = vrot.lane.b32.xlu0 %v783, 64
    %v785 = vpop.permute.xlu0 %784
    %v786 = vsel %vm268, %v785, 0
    %788 = vmatprep.subr.mxu0 %v139
    %789 = vmatpush1.msra.mxu0 %v138
    %790 = vmatprep.subr.mxu0 %v141
    %791 = vmatpush1.msra.mxu0 %v140
    %792 = vmatprep.subr.mxu0 %v143
    %793 = vmatpush1.msra.mxu0 %v142
    %794 = vmatprep.subr.mxu0 %v145
    %795 = vmatpush1.msra.mxu0 %v144
    %796 = vmatprep.subr.mxu0 %v147
    %797 = vmatpush1.msra.mxu0 %v146
    %798 = vmatprep.subr.mxu0 %v149
    %799 = vmatpush1.msra.mxu0 %v148
    %800 = vmatprep.subr.mxu0 %v151
    %801 = vmatpush1.msra.mxu0 %v150
    %802 = vmatprep.subr.mxu0 %v153
    %803 = vmatpush1.msra.mxu0 %v152
    %804 = vmatprep.subr.mxu0 0.0
    %805 = vmatpush1.msra.mxu0 0.0
    %806 = vmatprep.subr.mxu0 0.0
    %807 = vmatpush1.msra.mxu0 0.0
    %808 = vmatprep.subr.mxu0 0.0
    %809 = vmatpush1.msra.mxu0 0.0
    %810 = vmatprep.subr.mxu0 0.0
    %811 = vmatpush1.msra.mxu0 0.0
    %812 = vmatprep.subr.mxu0 0.0
    %813 = vmatpush1.msra.mxu0 0.0
    %814 = vmatprep.subr.mxu0 0.0
    %815 = vmatpush1.msra.mxu0 0.0
    %816 = vmatprep.subr.mxu0 0.0
    %817 = vmatpush1.msra.mxu0 0.0
    %818 = vmatprep.subr.mxu0 0.0
    %819 = vmatpush1.msra.mxu0 0.0
    %820 = vmatprep.subr.mxu0 0.0
    %821 = vmatpush1.msra.mxu0 0.0
    %822 = vmatprep.subr.mxu0 0.0
    %823 = vmatpush1.msra.mxu0 0.0
    %824 = vmatprep.subr.mxu0 0.0
    %825 = vmatpush1.msra.mxu0 0.0
    %826 = vmatprep.subr.mxu0 0.0
    %827 = vmatpush1.msra.mxu0 0.0
    %828 = vmatprep.subr.mxu0 0.0
    %829 = vmatpush1.msra.mxu0 0.0
    %830 = vmatprep.subr.mxu0 0.0
    %831 = vmatpush1.msra.mxu0 0.0
    %832 = vmatprep.subr.mxu0 0.0
    %833 = vmatpush1.msra.mxu0 0.0
    %834 = vmatprep.subr.mxu0 0.0
    %835 = vmatpush1.msra.mxu0 0.0
    %836 = vmatprep.subr.mxu0 0.0
    %837 = vmatpush1.msra.mxu0 0.0
    %838 = vmatprep.subr.mxu0 0.0
    %839 = vmatpush1.msra.mxu0 0.0
    %840 = vmatprep.subr.mxu0 0.0
    %841 = vmatpush1.msra.mxu0 0.0
    %842 = vmatprep.subr.mxu0 0.0
    %843 = vmatpush1.msra.mxu0 0.0
    %844 = vmatprep.subr.mxu0 0.0
    %845 = vmatpush1.msra.mxu0 0.0
    %846 = vmatprep.subr.mxu0 0.0
    %847 = vmatpush1.msra.mxu0 0.0
    %848 = vmatprep.subr.mxu0 0.0
    %849 = vmatpush1.msra.mxu0 0.0
    %850 = vmatprep.subr.mxu0 0.0
    %851 = vmatpush1.msra.mxu0 0.0
    %852 = vmatprep.mubr.f32.mxu0 0.0
    %853 = vmatmul.mubr.f32.gmra.mrb[0].mxu0 %v786
    %v854 = vpop.f32.mrb[0].mxu0
    %v855 = vadd.f32 0.0, %v854
    %v856 = vpop.f32.mrb[0].mxu0
    %v857 = vadd.f32 0.0, %v856
    %858 = vdwg.mxu0
    %v859 = vadd.f32 %v781, %v855
    %v860 = vadd.f32 %v782, %v857
    %v861 = vtanh.pop %v859
    %v862 = vtanh.pop %v860
    %v863 = vxor.u32 %v859, 2147483648
    %v864 = vxor.u32 %v860, 2147483648
    %v865 = vmul.f32 %v863, 1.442695
    %v866 = vpow.pop %v865
    %v867 = vmul.f32 %v864, 1.442695
    %v868 = vpow.pop %v867
    %v869 = vadd.f32 %v866, 1.0
    %v870 = vadd.f32 %v868, 1.0
    %v871 = vrcp.pop %v869
    %v872 = vmul.f32 1.0, %v871
    %v873 = vrcp.pop %v870
    %v874 = vmul.f32 1.0, %v873
    %v875 = vsel %vm106, %v861, %v872
    %v876 = vsel %vm107, %v862, %v874
    %v878 = vrot.slane %v760, 6
    %v880 = vmul.f32 %v875, %v878
    %v881 = vmul.f32 %v875, %v876
    %883 = vrot.lane.b32.xlu0 %v881, 64
    %v884 = vpop.permute.xlu0 %883
    %v886 = vadd.f32 %v880, %v884
    %v887 = vtanh.pop %v886
    %v888 = vmul.f32 %v876, %v887
    %890 = vrot.lane.b32.xlu0 %v888, 64
    %v891 = vpop.permute.xlu0 %890
    %893 = vst.msk [vmem:[#allocation3 + $0x8] sm:$0x3] %vm374, %v891
    %894 = vst.msk [vmem:[#allocation3 + $0x6] sm:$0x3] %vm376, %v891
    %v895 = vld [vmem:[#allocation2 + $0x10] sm:$0xc]
    %v896 = vld [vmem:[#allocation2 + $0x18] sm:$0xc]
    %v897 = vld [vmem:[#allocation2] sm:$0x30]
    %v898 = vld [vmem:[#allocation2 + $0x8] sm:$0x30]
    %v901 = vrot.slane %v897, 2
    %v902 = vrot.slane %v898, 2
    %v905 = vsel %vm132, %v895, %v901
    %v906 = vsel %vm133, %v896, %v902
    %v907 = vsel %vm268, %v891, 0
    %909 = vmatprep.subr.mxu0 %v139
    %910 = vmatpush1.msra.mxu0 %v138
    %911 = vmatprep.subr.mxu0 %v141
    %912 = vmatpush1.msra.mxu0 %v140
    %913 = vmatprep.subr.mxu0 %v143
    %914 = vmatpush1.msra.mxu0 %v142
    %915 = vmatprep.subr.mxu0 %v145
    %916 = vmatpush1.msra.mxu0 %v144
    %917 = vmatprep.subr.mxu0 %v147
    %918 = vmatpush1.msra.mxu0 %v146
    %919 = vmatprep.subr.mxu0 %v149
    %920 = vmatpush1.msra.mxu0 %v148
    %921 = vmatprep.subr.mxu0 %v151
    %922 = vmatpush1.msra.mxu0 %v150
    %923 = vmatprep.subr.mxu0 %v153
    %924 = vmatpush1.msra.mxu0 %v152
    %925 = vmatprep.subr.mxu0 0.0
    %926 = vmatpush1.msra.mxu0 0.0
    %927 = vmatprep.subr.mxu0 0.0
    %928 = vmatpush1.msra.mxu0 0.0
    %929 = vmatprep.subr.mxu0 0.0
    %930 = vmatpush1.msra.mxu0 0.0
    %931 = vmatprep.subr.mxu0 0.0
    %932 = vmatpush1.msra.mxu0 0.0
    %933 = vmatprep.subr.mxu0 0.0
    %934 = vmatpush1.msra.mxu0 0.0
    %935 = vmatprep.subr.mxu0 0.0
    %936 = vmatpush1.msra.mxu0 0.0
    %937 = vmatprep.subr.mxu0 0.0
    %938 = vmatpush1.msra.mxu0 0.0
    %939 = vmatprep.subr.mxu0 0.0
    %940 = vmatpush1.msra.mxu0 0.0
    %941 = vmatprep.subr.mxu0 0.0
    %942 = vmatpush1.msra.mxu0 0.0
    %943 = vmatprep.subr.mxu0 0.0
    %944 = vmatpush1.msra.mxu0 0.0
    %945 = vmatprep.subr.mxu0 0.0
    %946 = vmatpush1.msra.mxu0 0.0
    %947 = vmatprep.subr.mxu0 0.0
    %948 = vmatpush1.msra.mxu0 0.0
    %949 = vmatprep.subr.mxu0 0.0
    %950 = vmatpush1.msra.mxu0 0.0
    %951 = vmatprep.subr.mxu0 0.0
    %952 = vmatpush1.msra.mxu0 0.0
    %953 = vmatprep.subr.mxu0 0.0
    %954 = vmatpush1.msra.mxu0 0.0
    %955 = vmatprep.subr.mxu0 0.0
    %956 = vmatpush1.msra.mxu0 0.0
    %957 = vmatprep.subr.mxu0 0.0
    %958 = vmatpush1.msra.mxu0 0.0
    %959 = vmatprep.subr.mxu0 0.0
    %960 = vmatpush1.msra.mxu0 0.0
    %961 = vmatprep.subr.mxu0 0.0
    %962 = vmatpush1.msra.mxu0 0.0
    %963 = vmatprep.subr.mxu0 0.0
    %964 = vmatpush1.msra.mxu0 0.0
    %965 = vmatprep.subr.mxu0 0.0
    %966 = vmatpush1.msra.mxu0 0.0
    %967 = vmatprep.subr.mxu0 0.0
    %968 = vmatpush1.msra.mxu0 0.0
    %969 = vmatprep.subr.mxu0 0.0
    %970 = vmatpush1.msra.mxu0 0.0
    %971 = vmatprep.subr.mxu0 0.0
    %972 = vmatpush1.msra.mxu0 0.0
    %973 = vmatprep.mubr.f32.mxu0 0.0
    %974 = vmatmul.mubr.f32.gmra.mrb[0].mxu0 %v907
    %v975 = vpop.f32.mrb[0].mxu0
    %v976 = vadd.f32 0.0, %v975
    %v977 = vpop.f32.mrb[0].mxu0
    %v978 = vadd.f32 0.0, %v977
    %979 = vdwg.mxu0
    %v982 = vrot.slane %v976, 6
    %v983 = vrot.slane %v978, 6
    %v986 = vadd.f32 %v905, %v982
    %v987 = vadd.f32 %v906, %v983
    %v988 = vtanh.pop %v986
    %v989 = vtanh.pop %v987
    %v990 = vxor.u32 %v986, 2147483648
    %v991 = vxor.u32 %v987, 2147483648
    %v992 = vmul.f32 %v990, 1.442695
    %v993 = vpow.pop %v992
    %v994 = vmul.f32 %v991, 1.442695
    %v995 = vpow.pop %v994
    %v996 = vadd.f32 %v993, 1.0
    %v997 = vadd.f32 %v995, 1.0
    %v998 = vrcp.pop %v996
    %v999 = vmul.f32 1.0, %v998
    %v1000 = vrcp.pop %v997
    %v1001 = vmul.f32 1.0, %v1000
    %v1002 = vsel %vm106, %v988, %v999
    %v1003 = vsel %vm107, %v989, %v1001
    %v1005 = vrot.slane %v886, 6
    %v1007 = vmul.f32 %v1002, %v1005
    %v1008 = vmul.f32 %v1002, %v1003
    %1010 = vrot.lane.b32.xlu0 %v1008, 64
    %v1011 = vpop.permute.xlu0 %1010
    %v1013 = vadd.f32 %v1007, %v1011
    %v1014 = vtanh.pop %v1013
    %v1015 = vmul.f32 %v1003, %v1014
    %1017 = vrot.lane.b32.xlu0 %v1015, 64
    %v1018 = vpop.permute.xlu0 %1017
    %1020 = vst.msk [vmem:[#allocation3 + $0x8] sm:$0xc] %vm503, %v1018
    %1021 = vst.msk [vmem:[#allocation3 + $0x2] sm:$0xc] %vm505, %v1018
    %v1022 = vld [vmem:[#allocation2 + $0x10] sm:$0x30]
    %v1023 = vld [vmem:[#allocation2 + $0x18] sm:$0x30]
    %v1024 = vld [vmem:[#allocation2] sm:$0xc]
    %v1025 = vld [vmem:[#allocation2 + $0x8] sm:$0xc]
    %v1028 = vrot.slane %v1024, 6
    %v1029 = vrot.slane %v1025, 6
    %v1032 = vsel %vm132, %v1022, %v1028
    %v1033 = vsel %vm133, %v1023, %v1029
    %v1034 = vrot.slane %v1015, 2
    %1035 = vrot.lane.b32.xlu0 %v1034, 64
    %v1036 = vpop.permute.xlu0 %1035
    %v1037 = vsel %vm268, %v1036, 0
    %1039 = vmatprep.subr.mxu0 %v139
    %1040 = vmatpush1.msra.mxu0 %v138
    %1041 = vmatprep.subr.mxu0 %v141
    %1042 = vmatpush1.msra.mxu0 %v140
    %1043 = vmatprep.subr.mxu0 %v143
    %1044 = vmatpush1.msra.mxu0 %v142
    %1045 = vmatprep.subr.mxu0 %v145
    %1046 = vmatpush1.msra.mxu0 %v144
    %1047 = vmatprep.subr.mxu0 %v147
    %1048 = vmatpush1.msra.mxu0 %v146
    %1049 = vmatprep.subr.mxu0 %v149
    %1050 = vmatpush1.msra.mxu0 %v148
    %1051 = vmatprep.subr.mxu0 %v151
    %1052 = vmatpush1.msra.mxu0 %v150
    %1053 = vmatprep.subr.mxu0 %v153
    %1054 = vmatpush1.msra.mxu0 %v152
    %1055 = vmatprep.subr.mxu0 0.0
    %1056 = vmatpush1.msra.mxu0 0.0
    %1057 = vmatprep.subr.mxu0 0.0
    %1058 = vmatpush1.msra.mxu0 0.0
    %1059 = vmatprep.subr.mxu0 0.0
    %1060 = vmatpush1.msra.mxu0 0.0
    %1061 = vmatprep.subr.mxu0 0.0
    %1062 = vmatpush1.msra.mxu0 0.0
    %1063 = vmatprep.subr.mxu0 0.0
    %1064 = vmatpush1.msra.mxu0 0.0
    %1065 = vmatprep.subr.mxu0 0.0
    %1066 = vmatpush1.msra.mxu0 0.0
    %1067 = vmatprep.subr.mxu0 0.0
    %1068 = vmatpush1.msra.mxu0 0.0
    %1069 = vmatprep.subr.mxu0 0.0
    %1070 = vmatpush1.msra.mxu0 0.0
    %1071 = vmatprep.subr.mxu0 0.0
    %1072 = vmatpush1.msra.mxu0 0.0
    %1073 = vmatprep.subr.mxu0 0.0
    %1074 = vmatpush1.msra.mxu0 0.0
    %1075 = vmatprep.subr.mxu0 0.0
    %1076 = vmatpush1.msra.mxu0 0.0
    %1077 = vmatprep.subr.mxu0 0.0
    %1078 = vmatpush1.msra.mxu0 0.0
    %1079 = vmatprep.subr.mxu0 0.0
    %1080 = vmatpush1.msra.mxu0 0.0
    %1081 = vmatprep.subr.mxu0 0.0
    %1082 = vmatpush1.msra.mxu0 0.0
    %1083 = vmatprep.subr.mxu0 0.0
    %1084 = vmatpush1.msra.mxu0 0.0
    %1085 = vmatprep.subr.mxu0 0.0
    %1086 = vmatpush1.msra.mxu0 0.0
    %1087 = vmatprep.subr.mxu0 0.0
    %1088 = vmatpush1.msra.mxu0 0.0
    %1089 = vmatprep.subr.mxu0 0.0
    %1090 = vmatpush1.msra.mxu0 0.0
    %1091 = vmatprep.subr.mxu0 0.0
    %1092 = vmatpush1.msra.mxu0 0.0
    %1093 = vmatprep.subr.mxu0 0.0
    %1094 = vmatpush1.msra.mxu0 0.0
    %1095 = vmatprep.subr.mxu0 0.0
    %1096 = vmatpush1.msra.mxu0 0.0
    %1097 = vmatprep.subr.mxu0 0.0
    %1098 = vmatpush1.msra.mxu0 0.0
    %1099 = vmatprep.subr.mxu0 0.0
    %1100 = vmatpush1.msra.mxu0 0.0
    %1101 = vmatprep.subr.mxu0 0.0
    %1102 = vmatpush1.msra.mxu0 0.0
    %1103 = vmatprep.mubr.f32.mxu0 0.0
    %1104 = vmatmul.mubr.f32.gmra.mrb[0].mxu0 %v1037
    %v1105 = vpop.f32.mrb[0].mxu0
    %v1106 = vadd.f32 0.0, %v1105
    %v1107 = vpop.f32.mrb[0].mxu0
    %v1108 = vadd.f32 0.0, %v1107
    %1109 = vdwg.mxu0
    %v1112 = vrot.slane %v1106, 4
    %v1113 = vrot.slane %v1108, 4
    %v1116 = vadd.f32 %v1032, %v1112
    %v1117 = vadd.f32 %v1033, %v1113
    %v1118 = vtanh.pop %v1116
    %v1119 = vtanh.pop %v1117
    %v1120 = vxor.u32 %v1116, 2147483648
    %v1121 = vxor.u32 %v1117, 2147483648
    %v1122 = vmul.f32 %v1120, 1.442695
    %v1123 = vpow.pop %v1122
    %v1124 = vmul.f32 %v1121, 1.442695
    %v1125 = vpow.pop %v1124
    %v1126 = vadd.f32 %v1123, 1.0
    %v1127 = vadd.f32 %v1125, 1.0
    %v1128 = vrcp.pop %v1126
    %v1129 = vmul.f32 1.0, %v1128
    %v1130 = vrcp.pop %v1127
    %v1131 = vmul.f32 1.0, %v1130
    %v1132 = vsel %vm106, %v1118, %v1129
    %v1133 = vsel %vm107, %v1119, %v1131
    %v1135 = vrot.slane %v1013, 6
    %v1137 = vmul.f32 %v1132, %v1135
    %v1138 = vmul.f32 %v1132, %v1133
    %1140 = vrot.lane.b32.xlu0 %v1138, 64
    %v1141 = vpop.permute.xlu0 %1140
    %v1143 = vadd.f32 %v1137, %v1141
    %v1144 = vtanh.pop %v1143
    %v1145 = vmul.f32 %v1133, %v1144
    %1147 = vrot.lane.b32.xlu0 %v1145, 64
    %v1148 = vpop.permute.xlu0 %1147
    %1150 = vst.msk [vmem:[#allocation3 + $0x8] sm:$0x30] %vm635, %v1148
    %1151 = vst.msk [vmem:[#allocation3 - $0x2] sm:$0x30] %vm637, %v1148
    %v1152 = vld [vmem:[#allocation2 + $0x10] sm:$0xc0]
    %v1153 = vld [vmem:[#allocation2 + $0x18] sm:$0xc0]
    %v1154 = vld [vmem:[#allocation2] sm:$0x3]
    %v1155 = vld [vmem:[#allocation2 + $0x8] sm:$0x3]
    %v1158 = vrot.slane %v1154, 2
    %v1159 = vrot.slane %v1155, 2
    %v1162 = vsel %vm132, %v1152, %v1158
    %v1163 = vsel %vm133, %v1153, %v1159
    %v1164 = vrot.slane %v1145, 4
    %1165 = vrot.lane.b32.xlu0 %v1164, 64
    %v1166 = vpop.permute.xlu0 %1165
    %v1167 = vsel %vm268, %v1166, 0
    %1169 = vmatprep.subr.mxu0 %v139
    %1170 = vmatpush1.msra.mxu0 %v138
    %1171 = vmatprep.subr.mxu0 %v141
    %1172 = vmatpush1.msra.mxu0 %v140
    %1173 = vmatprep.subr.mxu0 %v143
    %1174 = vmatpush1.msra.mxu0 %v142
    %1175 = vmatprep.subr.mxu0 %v145
    %1176 = vmatpush1.msra.mxu0 %v144
    %1177 = vmatprep.subr.mxu0 %v147
    %1178 = vmatpush1.msra.mxu0 %v146
    %1179 = vmatprep.subr.mxu0 %v149
    %1180 = vmatpush1.msra.mxu0 %v148
    %1181 = vmatprep.subr.mxu0 %v151
    %1182 = vmatpush1.msra.mxu0 %v150
    %1183 = vmatprep.subr.mxu0 %v153
    %1184 = vmatpush1.msra.mxu0 %v152
    %1185 = vmatprep.subr.mxu0 0.0
    %1186 = vmatpush1.msra.mxu0 0.0
    %1187 = vmatprep.subr.mxu0 0.0
    %1188 = vmatpush1.msra.mxu0 0.0
    %1189 = vmatprep.subr.mxu0 0.0
    %1190 = vmatpush1.msra.mxu0 0.0
    %1191 = vmatprep.subr.mxu0 0.0
    %1192 = vmatpush1.msra.mxu0 0.0
    %1193 = vmatprep.subr.mxu0 0.0
    %1194 = vmatpush1.msra.mxu0 0.0
    %1195 = vmatprep.subr.mxu0 0.0
    %1196 = vmatpush1.msra.mxu0 0.0
    %1197 = vmatprep.subr.mxu0 0.0
    %1198 = vmatpush1.msra.mxu0 0.0
    %1199 = vmatprep.subr.mxu0 0.0
    %1200 = vmatpush1.msra.mxu0 0.0
    %1201 = vmatprep.subr.mxu0 0.0
    %1202 = vmatpush1.msra.mxu0 0.0
    %1203 = vmatprep.subr.mxu0 0.0
    %1204 = vmatpush1.msra.mxu0 0.0
    %1205 = vmatprep.subr.mxu0 0.0
    %1206 = vmatpush1.msra.mxu0 0.0
    %1207 = vmatprep.subr.mxu0 0.0
    %1208 = vmatpush1.msra.mxu0 0.0
    %1209 = vmatprep.subr.mxu0 0.0
    %1210 = vmatpush1.msra.mxu0 0.0
    %1211 = vmatprep.subr.mxu0 0.0
    %1212 = vmatpush1.msra.mxu0 0.0
    %1213 = vmatprep.subr.mxu0 0.0
    %1214 = vmatpush1.msra.mxu0 0.0
    %1215 = vmatprep.subr.mxu0 0.0
    %1216 = vmatpush1.msra.mxu0 0.0
    %1217 = vmatprep.subr.mxu0 0.0
    %1218 = vmatpush1.msra.mxu0 0.0
    %1219 = vmatprep.subr.mxu0 0.0
    %1220 = vmatpush1.msra.mxu0 0.0
    %1221 = vmatprep.subr.mxu0 0.0
    %1222 = vmatpush1.msra.mxu0 0.0
    %1223 = vmatprep.subr.mxu0 0.0
    %1224 = vmatpush1.msra.mxu0 0.0
    %1225 = vmatprep.subr.mxu0 0.0
    %1226 = vmatpush1.msra.mxu0 0.0
    %1227 = vmatprep.subr.mxu0 0.0
    %1228 = vmatpush1.msra.mxu0 0.0
    %1229 = vmatprep.subr.mxu0 0.0
    %1230 = vmatpush1.msra.mxu0 0.0
    %1231 = vmatprep.subr.mxu0 0.0
    %1232 = vmatpush1.msra.mxu0 0.0
    %1233 = vmatprep.mubr.f32.mxu0 0.0
    %1234 = vmatmul.mubr.f32.gmra.mrb[0].mxu0 %v1167
    %v1235 = vpop.f32.mrb[0].mxu0
    %v1236 = vadd.f32 0.0, %v1235
    %v1237 = vpop.f32.mrb[0].mxu0
    %v1238 = vadd.f32 0.0, %v1237
    %1239 = vdwg.mxu0
    %v1242 = vrot.slane %v1236, 2
    %v1243 = vrot.slane %v1238, 2
    %v1246 = vadd.f32 %v1162, %v1242
    %v1247 = vadd.f32 %v1163, %v1243
    %v1248 = vtanh.pop %v1246
    %v1249 = vtanh.pop %v1247
    %v1250 = vxor.u32 %v1246, 2147483648
    %v1251 = vxor.u32 %v1247, 2147483648
    %v1252 = vmul.f32 %v1250, 1.442695
    %v1253 = vpow.pop %v1252
    %v1254 = vmul.f32 %v1251, 1.442695
    %v1255 = vpow.pop %v1254
    %v1256 = vadd.f32 %v1253, 1.0
    %v1257 = vadd.f32 %v1255, 1.0
    %v1258 = vrcp.pop %v1256
    %v1259 = vmul.f32 1.0, %v1258
    %v1260 = vrcp.pop %v1257
    %v1261 = vmul.f32 1.0, %v1260
    %v1262 = vsel %vm106, %v1248, %v1259
    %v1263 = vsel %vm107, %v1249, %v1261
    %v1265 = vrot.slane %v1143, 6
    %v1267 = vmul.f32 %v1262, %v1265
    %v1268 = vmul.f32 %v1262, %v1263
    %1270 = vrot.lane.b32.xlu0 %v1268, 64
    %v1271 = vpop.permute.xlu0 %1270
    %v1273 = vadd.f32 %v1267, %v1271
    %v1274 = vtanh.pop %v1273
    %v1275 = vmul.f32 %v1263, %v1274
    %1277 = vrot.lane.b32.xlu0 %v1275, 64
    %v1278 = vpop.permute.xlu0 %1277
    %1280 = vst.msk [vmem:[#allocation3 + $0x8] sm:$0xc0] %vm767, %v1278
    %1281 = vst.msk [vmem:[#allocation3 - $0x6] sm:$0xc0] %vm769, %v1278
    %vm1282 = vcmask 523270
    %1283 = vst.msk [vmem:[#allocation14 - $0x6] sm:$0xc0] %vm1282, %v1278
    %1285 = vrot.lane.b32.xlu0 %v1273, 64
    %v1286 = vpop.permute.xlu0 %1285
    %1288 = vst.msk [vmem:[#allocation16 - $0x6] sm:$0xc0] %vm1282, %v1286
    %v1289 = vld [vmem:[#allocation10] sm:$0xff]
    %v1290 = vld [vmem:[#allocation10 + $0x8] sm:$0xff]
    %v1291 = vld [vmem:[#allocation10 + $0x10] sm:$0xff]
    %v1292 = vld [vmem:[#allocation10 + $0x18] sm:$0xff]
    %v1293 = vld [vmem:[#allocation10 + $0x20] sm:$0xff]
    %v1294 = vld [vmem:[#allocation10 + $0x28] sm:$0xff]
    %v1295 = vld [vmem:[#allocation10 + $0x30] sm:$0xff]
    %v1296 = vld [vmem:[#allocation10 + $0x38] sm:$0xff]
    %v1297 = vld [vmem:[#allocation10 + $0x40] sm:$0xff]
    %v1298 = vld [vmem:[#allocation10 + $0x48] sm:$0xff]
    %v1299 = vld [vmem:[#allocation10 + $0x50] sm:$0xff]
    %v1300 = vld [vmem:[#allocation10 + $0x58] sm:$0xff]
    %v1301 = vld [vmem:[#allocation10 + $0x60] sm:$0xff]
    %v1302 = vld [vmem:[#allocation10 + $0x68] sm:$0xff]
    %v1303 = vld [vmem:[#allocation10 + $0x70] sm:$0xff]
    %v1304 = vld [vmem:[#allocation10 + $0x78] sm:$0xff]
    %v1305 = vld [vmem:[#allocation12] sm:$0xff]
    %v1306 = vld [vmem:[#allocation12 + $0x8] sm:$0xff]
    %v1307 = vld [vmem:[#allocation12 + $0x10] sm:$0xff]
    %v1308 = vld [vmem:[#allocation12 + $0x18] sm:$0xff]
    %v1309 = vld [vmem:[#allocation12 + $0x20] sm:$0xff]
    %v1310 = vld [vmem:[#allocation12 + $0x28] sm:$0xff]
    %v1311 = vld [vmem:[#allocation12 + $0x30] sm:$0xff]
    %v1312 = vld [vmem:[#allocation12 + $0x38] sm:$0xff]
    %v1313 = vld [vmem:[#allocation12 + $0x40] sm:$0xff]
    %v1314 = vld [vmem:[#allocation12 + $0x48] sm:$0xff]
    %v1315 = vld [vmem:[#allocation12 + $0x50] sm:$0xff]
    %v1316 = vld [vmem:[#allocation12 + $0x58] sm:$0xff]
    %v1317 = vld [vmem:[#allocation12 + $0x60] sm:$0xff]
    %v1318 = vld [vmem:[#allocation12 + $0x68] sm:$0xff]
    %v1319 = vld [vmem:[#allocation12 + $0x70] sm:$0xff]
    %v1320 = vld [vmem:[#allocation12 + $0x78] sm:$0xff]
    %v1321 = vld [vmem:[%s6] sm:$0x3]
    %v1322 = vld [vmem:[#allocation3] sm:$0xff]
    %v1323 = vld [vmem:[#allocation3 + $0x8] sm:$0xff]
    %v1325 = vlaneseq
    %v1326 = vshrl.u32 %v1325, 7
    %v1327 = vsub.s32 0, %v1326
    %v1328 = vrot.slane %v1321, %v1327
    %v1329 = vlaneseq
    %v1330 = vshrl.u32 %v1329, 7
    %v1331 = vsub.s32 1, %v1330
    %v1332 = vrot.slane %v1321, %v1331
    %v1336 = vsel %vm268, %v1322, 0
    %v1339 = vsel %vm268, %v1323, 0
    %1341 = vmatprep.subr.mxu0 %v1290
    %1342 = vmatpush1.msra.mxu0 %v1289
    %1343 = vmatprep.subr.mxu0 %v1292
    %1344 = vmatpush1.msra.mxu0 %v1291
    %1345 = vmatprep.subr.mxu0 %v1294
    %1346 = vmatpush1.msra.mxu0 %v1293
    %1347 = vmatprep.subr.mxu0 %v1296
    %1348 = vmatpush1.msra.mxu0 %v1295
    %1349 = vmatprep.subr.mxu0 %v1298
    %1350 = vmatpush1.msra.mxu0 %v1297
    %1351 = vmatprep.subr.mxu0 %v1300
    %1352 = vmatpush1.msra.mxu0 %v1299
    %1353 = vmatprep.subr.mxu0 %v1302
    %1354 = vmatpush1.msra.mxu0 %v1301
    %1355 = vmatprep.subr.mxu0 %v1304
    %1356 = vmatpush1.msra.mxu0 %v1303
    %1357 = vmatprep.subr.mxu0 0.0
    %1358 = vmatpush1.msra.mxu0 0.0
    %1359 = vmatprep.subr.mxu0 0.0
    %1360 = vmatpush1.msra.mxu0 0.0
    %1361 = vmatprep.subr.mxu0 0.0
    %1362 = vmatpush1.msra.mxu0 0.0
    %1363 = vmatprep.subr.mxu0 0.0
    %1364 = vmatpush1.msra.mxu0 0.0
    %1365 = vmatprep.subr.mxu0 0.0
    %1366 = vmatpush1.msra.mxu0 0.0
    %1367 = vmatprep.subr.mxu0 0.0
    %1368 = vmatpush1.msra.mxu0 0.0
    %1369 = vmatprep.subr.mxu0 0.0
    %1370 = vmatpush1.msra.mxu0 0.0
    %1371 = vmatprep.subr.mxu0 0.0
    %1372 = vmatpush1.msra.mxu0 0.0
    %1373 = vmatprep.subr.mxu0 0.0
    %1374 = vmatpush1.msra.mxu0 0.0
    %1375 = vmatprep.subr.mxu0 0.0
    %1376 = vmatpush1.msra.mxu0 0.0
    %1377 = vmatprep.subr.mxu0 0.0
    %1378 = vmatpush1.msra.mxu0 0.0
    %1379 = vmatprep.subr.mxu0 0.0
    %1380 = vmatpush1.msra.mxu0 0.0
    %1381 = vmatprep.subr.mxu0 0.0
    %1382 = vmatpush1.msra.mxu0 0.0
    %1383 = vmatprep.subr.mxu0 0.0
    %1384 = vmatpush1.msra.mxu0 0.0
    %1385 = vmatprep.subr.mxu0 0.0
    %1386 = vmatpush1.msra.mxu0 0.0
    %1387 = vmatprep.subr.mxu0 0.0
    %1388 = vmatpush1.msra.mxu0 0.0
    %1389 = vmatprep.subr.mxu0 0.0
    %1390 = vmatpush1.msra.mxu0 0.0
    %1391 = vmatprep.subr.mxu0 0.0
    %1392 = vmatpush1.msra.mxu0 0.0
    %1393 = vmatprep.subr.mxu0 0.0
    %1394 = vmatpush1.msra.mxu0 0.0
    %1395 = vmatprep.subr.mxu0 0.0
    %1396 = vmatpush1.msra.mxu0 0.0
    %1397 = vmatprep.subr.mxu0 0.0
    %1398 = vmatpush1.msra.mxu0 0.0
    %1399 = vmatprep.subr.mxu0 0.0
    %1400 = vmatpush1.msra.mxu0 0.0
    %1401 = vmatprep.subr.mxu0 0.0
    %1402 = vmatpush1.msra.mxu0 0.0
    %1403 = vmatprep.subr.mxu0 0.0
    %1404 = vmatpush1.msra.mxu0 0.0
    %1405 = vmatprep.mubr.f32.mxu0 0.0
    %1406 = vmatmul.mubr.f32.gmra.mrb[0].mxu0 %v1336
    %v1407 = vpop.f32.mrb[0].mxu0
    %v1408 = vadd.f32 %v1328, %v1407
    %v1409 = vpop.f32.mrb[0].mxu0
    %v1410 = vadd.f32 %v1332, %v1409
    %1411 = vmatprep.mubr.f32.mxu0 0.0
    %1412 = vmatmul.mubr.f32.gmra.mrb[0].mxu0 %v1339
    %v1413 = vpop.f32.mrb[0].mxu0
    %v1414 = vadd.f32 %v1328, %v1413
    %v1415 = vpop.f32.mrb[0].mxu0
    %v1416 = vadd.f32 %v1332, %v1415
    %1417 = vdwg.mxu0
    %1418 = vst [vmem:[#allocation2] sm:$0xff] %v1408
    %1419 = vst [vmem:[#allocation2 + $0x8] sm:$0xff] %v1410
    %1420 = vst [vmem:[#allocation2 + $0x10] sm:$0xff] %v1414
    %1421 = vst [vmem:[#allocation2 + $0x18] sm:$0xff] %v1416
    %v1422 = vld [vmem:[#allocation2] sm:$0x3]
    %v1423 = vld [vmem:[#allocation2 + $0x8] sm:$0x3]
    %v1424 = vld [vmem:[#allocation2 + $0x10] sm:$0xc0]
    %v1425 = vld [vmem:[#allocation2 + $0x18] sm:$0xc0]
    %v1428 = vrot.slane %v1424, 6
    %v1429 = vrot.slane %v1425, 6
    %v1432 = vsel %vm132, %v1422, %v1428
    %v1433 = vsel %vm133, %v1423, %v1429
    %1434 = vmatprep.subr.mxu0 %v1306
    %1435 = vmatpush1.msra.mxu0 %v1305
    %1436 = vmatprep.subr.mxu0 %v1308
    %1437 = vmatpush1.msra.mxu0 %v1307
    %1438 = vmatprep.subr.mxu0 %v1310
    %1439 = vmatpush1.msra.mxu0 %v1309
    %1440 = vmatprep.subr.mxu0 %v1312
    %1441 = vmatpush1.msra.mxu0 %v1311
    %1442 = vmatprep.subr.mxu0 %v1314
    %1443 = vmatpush1.msra.mxu0 %v1313
    %1444 = vmatprep.subr.mxu0 %v1316
    %1445 = vmatpush1.msra.mxu0 %v1315
    %1446 = vmatprep.subr.mxu0 %v1318
    %1447 = vmatpush1.msra.mxu0 %v1317
    %1448 = vmatprep.subr.mxu0 %v1320
    %1449 = vmatpush1.msra.mxu0 %v1319
    %1450 = vmatprep.subr.mxu0 0.0
    %1451 = vmatpush1.msra.mxu0 0.0
    %1452 = vmatprep.subr.mxu0 0.0
    %1453 = vmatpush1.msra.mxu0 0.0
    %1454 = vmatprep.subr.mxu0 0.0
    %1455 = vmatpush1.msra.mxu0 0.0
    %1456 = vmatprep.subr.mxu0 0.0
    %1457 = vmatpush1.msra.mxu0 0.0
    %1458 = vmatprep.subr.mxu0 0.0
    %1459 = vmatpush1.msra.mxu0 0.0
    %1460 = vmatprep.subr.mxu0 0.0
    %1461 = vmatpush1.msra.mxu0 0.0
    %1462 = vmatprep.subr.mxu0 0.0
    %1463 = vmatpush1.msra.mxu0 0.0
    %1464 = vmatprep.subr.mxu0 0.0
    %1465 = vmatpush1.msra.mxu0 0.0
    %1466 = vmatprep.subr.mxu0 0.0
    %1467 = vmatpush1.msra.mxu0 0.0
    %1468 = vmatprep.subr.mxu0 0.0
    %1469 = vmatpush1.msra.mxu0 0.0
    %1470 = vmatprep.subr.mxu0 0.0
    %1471 = vmatpush1.msra.mxu0 0.0
    %1472 = vmatprep.subr.mxu0 0.0
    %1473 = vmatpush1.msra.mxu0 0.0
    %1474 = vmatprep.subr.mxu0 0.0
    %1475 = vmatpush1.msra.mxu0 0.0
    %1476 = vmatprep.subr.mxu0 0.0
    %1477 = vmatpush1.msra.mxu0 0.0
    %1478 = vmatprep.subr.mxu0 0.0
    %1479 = vmatpush1.msra.mxu0 0.0
    %1480 = vmatprep.subr.mxu0 0.0
    %1481 = vmatpush1.msra.mxu0 0.0
    %1482 = vmatprep.subr.mxu0 0.0
    %1483 = vmatpush1.msra.mxu0 0.0
    %1484 = vmatprep.subr.mxu0 0.0
    %1485 = vmatpush1.msra.mxu0 0.0
    %1486 = vmatprep.subr.mxu0 0.0
    %1487 = vmatpush1.msra.mxu0 0.0
    %1488 = vmatprep.subr.mxu0 0.0
    %1489 = vmatpush1.msra.mxu0 0.0
    %1490 = vmatprep.subr.mxu0 0.0
    %1491 = vmatpush1.msra.mxu0 0.0
    %1492 = vmatprep.subr.mxu0 0.0
    %1493 = vmatpush1.msra.mxu0 0.0
    %1494 = vmatprep.subr.mxu0 0.0
    %1495 = vmatpush1.msra.mxu0 0.0
    %1496 = vmatprep.subr.mxu0 0.0
    %1497 = vmatpush1.msra.mxu0 0.0
    %1498 = vmatprep.mubr.f32.mxu0 0.0
    %1499 = vmatmul.mubr.f32.gmra.mrb[0].mxu0 %v270
    %v1500 = vpop.f32.mrb[0].mxu0
    %v1501 = vadd.f32 0.0, %v1500
    %v1502 = vpop.f32.mrb[0].mxu0
    %v1503 = vadd.f32 0.0, %v1502
    %1504 = vdwg.mxu0
    %v1505 = vadd.f32 %v1432, %v1501
    %v1506 = vadd.f32 %v1433, %v1503
    %v1507 = vtanh.pop %v1505
    %v1508 = vtanh.pop %v1506
    %v1509 = vxor.u32 %v1505, 2147483648
    %v1510 = vxor.u32 %v1506, 2147483648
    %v1511 = vmul.f32 %v1509, 1.442695
    %v1512 = vpow.pop %v1511
    %v1513 = vmul.f32 %v1510, 1.442695
    %v1514 = vpow.pop %v1513
    %v1515 = vadd.f32 %v1512, 1.0
    %v1516 = vadd.f32 %v1514, 1.0
    %v1517 = vrcp.pop %v1515
    %v1518 = vmul.f32 1.0, %v1517
    %v1519 = vrcp.pop %v1516
    %v1520 = vmul.f32 1.0, %v1519
    %v1521 = vsel %vm106, %v1507, %v1518
    %v1522 = vsel %vm107, %v1508, %v1520
    %v1523 = vmul.f32 %v1521, 0.0
    %v1524 = vmul.f32 %v1521, %v1522
    %1526 = vrot.lane.b32.xlu0 %v1524, 64
    %v1527 = vpop.permute.xlu0 %1526
    %v1529 = vadd.f32 %v1523, %v1527
    %v1530 = vtanh.pop %v1529
    %v1531 = vmul.f32 %v1522, %v1530
    %1533 = vrot.lane.b32.xlu0 %v1531, 64
    %v1534 = vpop.permute.xlu0 %1533
    %1536 = vst.msk [vmem:[#allocation13] sm:$0x3] %vm374, %v1534
    %1537 = vst.msk [vmem:[#allocation13 + $0xe] sm:$0x3] %vm376, %v1534
    %v1538 = vld [vmem:[#allocation2] sm:$0xc]
    %v1539 = vld [vmem:[#allocation2 + $0x8] sm:$0xc]
    %v1540 = vld [vmem:[#allocation2 + $0x10] sm:$0x30]
    %v1541 = vld [vmem:[#allocation2 + $0x18] sm:$0x30]
    %v1544 = vrot.slane %v1540, 2
    %v1545 = vrot.slane %v1541, 2
    %v1548 = vsel %vm132, %v1538, %v1544
    %v1549 = vsel %vm133, %v1539, %v1545
    %v1550 = vsel %vm268, %v1534, 0
    %1552 = vmatprep.subr.mxu0 %v1306
    %1553 = vmatpush1.msra.mxu0 %v1305
    %1554 = vmatprep.subr.mxu0 %v1308
    %1555 = vmatpush1.msra.mxu0 %v1307
    %1556 = vmatprep.subr.mxu0 %v1310
    %1557 = vmatpush1.msra.mxu0 %v1309
    %1558 = vmatprep.subr.mxu0 %v1312
    %1559 = vmatpush1.msra.mxu0 %v1311
    %1560 = vmatprep.subr.mxu0 %v1314
    %1561 = vmatpush1.msra.mxu0 %v1313
    %1562 = vmatprep.subr.mxu0 %v1316
    %1563 = vmatpush1.msra.mxu0 %v1315
    %1564 = vmatprep.subr.mxu0 %v1318
    %1565 = vmatpush1.msra.mxu0 %v1317
    %1566 = vmatprep.subr.mxu0 %v1320
    %1567 = vmatpush1.msra.mxu0 %v1319
    %1568 = vmatprep.subr.mxu0 0.0
    %1569 = vmatpush1.msra.mxu0 0.0
    %1570 = vmatprep.subr.mxu0 0.0
    %1571 = vmatpush1.msra.mxu0 0.0
    %1572 = vmatprep.subr.mxu0 0.0
    %1573 = vmatpush1.msra.mxu0 0.0
    %1574 = vmatprep.subr.mxu0 0.0
    %1575 = vmatpush1.msra.mxu0 0.0
    %1576 = vmatprep.subr.mxu0 0.0
    %1577 = vmatpush1.msra.mxu0 0.0
    %1578 = vmatprep.subr.mxu0 0.0
    %1579 = vmatpush1.msra.mxu0 0.0
    %1580 = vmatprep.subr.mxu0 0.0
    %1581 = vmatpush1.msra.mxu0 0.0
    %1582 = vmatprep.subr.mxu0 0.0
    %1583 = vmatpush1.msra.mxu0 0.0
    %1584 = vmatprep.subr.mxu0 0.0
    %1585 = vmatpush1.msra.mxu0 0.0
    %1586 = vmatprep.subr.mxu0 0.0
    %1587 = vmatpush1.msra.mxu0 0.0
    %1588 = vmatprep.subr.mxu0 0.0
    %1589 = vmatpush1.msra.mxu0 0.0
    %1590 = vmatprep.subr.mxu0 0.0
    %1591 = vmatpush1.msra.mxu0 0.0
    %1592 = vmatprep.subr.mxu0 0.0
    %1593 = vmatpush1.msra.mxu0 0.0
    %1594 = vmatprep.subr.mxu0 0.0
    %1595 = vmatpush1.msra.mxu0 0.0
    %1596 = vmatprep.subr.mxu0 0.0
    %1597 = vmatpush1.msra.mxu0 0.0
    %1598 = vmatprep.subr.mxu0 0.0
    %1599 = vmatpush1.msra.mxu0 0.0
    %1600 = vmatprep.subr.mxu0 0.0
    %1601 = vmatpush1.msra.mxu0 0.0
    %1602 = vmatprep.subr.mxu0 0.0
    %1603 = vmatpush1.msra.mxu0 0.0
    %1604 = vmatprep.subr.mxu0 0.0
    %1605 = vmatpush1.msra.mxu0 0.0
    %1606 = vmatprep.subr.mxu0 0.0
    %1607 = vmatpush1.msra.mxu0 0.0
    %1608 = vmatprep.subr.mxu0 0.0
    %1609 = vmatpush1.msra.mxu0 0.0
    %1610 = vmatprep.subr.mxu0 0.0
    %1611 = vmatpush1.msra.mxu0 0.0
    %1612 = vmatprep.subr.mxu0 0.0
    %1613 = vmatpush1.msra.mxu0 0.0
    %1614 = vmatprep.subr.mxu0 0.0
    %1615 = vmatpush1.msra.mxu0 0.0
    %1616 = vmatprep.mubr.f32.mxu0 0.0
    %1617 = vmatmul.mubr.f32.gmra.mrb[0].mxu0 %v1550
    %v1618 = vpop.f32.mrb[0].mxu0
    %v1619 = vadd.f32 0.0, %v1618
    %v1620 = vpop.f32.mrb[0].mxu0
    %v1621 = vadd.f32 0.0, %v1620
    %1622 = vdwg.mxu0
    %v1625 = vrot.slane %v1619, 6
    %v1626 = vrot.slane %v1621, 6
    %v1629 = vadd.f32 %v1548, %v1625
    %v1630 = vadd.f32 %v1549, %v1626
    %v1631 = vtanh.pop %v1629
    %v1632 = vtanh.pop %v1630
    %v1633 = vxor.u32 %v1629, 2147483648
    %v1634 = vxor.u32 %v1630, 2147483648
    %v1635 = vmul.f32 %v1633, 1.442695
    %v1636 = vpow.pop %v1635
    %v1637 = vmul.f32 %v1634, 1.442695
    %v1638 = vpow.pop %v1637
    %v1639 = vadd.f32 %v1636, 1.0
    %v1640 = vadd.f32 %v1638, 1.0
    %v1641 = vrcp.pop %v1639
    %v1642 = vmul.f32 1.0, %v1641
    %v1643 = vrcp.pop %v1640
    %v1644 = vmul.f32 1.0, %v1643
    %v1645 = vsel %vm106, %v1631, %v1642
    %v1646 = vsel %vm107, %v1632, %v1644
    %v1648 = vrot.slane %v1529, 6
    %v1650 = vmul.f32 %v1645, %v1648
    %v1651 = vmul.f32 %v1645, %v1646
    %1653 = vrot.lane.b32.xlu0 %v1651, 64
    %v1654 = vpop.permute.xlu0 %1653
    %v1656 = vadd.f32 %v1650, %v1654
    %v1657 = vtanh.pop %v1656
    %v1658 = vmul.f32 %v1646, %v1657
    %1660 = vrot.lane.b32.xlu0 %v1658, 64
    %v1661 = vpop.permute.xlu0 %1660
    %1663 = vst.msk [vmem:[#allocation13] sm:$0xc] %vm503, %v1661
    %1664 = vst.msk [vmem:[#allocation13 + $0xa] sm:$0xc] %vm505, %v1661
    %v1665 = vld [vmem:[#allocation2] sm:$0x30]
    %v1666 = vld [vmem:[#allocation2 + $0x8] sm:$0x30]
    %v1667 = vld [vmem:[#allocation2 + $0x10] sm:$0xc]
    %v1668 = vld [vmem:[#allocation2 + $0x18] sm:$0xc]
    %v1671 = vrot.slane %v1667, 6
    %v1672 = vrot.slane %v1668, 6
    %v1675 = vsel %vm132, %v1665, %v1671
    %v1676 = vsel %vm133, %v1666, %v1672
    %v1677 = vrot.slane %v1658, 2
    %1678 = vrot.lane.b32.xlu0 %v1677, 64
    %v1679 = vpop.permute.xlu0 %1678
    %v1680 = vsel %vm268, %v1679, 0
    %1682 = vmatprep.subr.mxu0 %v1306
    %1683 = vmatpush1.msra.mxu0 %v1305
    %1684 = vmatprep.subr.mxu0 %v1308
    %1685 = vmatpush1.msra.mxu0 %v1307
    %1686 = vmatprep.subr.mxu0 %v1310
    %1687 = vmatpush1.msra.mxu0 %v1309
    %1688 = vmatprep.subr.mxu0 %v1312
    %1689 = vmatpush1.msra.mxu0 %v1311
    %1690 = vmatprep.subr.mxu0 %v1314
    %1691 = vmatpush1.msra.mxu0 %v1313
    %1692 = vmatprep.subr.mxu0 %v1316
    %1693 = vmatpush1.msra.mxu0 %v1315
    %1694 = vmatprep.subr.mxu0 %v1318
    %1695 = vmatpush1.msra.mxu0 %v1317
    %1696 = vmatprep.subr.mxu0 %v1320
    %1697 = vmatpush1.msra.mxu0 %v1319
    %1698 = vmatprep.subr.mxu0 0.0
    %1699 = vmatpush1.msra.mxu0 0.0
    %1700 = vmatprep.subr.mxu0 0.0
    %1701 = vmatpush1.msra.mxu0 0.0
    %1702 = vmatprep.subr.mxu0 0.0
    %1703 = vmatpush1.msra.mxu0 0.0
    %1704 = vmatprep.subr.mxu0 0.0
    %1705 = vmatpush1.msra.mxu0 0.0
    %1706 = vmatprep.subr.mxu0 0.0
    %1707 = vmatpush1.msra.mxu0 0.0
    %1708 = vmatprep.subr.mxu0 0.0
    %1709 = vmatpush1.msra.mxu0 0.0
    %1710 = vmatprep.subr.mxu0 0.0
    %1711 = vmatpush1.msra.mxu0 0.0
    %1712 = vmatprep.subr.mxu0 0.0
    %1713 = vmatpush1.msra.mxu0 0.0
    %1714 = vmatprep.subr.mxu0 0.0
    %1715 = vmatpush1.msra.mxu0 0.0
    %1716 = vmatprep.subr.mxu0 0.0
    %1717 = vmatpush1.msra.mxu0 0.0
    %1718 = vmatprep.subr.mxu0 0.0
    %1719 = vmatpush1.msra.mxu0 0.0
    %1720 = vmatprep.subr.mxu0 0.0
    %1721 = vmatpush1.msra.mxu0 0.0
    %1722 = vmatprep.subr.mxu0 0.0
    %1723 = vmatpush1.msra.mxu0 0.0
    %1724 = vmatprep.subr.mxu0 0.0
    %1725 = vmatpush1.msra.mxu0 0.0
    %1726 = vmatprep.subr.mxu0 0.0
    %1727 = vmatpush1.msra.mxu0 0.0
    %1728 = vmatprep.subr.mxu0 0.0
    %1729 = vmatpush1.msra.mxu0 0.0
    %1730 = vmatprep.subr.mxu0 0.0
    %1731 = vmatpush1.msra.mxu0 0.0
    %1732 = vmatprep.subr.mxu0 0.0
    %1733 = vmatpush1.msra.mxu0 0.0
    %1734 = vmatprep.subr.mxu0 0.0
    %1735 = vmatpush1.msra.mxu0 0.0
    %1736 = vmatprep.subr.mxu0 0.0
    %1737 = vmatpush1.msra.mxu0 0.0
    %1738 = vmatprep.subr.mxu0 0.0
    %1739 = vmatpush1.msra.mxu0 0.0
    %1740 = vmatprep.subr.mxu0 0.0
    %1741 = vmatpush1.msra.mxu0 0.0
    %1742 = vmatprep.subr.mxu0 0.0
    %1743 = vmatpush1.msra.mxu0 0.0
    %1744 = vmatprep.subr.mxu0 0.0
    %1745 = vmatpush1.msra.mxu0 0.0
    %1746 = vmatprep.mubr.f32.mxu0 0.0
    %1747 = vmatmul.mubr.f32.gmra.mrb[0].mxu0 %v1680
    %v1748 = vpop.f32.mrb[0].mxu0
    %v1749 = vadd.f32 0.0, %v1748
    %v1750 = vpop.f32.mrb[0].mxu0
    %v1751 = vadd.f32 0.0, %v1750
    %1752 = vdwg.mxu0
    %v1755 = vrot.slane %v1749, 4
    %v1756 = vrot.slane %v1751, 4
    %v1759 = vadd.f32 %v1675, %v1755
    %v1760 = vadd.f32 %v1676, %v1756
    %v1761 = vtanh.pop %v1759
    %v1762 = vtanh.pop %v1760
    %v1763 = vxor.u32 %v1759, 2147483648
    %v1764 = vxor.u32 %v1760, 2147483648
    %v1765 = vmul.f32 %v1763, 1.442695
    %v1766 = vpow.pop %v1765
    %v1767 = vmul.f32 %v1764, 1.442695
    %v1768 = vpow.pop %v1767
    %v1769 = vadd.f32 %v1766, 1.0
    %v1770 = vadd.f32 %v1768, 1.0
    %v1771 = vrcp.pop %v1769
    %v1772 = vmul.f32 1.0, %v1771
    %v1773 = vrcp.pop %v1770
    %v1774 = vmul.f32 1.0, %v1773
    %v1775 = vsel %vm106, %v1761, %v1772
    %v1776 = vsel %vm107, %v1762, %v1774
    %v1778 = vrot.slane %v1656, 6
    %v1780 = vmul.f32 %v1775, %v1778
    %v1781 = vmul.f32 %v1775, %v1776
    %1783 = vrot.lane.b32.xlu0 %v1781, 64
    %v1784 = vpop.permute.xlu0 %1783
    %v1786 = vadd.f32 %v1780, %v1784
    %v1787 = vtanh.pop %v1786
    %v1788 = vmul.f32 %v1776, %v1787
    %1790 = vrot.lane.b32.xlu0 %v1788, 64
    %v1791 = vpop.permute.xlu0 %1790
    %1793 = vst.msk [vmem:[#allocation13] sm:$0x30] %vm635, %v1791
    %1794 = vst.msk [vmem:[#allocation13 + $0x6] sm:$0x30] %vm637, %v1791
    %v1795 = vld [vmem:[#allocation2] sm:$0xc0]
    %v1796 = vld [vmem:[#allocation2 + $0x8] sm:$0xc0]
    %v1797 = vld [vmem:[#allocation2 + $0x10] sm:$0x3]
    %v1798 = vld [vmem:[#allocation2 + $0x18] sm:$0x3]
    %v1801 = vrot.slane %v1797, 2
    %v1802 = vrot.slane %v1798, 2
    %v1805 = vsel %vm132, %v1795, %v1801
    %v1806 = vsel %vm133, %v1796, %v1802
    %v1807 = vrot.slane %v1788, 4
    %1808 = vrot.lane.b32.xlu0 %v1807, 64
    %v1809 = vpop.permute.xlu0 %1808
    %v1810 = vsel %vm268, %v1809, 0
    %1812 = vmatprep.subr.mxu0 %v1306
    %1813 = vmatpush1.msra.mxu0 %v1305
    %1814 = vmatprep.subr.mxu0 %v1308
    %1815 = vmatpush1.msra.mxu0 %v1307
    %1816 = vmatprep.subr.mxu0 %v1310
    %1817 = vmatpush1.msra.mxu0 %v1309
    %1818 = vmatprep.subr.mxu0 %v1312
    %1819 = vmatpush1.msra.mxu0 %v1311
    %1820 = vmatprep.subr.mxu0 %v1314
    %1821 = vmatpush1.msra.mxu0 %v1313
    %1822 = vmatprep.subr.mxu0 %v1316
    %1823 = vmatpush1.msra.mxu0 %v1315
    %1824 = vmatprep.subr.mxu0 %v1318
    %1825 = vmatpush1.msra.mxu0 %v1317
    %1826 = vmatprep.subr.mxu0 %v1320
    %1827 = vmatpush1.msra.mxu0 %v1319
    %1828 = vmatprep.subr.mxu0 0.0
    %1829 = vmatpush1.msra.mxu0 0.0
    %1830 = vmatprep.subr.mxu0 0.0
    %1831 = vmatpush1.msra.mxu0 0.0
    %1832 = vmatprep.subr.mxu0 0.0
    %1833 = vmatpush1.msra.mxu0 0.0
    %1834 = vmatprep.subr.mxu0 0.0
    %1835 = vmatpush1.msra.mxu0 0.0
    %1836 = vmatprep.subr.mxu0 0.0
    %1837 = vmatpush1.msra.mxu0 0.0
    %1838 = vmatprep.subr.mxu0 0.0
    %1839 = vmatpush1.msra.mxu0 0.0
    %1840 = vmatprep.subr.mxu0 0.0
    %1841 = vmatpush1.msra.mxu0 0.0
    %1842 = vmatprep.subr.mxu0 0.0
    %1843 = vmatpush1.msra.mxu0 0.0
    %1844 = vmatprep.subr.mxu0 0.0
    %1845 = vmatpush1.msra.mxu0 0.0
    %1846 = vmatprep.subr.mxu0 0.0
    %1847 = vmatpush1.msra.mxu0 0.0
    %1848 = vmatprep.subr.mxu0 0.0
    %1849 = vmatpush1.msra.mxu0 0.0
    %1850 = vmatprep.subr.mxu0 0.0
    %1851 = vmatpush1.msra.mxu0 0.0
    %1852 = vmatprep.subr.mxu0 0.0
    %1853 = vmatpush1.msra.mxu0 0.0
    %1854 = vmatprep.subr.mxu0 0.0
    %1855 = vmatpush1.msra.mxu0 0.0
    %1856 = vmatprep.subr.mxu0 0.0
    %1857 = vmatpush1.msra.mxu0 0.0
    %1858 = vmatprep.subr.mxu0 0.0
    %1859 = vmatpush1.msra.mxu0 0.0
    %1860 = vmatprep.subr.mxu0 0.0
    %1861 = vmatpush1.msra.mxu0 0.0
    %1862 = vmatprep.subr.mxu0 0.0
    %1863 = vmatpush1.msra.mxu0 0.0
    %1864 = vmatprep.subr.mxu0 0.0
    %1865 = vmatpush1.msra.mxu0 0.0
    %1866 = vmatprep.subr.mxu0 0.0
    %1867 = vmatpush1.msra.mxu0 0.0
    %1868 = vmatprep.subr.mxu0 0.0
    %1869 = vmatpush1.msra.mxu0 0.0
    %1870 = vmatprep.subr.mxu0 0.0
    %1871 = vmatpush1.msra.mxu0 0.0
    %1872 = vmatprep.subr.mxu0 0.0
    %1873 = vmatpush1.msra.mxu0 0.0
    %1874 = vmatprep.subr.mxu0 0.0
    %1875 = vmatpush1.msra.mxu0 0.0
    %1876 = vmatprep.mubr.f32.mxu0 0.0
    %1877 = vmatmul.mubr.f32.gmra.mrb[0].mxu0 %v1810
    %v1878 = vpop.f32.mrb[0].mxu0
    %v1879 = vadd.f32 0.0, %v1878
    %v1880 = vpop.f32.mrb[0].mxu0
    %v1881 = vadd.f32 0.0, %v1880
    %1882 = vdwg.mxu0
    %v1885 = vrot.slane %v1879, 2
    %v1886 = vrot.slane %v1881, 2
    %v1889 = vadd.f32 %v1805, %v1885
    %v1890 = vadd.f32 %v1806, %v1886
    %v1891 = vtanh.pop %v1889
    %v1892 = vtanh.pop %v1890
    %v1893 = vxor.u32 %v1889, 2147483648
    %v1894 = vxor.u32 %v1890, 2147483648
    %v1895 = vmul.f32 %v1893, 1.442695
    %v1896 = vpow.pop %v1895
    %v1897 = vmul.f32 %v1894, 1.442695
    %v1898 = vpow.pop %v1897
    %v1899 = vadd.f32 %v1896, 1.0
    %v1900 = vadd.f32 %v1898, 1.0
    %v1901 = vrcp.pop %v1899
    %v1902 = vmul.f32 1.0, %v1901
    %v1903 = vrcp.pop %v1900
    %v1904 = vmul.f32 1.0, %v1903
    %v1905 = vsel %vm106, %v1891, %v1902
    %v1906 = vsel %vm107, %v1892, %v1904
    %v1908 = vrot.slane %v1786, 6
    %v1910 = vmul.f32 %v1905, %v1908
    %v1911 = vmul.f32 %v1905, %v1906
    %1913 = vrot.lane.b32.xlu0 %v1911, 64
    %v1914 = vpop.permute.xlu0 %1913
    %v1916 = vadd.f32 %v1910, %v1914
    %v1917 = vtanh.pop %v1916
    %v1918 = vmul.f32 %v1906, %v1917
    %1920 = vrot.lane.b32.xlu0 %v1918, 64
    %v1921 = vpop.permute.xlu0 %1920
    %1923 = vst.msk [vmem:[#allocation13] sm:$0xc0] %vm767, %v1921
    %1924 = vst.msk [vmem:[#allocation13 + $0x2] sm:$0xc0] %vm769, %v1921
    %v1925 = vld [vmem:[#allocation2 + $0x10] sm:$0x3]
    %v1926 = vld [vmem:[#allocation2 + $0x18] sm:$0x3]
    %v1927 = vld [vmem:[#allocation2] sm:$0xc0]
    %v1928 = vld [vmem:[#allocation2 + $0x8] sm:$0xc0]
    %v1931 = vrot.slane %v1927, 6
    %v1932 = vrot.slane %v1928, 6
    %v1935 = vsel %vm132, %v1925, %v1931
    %v1936 = vsel %vm133, %v1926, %v1932
    %v1937 = vrot.slane %v1918, 6
    %1938 = vrot.lane.b32.xlu0 %v1937, 64
    %v1939 = vpop.permute.xlu0 %1938
    %v1940 = vsel %vm268, %v1939, 0
    %1942 = vmatprep.subr.mxu0 %v1306
    %1943 = vmatpush1.msra.mxu0 %v1305
    %1944 = vmatprep.subr.mxu0 %v1308
    %1945 = vmatpush1.msra.mxu0 %v1307
    %1946 = vmatprep.subr.mxu0 %v1310
    %1947 = vmatpush1.msra.mxu0 %v1309
    %1948 = vmatprep.subr.mxu0 %v1312
    %1949 = vmatpush1.msra.mxu0 %v1311
    %1950 = vmatprep.subr.mxu0 %v1314
    %1951 = vmatpush1.msra.mxu0 %v1313
    %1952 = vmatprep.subr.mxu0 %v1316
    %1953 = vmatpush1.msra.mxu0 %v1315
    %1954 = vmatprep.subr.mxu0 %v1318
    %1955 = vmatpush1.msra.mxu0 %v1317
    %1956 = vmatprep.subr.mxu0 %v1320
    %1957 = vmatpush1.msra.mxu0 %v1319
    %1958 = vmatprep.subr.mxu0 0.0
    %1959 = vmatpush1.msra.mxu0 0.0
    %1960 = vmatprep.subr.mxu0 0.0
    %1961 = vmatpush1.msra.mxu0 0.0
    %1962 = vmatprep.subr.mxu0 0.0
    %1963 = vmatpush1.msra.mxu0 0.0
    %1964 = vmatprep.subr.mxu0 0.0
    %1965 = vmatpush1.msra.mxu0 0.0
    %1966 = vmatprep.subr.mxu0 0.0
    %1967 = vmatpush1.msra.mxu0 0.0
    %1968 = vmatprep.subr.mxu0 0.0
    %1969 = vmatpush1.msra.mxu0 0.0
    %1970 = vmatprep.subr.mxu0 0.0
    %1971 = vmatpush1.msra.mxu0 0.0
    %1972 = vmatprep.subr.mxu0 0.0
    %1973 = vmatpush1.msra.mxu0 0.0
    %1974 = vmatprep.subr.mxu0 0.0
    %1975 = vmatpush1.msra.mxu0 0.0
    %1976 = vmatprep.subr.mxu0 0.0
    %1977 = vmatpush1.msra.mxu0 0.0
    %1978 = vmatprep.subr.mxu0 0.0
    %1979 = vmatpush1.msra.mxu0 0.0
    %1980 = vmatprep.subr.mxu0 0.0
    %1981 = vmatpush1.msra.mxu0 0.0
    %1982 = vmatprep.subr.mxu0 0.0
    %1983 = vmatpush1.msra.mxu0 0.0
    %1984 = vmatprep.subr.mxu0 0.0
    %1985 = vmatpush1.msra.mxu0 0.0
    %1986 = vmatprep.subr.mxu0 0.0
    %1987 = vmatpush1.msra.mxu0 0.0
    %1988 = vmatprep.subr.mxu0 0.0
    %1989 = vmatpush1.msra.mxu0 0.0
    %1990 = vmatprep.subr.mxu0 0.0
    %1991 = vmatpush1.msra.mxu0 0.0
    %1992 = vmatprep.subr.mxu0 0.0
    %1993 = vmatpush1.msra.mxu0 0.0
    %1994 = vmatprep.subr.mxu0 0.0
    %1995 = vmatpush1.msra.mxu0 0.0
    %1996 = vmatprep.subr.mxu0 0.0
    %1997 = vmatpush1.msra.mxu0 0.0
    %1998 = vmatprep.subr.mxu0 0.0
    %1999 = vmatpush1.msra.mxu0 0.0
    %2000 = vmatprep.subr.mxu0 0.0
    %2001 = vmatpush1.msra.mxu0 0.0
    %2002 = vmatprep.subr.mxu0 0.0
    %2003 = vmatpush1.msra.mxu0 0.0
    %2004 = vmatprep.subr.mxu0 0.0
    %2005 = vmatpush1.msra.mxu0 0.0
    %2006 = vmatprep.mubr.f32.mxu0 0.0
    %2007 = vmatmul.mubr.f32.gmra.mrb[0].mxu0 %v1940
    %v2008 = vpop.f32.mrb[0].mxu0
    %v2009 = vadd.f32 0.0, %v2008
    %v2010 = vpop.f32.mrb[0].mxu0
    %v2011 = vadd.f32 0.0, %v2010
    %2012 = vdwg.mxu0
    %v2013 = vadd.f32 %v1935, %v2009
    %v2014 = vadd.f32 %v1936, %v2011
    %v2015 = vtanh.pop %v2013
    %v2016 = vtanh.pop %v2014
    %v2017 = vxor.u32 %v2013, 2147483648
    %v2018 = vxor.u32 %v2014, 2147483648
    %v2019 = vmul.f32 %v2017, 1.442695
    %v2020 = vpow.pop %v2019
    %v2021 = vmul.f32 %v2018, 1.442695
    %v2022 = vpow.pop %v2021
    %v2023 = vadd.f32 %v2020, 1.0
    %v2024 = vadd.f32 %v2022, 1.0
    %v2025 = vrcp.pop %v2023
    %v2026 = vmul.f32 1.0, %v2025
    %v2027 = vrcp.pop %v2024
    %v2028 = vmul.f32 1.0, %v2027
    %v2029 = vsel %vm106, %v2015, %v2026
    %v2030 = vsel %vm107, %v2016, %v2028
    %v2032 = vrot.slane %v1916, 6
    %v2034 = vmul.f32 %v2029, %v2032
    %v2035 = vmul.f32 %v2029, %v2030
    %2037 = vrot.lane.b32.xlu0 %v2035, 64
    %v2038 = vpop.permute.xlu0 %2037
    %v2040 = vadd.f32 %v2034, %v2038
    %v2041 = vtanh.pop %v2040
    %v2042 = vmul.f32 %v2030, %v2041
    %2044 = vrot.lane.b32.xlu0 %v2042, 64
    %v2045 = vpop.permute.xlu0 %2044
    %2047 = vst.msk [vmem:[#allocation13 + $0x8] sm:$0x3] %vm374, %v2045
    %2048 = vst.msk [vmem:[#allocation13 + $0x6] sm:$0x3] %vm376, %v2045
    %v2049 = vld [vmem:[#allocation2 + $0x10] sm:$0xc]
    %v2050 = vld [vmem:[#allocation2 + $0x18] sm:$0xc]
    %v2051 = vld [vmem:[#allocation2] sm:$0x30]
    %v2052 = vld [vmem:[#allocation2 + $0x8] sm:$0x30]
    %v2055 = vrot.slane %v2051, 2
    %v2056 = vrot.slane %v2052, 2
    %v2059 = vsel %vm132, %v2049, %v2055
    %v2060 = vsel %vm133, %v2050, %v2056
    %v2061 = vsel %vm268, %v2045, 0
    %2063 = vmatprep.subr.mxu0 %v1306
    %2064 = vmatpush1.msra.mxu0 %v1305
    %2065 = vmatprep.subr.mxu0 %v1308
    %2066 = vmatpush1.msra.mxu0 %v1307
    %2067 = vmatprep.subr.mxu0 %v1310
    %2068 = vmatpush1.msra.mxu0 %v1309
    %2069 = vmatprep.subr.mxu0 %v1312
    %2070 = vmatpush1.msra.mxu0 %v1311
    %2071 = vmatprep.subr.mxu0 %v1314
    %2072 = vmatpush1.msra.mxu0 %v1313
    %2073 = vmatprep.subr.mxu0 %v1316
    %2074 = vmatpush1.msra.mxu0 %v1315
    %2075 = vmatprep.subr.mxu0 %v1318
    %2076 = vmatpush1.msra.mxu0 %v1317
    %2077 = vmatprep.subr.mxu0 %v1320
    %2078 = vmatpush1.msra.mxu0 %v1319
    %2079 = vmatprep.subr.mxu0 0.0
    %2080 = vmatpush1.msra.mxu0 0.0
    %2081 = vmatprep.subr.mxu0 0.0
    %2082 = vmatpush1.msra.mxu0 0.0
    %2083 = vmatprep.subr.mxu0 0.0
    %2084 = vmatpush1.msra.mxu0 0.0
    %2085 = vmatprep.subr.mxu0 0.0
    %2086 = vmatpush1.msra.mxu0 0.0
    %2087 = vmatprep.subr.mxu0 0.0
    %2088 = vmatpush1.msra.mxu0 0.0
    %2089 = vmatprep.subr.mxu0 0.0
    %2090 = vmatpush1.msra.mxu0 0.0
    %2091 = vmatprep.subr.mxu0 0.0
    %2092 = vmatpush1.msra.mxu0 0.0
    %2093 = vmatprep.subr.mxu0 0.0
    %2094 = vmatpush1.msra.mxu0 0.0
    %2095 = vmatprep.subr.mxu0 0.0
    %2096 = vmatpush1.msra.mxu0 0.0
    %2097 = vmatprep.subr.mxu0 0.0
    %2098 = vmatpush1.msra.mxu0 0.0
    %2099 = vmatprep.subr.mxu0 0.0
    %2100 = vmatpush1.msra.mxu0 0.0
    %2101 = vmatprep.subr.mxu0 0.0
    %2102 = vmatpush1.msra.mxu0 0.0
    %2103 = vmatprep.subr.mxu0 0.0
    %2104 = vmatpush1.msra.mxu0 0.0
    %2105 = vmatprep.subr.mxu0 0.0
    %2106 = vmatpush1.msra.mxu0 0.0
    %2107 = vmatprep.subr.mxu0 0.0
    %2108 = vmatpush1.msra.mxu0 0.0
    %2109 = vmatprep.subr.mxu0 0.0
    %2110 = vmatpush1.msra.mxu0 0.0
    %2111 = vmatprep.subr.mxu0 0.0
    %2112 = vmatpush1.msra.mxu0 0.0
    %2113 = vmatprep.subr.mxu0 0.0
    %2114 = vmatpush1.msra.mxu0 0.0
    %2115 = vmatprep.subr.mxu0 0.0
    %2116 = vmatpush1.msra.mxu0 0.0
    %2117 = vmatprep.subr.mxu0 0.0
    %2118 = vmatpush1.msra.mxu0 0.0
    %2119 = vmatprep.subr.mxu0 0.0
    %2120 = vmatpush1.msra.mxu0 0.0
    %2121 = vmatprep.subr.mxu0 0.0
    %2122 = vmatpush1.msra.mxu0 0.0
    %2123 = vmatprep.subr.mxu0 0.0
    %2124 = vmatpush1.msra.mxu0 0.0
    %2125 = vmatprep.subr.mxu0 0.0
    %2126 = vmatpush1.msra.mxu0 0.0
    %2127 = vmatprep.mubr.f32.mxu0 0.0
    %2128 = vmatmul.mubr.f32.gmra.mrb[0].mxu0 %v2061
    %v2129 = vpop.f32.mrb[0].mxu0
    %v2130 = vadd.f32 0.0, %v2129
    %v2131 = vpop.f32.mrb[0].mxu0
    %v2132 = vadd.f32 0.0, %v2131
    %2133 = vdwg.mxu0
    %v2136 = vrot.slane %v2130, 6
    %v2137 = vrot.slane %v2132, 6
    %v2140 = vadd.f32 %v2059, %v2136
    %v2141 = vadd.f32 %v2060, %v2137
    %v2142 = vtanh.pop %v2140
    %v2143 = vtanh.pop %v2141
    %v2144 = vxor.u32 %v2140, 2147483648
    %v2145 = vxor.u32 %v2141, 2147483648
    %v2146 = vmul.f32 %v2144, 1.442695
    %v2147 = vpow.pop %v2146
    %v2148 = vmul.f32 %v2145, 1.442695
    %v2149 = vpow.pop %v2148
    %v2150 = vadd.f32 %v2147, 1.0
    %v2151 = vadd.f32 %v2149, 1.0
    %v2152 = vrcp.pop %v2150
    %v2153 = vmul.f32 1.0, %v2152
    %v2154 = vrcp.pop %v2151
    %v2155 = vmul.f32 1.0, %v2154
    %v2156 = vsel %vm106, %v2142, %v2153
    %v2157 = vsel %vm107, %v2143, %v2155
    %v2159 = vrot.slane %v2040, 6
    %v2161 = vmul.f32 %v2156, %v2159
    %v2162 = vmul.f32 %v2156, %v2157
    %2164 = vrot.lane.b32.xlu0 %v2162, 64
    %v2165 = vpop.permute.xlu0 %2164
    %v2167 = vadd.f32 %v2161, %v2165
    %v2168 = vtanh.pop %v2167
    %v2169 = vmul.f32 %v2157, %v2168
    %2171 = vrot.lane.b32.xlu0 %v2169, 64
    %v2172 = vpop.permute.xlu0 %2171
    %2174 = vst.msk [vmem:[#allocation13 + $0x8] sm:$0xc] %vm503, %v2172
    %2175 = vst.msk [vmem:[#allocation13 + $0x2] sm:$0xc] %vm505, %v2172
    %v2176 = vld [vmem:[#allocation2 + $0x10] sm:$0x30]
    %v2177 = vld [vmem:[#allocation2 + $0x18] sm:$0x30]
    %v2178 = vld [vmem:[#allocation2] sm:$0xc]
    %v2179 = vld [vmem:[#allocation2 + $0x8] sm:$0xc]
    %v2182 = vrot.slane %v2178, 6
    %v2183 = vrot.slane %v2179, 6
    %v2186 = vsel %vm132, %v2176, %v2182
    %v2187 = vsel %vm133, %v2177, %v2183
    %v2188 = vrot.slane %v2169, 2
    %2189 = vrot.lane.b32.xlu0 %v2188, 64
    %v2190 = vpop.permute.xlu0 %2189
    %v2191 = vsel %vm268, %v2190, 0
    %2193 = vmatprep.subr.mxu0 %v1306
    %2194 = vmatpush1.msra.mxu0 %v1305
    %2195 = vmatprep.subr.mxu0 %v1308
    %2196 = vmatpush1.msra.mxu0 %v1307
    %2197 = vmatprep.subr.mxu0 %v1310
    %2198 = vmatpush1.msra.mxu0 %v1309
    %2199 = vmatprep.subr.mxu0 %v1312
    %2200 = vmatpush1.msra.mxu0 %v1311
    %2201 = vmatprep.subr.mxu0 %v1314
    %2202 = vmatpush1.msra.mxu0 %v1313
    %2203 = vmatprep.subr.mxu0 %v1316
    %2204 = vmatpush1.msra.mxu0 %v1315
    %2205 = vmatprep.subr.mxu0 %v1318
    %2206 = vmatpush1.msra.mxu0 %v1317
    %2207 = vmatprep.subr.mxu0 %v1320
    %2208 = vmatpush1.msra.mxu0 %v1319
    %2209 = vmatprep.subr.mxu0 0.0
    %2210 = vmatpush1.msra.mxu0 0.0
    %2211 = vmatprep.subr.mxu0 0.0
    %2212 = vmatpush1.msra.mxu0 0.0
    %2213 = vmatprep.subr.mxu0 0.0
    %2214 = vmatpush1.msra.mxu0 0.0
    %2215 = vmatprep.subr.mxu0 0.0
    %2216 = vmatpush1.msra.mxu0 0.0
    %2217 = vmatprep.subr.mxu0 0.0
    %2218 = vmatpush1.msra.mxu0 0.0
    %2219 = vmatprep.subr.mxu0 0.0
    %2220 = vmatpush1.msra.mxu0 0.0
    %2221 = vmatprep.subr.mxu0 0.0
    %2222 = vmatpush1.msra.mxu0 0.0
    %2223 = vmatprep.subr.mxu0 0.0
    %2224 = vmatpush1.msra.mxu0 0.0
    %2225 = vmatprep.subr.mxu0 0.0
    %2226 = vmatpush1.msra.mxu0 0.0
    %2227 = vmatprep.subr.mxu0 0.0
    %2228 = vmatpush1.msra.mxu0 0.0
    %2229 = vmatprep.subr.mxu0 0.0
    %2230 = vmatpush1.msra.mxu0 0.0
    %2231 = vmatprep.subr.mxu0 0.0
    %2232 = vmatpush1.msra.mxu0 0.0
    %2233 = vmatprep.subr.mxu0 0.0
    %2234 = vmatpush1.msra.mxu0 0.0
    %2235 = vmatprep.subr.mxu0 0.0
    %2236 = vmatpush1.msra.mxu0 0.0
    %2237 = vmatprep.subr.mxu0 0.0
    %2238 = vmatpush1.msra.mxu0 0.0
    %2239 = vmatprep.subr.mxu0 0.0
    %2240 = vmatpush1.msra.mxu0 0.0
    %2241 = vmatprep.subr.mxu0 0.0
    %2242 = vmatpush1.msra.mxu0 0.0
    %2243 = vmatprep.subr.mxu0 0.0
    %2244 = vmatpush1.msra.mxu0 0.0
    %2245 = vmatprep.subr.mxu0 0.0
    %2246 = vmatpush1.msra.mxu0 0.0
    %2247 = vmatprep.subr.mxu0 0.0
    %2248 = vmatpush1.msra.mxu0 0.0
    %2249 = vmatprep.subr.mxu0 0.0
    %2250 = vmatpush1.msra.mxu0 0.0
    %2251 = vmatprep.subr.mxu0 0.0
    %2252 = vmatpush1.msra.mxu0 0.0
    %2253 = vmatprep.subr.mxu0 0.0
    %2254 = vmatpush1.msra.mxu0 0.0
    %2255 = vmatprep.subr.mxu0 0.0
    %2256 = vmatpush1.msra.mxu0 0.0
    %2257 = vmatprep.mubr.f32.mxu0 0.0
    %2258 = vmatmul.mubr.f32.gmra.mrb[0].mxu0 %v2191
    %v2259 = vpop.f32.mrb[0].mxu0
    %v2260 = vadd.f32 0.0, %v2259
    %v2261 = vpop.f32.mrb[0].mxu0
    %v2262 = vadd.f32 0.0, %v2261
    %2263 = vdwg.mxu0
    %v2266 = vrot.slane %v2260, 4
    %v2267 = vrot.slane %v2262, 4
    %v2270 = vadd.f32 %v2186, %v2266
    %v2271 = vadd.f32 %v2187, %v2267
    %v2272 = vtanh.pop %v2270
    %v2273 = vtanh.pop %v2271
    %v2274 = vxor.u32 %v2270, 2147483648
    %v2275 = vxor.u32 %v2271, 2147483648
    %v2276 = vmul.f32 %v2274, 1.442695
    %v2277 = vpow.pop %v2276
    %v2278 = vmul.f32 %v2275, 1.442695
    %v2279 = vpow.pop %v2278
    %v2280 = vadd.f32 %v2277, 1.0
    %v2281 = vadd.f32 %v2279, 1.0
    %v2282 = vrcp.pop %v2280
    %v2283 = vmul.f32 1.0, %v2282
    %v2284 = vrcp.pop %v2281
    %v2285 = vmul.f32 1.0, %v2284
    %v2286 = vsel %vm106, %v2272, %v2283
    %v2287 = vsel %vm107, %v2273, %v2285
    %v2289 = vrot.slane %v2167, 6
    %v2291 = vmul.f32 %v2286, %v2289
    %v2292 = vmul.f32 %v2286, %v2287
    %2294 = vrot.lane.b32.xlu0 %v2292, 64
    %v2295 = vpop.permute.xlu0 %2294
    %v2297 = vadd.f32 %v2291, %v2295
    %v2298 = vtanh.pop %v2297
    %v2299 = vmul.f32 %v2287, %v2298
    %2301 = vrot.lane.b32.xlu0 %v2299, 64
    %v2302 = vpop.permute.xlu0 %2301
    %2304 = vst.msk [vmem:[#allocation13 + $0x8] sm:$0x30] %vm635, %v2302
    %2305 = vst.msk [vmem:[#allocation13 - $0x2] sm:$0x30] %vm637, %v2302
    %v2306 = vld [vmem:[#allocation2 + $0x10] sm:$0xc0]
    %v2307 = vld [vmem:[#allocation2 + $0x18] sm:$0xc0]
    %v2308 = vld [vmem:[#allocation2] sm:$0x3]
    %v2309 = vld [vmem:[#allocation2 + $0x8] sm:$0x3]
    %v2312 = vrot.slane %v2308, 2
    %v2313 = vrot.slane %v2309, 2
    %v2316 = vsel %vm132, %v2306, %v2312
    %v2317 = vsel %vm133, %v2307, %v2313
    %v2318 = vrot.slane %v2299, 4
    %2319 = vrot.lane.b32.xlu0 %v2318, 64
    %v2320 = vpop.permute.xlu0 %2319
    %v2321 = vsel %vm268, %v2320, 0
    %2323 = vmatprep.subr.mxu0 %v1306
    %2324 = vmatpush1.msra.mxu0 %v1305
    %2325 = vmatprep.subr.mxu0 %v1308
    %2326 = vmatpush1.msra.mxu0 %v1307
    %2327 = vmatprep.subr.mxu0 %v1310
    %2328 = vmatpush1.msra.mxu0 %v1309
    %2329 = vmatprep.subr.mxu0 %v1312
    %2330 = vmatpush1.msra.mxu0 %v1311
    %2331 = vmatprep.subr.mxu0 %v1314
    %2332 = vmatpush1.msra.mxu0 %v1313
    %2333 = vmatprep.subr.mxu0 %v1316
    %2334 = vmatpush1.msra.mxu0 %v1315
    %2335 = vmatprep.subr.mxu0 %v1318
    %2336 = vmatpush1.msra.mxu0 %v1317
    %2337 = vmatprep.subr.mxu0 %v1320
    %2338 = vmatpush1.msra.mxu0 %v1319
    %2339 = vmatprep.subr.mxu0 0.0
    %2340 = vmatpush1.msra.mxu0 0.0
    %2341 = vmatprep.subr.mxu0 0.0
    %2342 = vmatpush1.msra.mxu0 0.0
    %2343 = vmatprep.subr.mxu0 0.0
    %2344 = vmatpush1.msra.mxu0 0.0
    %2345 = vmatprep.subr.mxu0 0.0
    %2346 = vmatpush1.msra.mxu0 0.0
    %2347 = vmatprep.subr.mxu0 0.0
    %2348 = vmatpush1.msra.mxu0 0.0
    %2349 = vmatprep.subr.mxu0 0.0
    %2350 = vmatpush1.msra.mxu0 0.0
    %2351 = vmatprep.subr.mxu0 0.0
    %2352 = vmatpush1.msra.mxu0 0.0
    %2353 = vmatprep.subr.mxu0 0.0
    %2354 = vmatpush1.msra.mxu0 0.0
    %2355 = vmatprep.subr.mxu0 0.0
    %2356 = vmatpush1.msra.mxu0 0.0
    %2357 = vmatprep.subr.mxu0 0.0
    %2358 = vmatpush1.msra.mxu0 0.0
    %2359 = vmatprep.subr.mxu0 0.0
    %2360 = vmatpush1.msra.mxu0 0.0
    %2361 = vmatprep.subr.mxu0 0.0
    %2362 = vmatpush1.msra.mxu0 0.0
    %2363 = vmatprep.subr.mxu0 0.0
    %2364 = vmatpush1.msra.mxu0 0.0
    %2365 = vmatprep.subr.mxu0 0.0
    %2366 = vmatpush1.msra.mxu0 0.0
    %2367 = vmatprep.subr.mxu0 0.0
    %2368 = vmatpush1.msra.mxu0 0.0
    %2369 = vmatprep.subr.mxu0 0.0
    %2370 = vmatpush1.msra.mxu0 0.0
    %2371 = vmatprep.subr.mxu0 0.0
    %2372 = vmatpush1.msra.mxu0 0.0
    %2373 = vmatprep.subr.mxu0 0.0
    %2374 = vmatpush1.msra.mxu0 0.0
    %2375 = vmatprep.subr.mxu0 0.0
    %2376 = vmatpush1.msra.mxu0 0.0
    %2377 = vmatprep.subr.mxu0 0.0
    %2378 = vmatpush1.msra.mxu0 0.0
    %2379 = vmatprep.subr.mxu0 0.0
    %2380 = vmatpush1.msra.mxu0 0.0
    %2381 = vmatprep.subr.mxu0 0.0
    %2382 = vmatpush1.msra.mxu0 0.0
    %2383 = vmatprep.subr.mxu0 0.0
    %2384 = vmatpush1.msra.mxu0 0.0
    %2385 = vmatprep.subr.mxu0 0.0
    %2386 = vmatpush1.msra.mxu0 0.0
    %2387 = vmatprep.mubr.f32.mxu0 0.0
    %2388 = vmatmul.mubr.f32.gmra.mrb[0].mxu0 %v2321
    %v2389 = vpop.f32.mrb[0].mxu0
    %v2390 = vadd.f32 0.0, %v2389
    %v2391 = vpop.f32.mrb[0].mxu0
    %v2392 = vadd.f32 0.0, %v2391
    %2393 = vdwg.mxu0
    %v2396 = vrot.slane %v2390, 2
    %v2397 = vrot.slane %v2392, 2
    %v2400 = vadd.f32 %v2316, %v2396
    %v2401 = vadd.f32 %v2317, %v2397
    %v2402 = vtanh.pop %v2400
    %v2403 = vtanh.pop %v2401
    %v2404 = vxor.u32 %v2400, 2147483648
    %v2405 = vxor.u32 %v2401, 2147483648
    %v2406 = vmul.f32 %v2404, 1.442695
    %v2407 = vpow.pop %v2406
    %v2408 = vmul.f32 %v2405, 1.442695
    %v2409 = vpow.pop %v2408
    %v2410 = vadd.f32 %v2407, 1.0
    %v2411 = vadd.f32 %v2409, 1.0
    %v2412 = vrcp.pop %v2410
    %v2413 = vmul.f32 1.0, %v2412
    %v2414 = vrcp.pop %v2411
    %v2415 = vmul.f32 1.0, %v2414
    %v2416 = vsel %vm106, %v2402, %v2413
    %v2417 = vsel %vm107, %v2403, %v2415
    %v2419 = vrot.slane %v2297, 6
    %v2421 = vmul.f32 %v2416, %v2419
    %v2422 = vmul.f32 %v2416, %v2417
    %2424 = vrot.lane.b32.xlu0 %v2422, 64
    %v2425 = vpop.permute.xlu0 %2424
    %v2427 = vadd.f32 %v2421, %v2425
    %v2428 = vtanh.pop %v2427
    %v2429 = vmul.f32 %v2417, %v2428
    %2431 = vrot.lane.b32.xlu0 %v2429, 64
    %v2432 = vpop.permute.xlu0 %2431
    %2434 = vst.msk [vmem:[#allocation13 + $0x8] sm:$0xc0] %vm767, %v2432
    %2435 = vst.msk [vmem:[#allocation13 - $0x6] sm:$0xc0] %vm769, %v2432
    %s2436 = scalar_lea.vmem [#allocation14], 2
    %2437 = vst.msk [vmem:[%s2436 - $0x6] sm:$0xc0] %vm1282, %v2432
    %2439 = vrot.lane.b32.xlu0 %v2427, 64
    %v2440 = vpop.permute.xlu0 %2439
    %s2442 = scalar_lea.vmem [#allocation16], 2
    %2443 = vst.msk [vmem:[%s2442 - $0x6] sm:$0xc0] %vm1282, %v2440
    // Predicated region
    $region50: #{tpu_custom_call.1} parent=1 // pred_check
      _
    $region51: #{tpu_custom_call.1} parent=1 // pred_check_branch
      %2445 = sbr.rel (0) target = $region53
    $region52: #{tpu_custom_call.1} parent=1 // pred_region
      %s2447 = ssub.s32 256, 256
      %2448 = vsyncadd [#allocation6], %s2447
      %s2449 = sshll.u32 [#allocation13], 4
      %s2450 = int_to_ptr.vmem [resolvable:$true] %s2449
      %2455 = dma.vmem_to_hbm [thread:$0]  %s2450, 256, %s7, [#allocation6], 128, 128, 8
    $region53: #{tpu_custom_call.1} parent=1 // pred_fallthru
      _
    // Predicated region
    $region54: #{tpu_custom_call.1} parent=1 // pred_check
      _
    $region55: #{tpu_custom_call.1} parent=1 // pred_check_branch
      %2457 = sbr.rel (0) target = $region57
    $region56: #{tpu_custom_call.1} parent=1 // pred_region
      %s2459 = ssub.s32 64, 64
      %2460 = vsyncadd [#allocation15], %s2459
      %s2461 = sshll.u32 [#allocation14], 4
      %s2462 = int_to_ptr.vmem [resolvable:$true] %s2461
      %2467 = dma.vmem_to_hbm [thread:$0]  %s2462, 64, %s8, [#allocation15], 32, 32, 2
    $region57: #{tpu_custom_call.1} parent=1 // pred_fallthru
      _
    // Predicated region
    $region58: #{tpu_custom_call.1} parent=1 // pred_check
      _
    $region59: #{tpu_custom_call.1} parent=1 // pred_check_branch
      %2469 = sbr.rel (0) target = $region61
    $region60: #{tpu_custom_call.1} parent=1 // pred_region
      %s2471 = ssub.s32 64, 64
      %2472 = vsyncadd [#allocation15], %s2471
      %s2473 = sshll.u32 [#allocation16], 4
      %s2474 = int_to_ptr.vmem [resolvable:$true] %s2473
      %2479 = dma.vmem_to_hbm [thread:$0]  %s2474, 64, %s9, [#allocation15], 32, 32, 2
    $region61: #{tpu_custom_call.1} parent=1 // pred_fallthru
      _
    // Predicated region
    $region62: #{tpu_custom_call.1} parent=1 // pred_check
      _
    $region63: #{tpu_custom_call.1} parent=1 // pred_check_branch
      %2481 = sbr.rel (0) target = $region65
    $region64: #{tpu_custom_call.1} parent=1 // pred_region
      %2482 = dma.done [#allocation6], 256
    $region65: #{tpu_custom_call.1} parent=1 // pred_fallthru
      _
    // Predicated region
    $region66: #{tpu_custom_call.1} parent=1 // pred_check
      _
    $region67: #{tpu_custom_call.1} parent=1 // pred_check_branch
      %2484 = sbr.rel (0) target = $region69
    $region68: #{tpu_custom_call.1} parent=1 // pred_region
      %2485 = dma.done [#allocation15], 64
    $region69: #{tpu_custom_call.1} parent=1 // pred_fallthru
      _
    // Predicated region
    $region70: #{tpu_custom_call.1} parent=1 // pred_check
      _
    $region71: #{tpu_custom_call.1} parent=1 // pred_check_branch
      %2487 = sbr.rel (0) target = $region73
    $region72: #{tpu_custom_call.1} parent=1 // pred_region
      %2488 = dma.done [#allocation15], 64
    $region73: #{tpu_custom_call.1} parent=1 // pred_fallthru
      _
    %2489 = vsyncpa [#allocation5], 1
    %2490 = vsyncpa [#allocation8], 1
    %2491 = vsyncpa [#allocation11], 1
    %2492 = vsyncpa [#allocation6], 1
    %2493 = vsyncpa [#allocation15], 1

</llo_original>
